<compile_context>
chip_gen: v7x
topology: tpu7x:2x2x1
jax: 0.10.0
libtpu: 0.0.40
codegen_flags: <defaults>
</compile_context>

<pallas_src>
from functools import partial

import jax
import jax.numpy as jnp
from jax.experimental import pallas as pl
from jax.experimental.pallas import tpu as pltpu


# ----------------------------------------------------------------------------
# Pallas kernel: a block of Gb attention groups (qkv -> softmax attn -> proj)
# ----------------------------------------------------------------------------
def _attn_kernel(x_ref, wqkv_ref, wproj_ref, bproj_ref, o_ref, *,
                 num_heads, head_dim, channel_mode):
    H, hd = num_heads, head_dim
    D = H * hd

    xb = x_ref[0].astype(jnp.bfloat16)            # (A0, A1, D) block
    if channel_mode:
        # Channel branch: the block arrives token-major (C, Tb, D).  Swap the
        # two leading dims in VMEM so groups lead (Tb, C, D) — this replaces
        # the old full-tensor HBM transpose done in the wrapper.
        xb = pltpu.einshape("ctd->tcd", xb)
    G, S, _ = xb.shape                            # groups, tokens-per-group
    rows = G * S

    # Fused QKV projection: one (rows, D) @ (D, 3D) MXU matmul.
    # q columns of Wqkv were pre-scaled by head_dim**-0.5 at prep time.
    x2 = xb.reshape(rows, D)
    qkv = jnp.dot(x2, wqkv_ref[...], preferred_element_type=jnp.float32)
    qkv = qkv.astype(jnp.bfloat16).reshape(G, S, 3 * D)

    # Multi-head attention: heads statically unrolled; each head is a single
    # dot_general batched over all G groups in the block.
    head_outs = []
    for h in range(H):
        q = qkv[:, :, h * hd:(h + 1) * hd]                       # (G, S, hd)
        k = qkv[:, :, D + h * hd:D + (h + 1) * hd]
        v = qkv[:, :, 2 * D + h * hd:2 * D + (h + 1) * hd]

        s = jnp.einsum('gqe,gke->gqk', q, k,
                       preferred_element_type=jnp.float32)       # (G, S, S)
        s = s - jnp.max(s, axis=-1, keepdims=True)               # f32 softmax
        p = jnp.exp(s)
        p = p * pl.reciprocal(jnp.sum(p, axis=-1, keepdims=True), approx=True)
        o_h = jnp.einsum('gqk,gke->gqe', p.astype(jnp.bfloat16), v,
                         preferred_element_type=jnp.float32)     # (G, S, hd)
        head_outs.append(o_h.astype(jnp.bfloat16))

    attn = jnp.concatenate(head_outs, axis=-1)                   # (G, S, D)
    attn2 = attn.reshape(rows, D)

    # Output projection (one (rows, D) @ (D, D) MXU matmul) + bias (f32).
    y = jnp.dot(attn2, wproj_ref[...], preferred_element_type=jnp.float32)
    y = y + bproj_ref[...]                                       # (rows, D)
    y = y.reshape(G, S, D)
    if channel_mode:
        y = pltpu.einshape("gsd->sgd", y)                        # back to (C, Tb, D)
    o_ref[0] = y.astype(o_ref.dtype)


# ----------------------------------------------------------------------------
# Group-batch (Gb) selection
# ----------------------------------------------------------------------------
def _pick_group_block(n_groups, tokens_per_group, *, needs_8_align,
                      row_cap=512):
    """Largest Gb dividing n_groups with Gb * tokens_per_group <= row_cap.

    When the group axis is the second-to-last block dim (channel branch),
    Mosaic requires the block extent to be a multiple of 8 or the full axis.
    row_cap keeps the (Gb*S, D) working set comfortably inside scoped VMEM
    on all of v5e / v6e / v7x (re-derive for very large model dims).
    """
    cap = max(1, row_cap // max(1, tokens_per_group))
    valid = [d for d in range(1, n_groups + 1)
             if n_groups % d == 0
             and (not needs_8_align or d == n_groups or d % 8 == 0)]
    fitting = [d for d in valid if d <= cap]
    return max(fitting) if fitting else min(valid)


# ----------------------------------------------------------------------------
# Parameter preparation (done once, outside the hot path)
# ----------------------------------------------------------------------------
def prepare_params(wqkv_t, wproj_t, bproj, *, num_heads):
    """Fold the q scale into Wqkv, cast matmul weights to bf16, keep bias f32.

    wqkv_t is the transpose of PyTorch's qkv.weight, shape (D, 3D);
    wproj_t is the transpose of proj.weight, shape (D, D); bproj is (D,).
    """
    D = wproj_t.shape[0]
    head_dim = D // num_heads
    scale = head_dim ** -0.5
    wqkv_t = jnp.asarray(wqkv_t, jnp.float32)
    wqkv_t = wqkv_t.at[:, :D].multiply(scale)           # pre-scale q columns
    return {
        "wqkv_t": wqkv_t.astype(jnp.bfloat16),
        "wproj_t": jnp.asarray(wproj_t, jnp.bfloat16),
        "bproj": jnp.asarray(bproj, jnp.float32).reshape(1, D),
    }


# ----------------------------------------------------------------------------
# Module wrapper: AlternatingAttention.forward
# ----------------------------------------------------------------------------
def alternating_attention(x, params, *, in_chans, num_heads, block_idx):
    B, N, D = x.shape
    C = in_chans
    T = N // C
    channel_mode = (block_idx % 2 == 0)

    # Free (no-copy) view matching the 'B (C T) D' token ordering.
    xv = x.reshape(B, C, T, D)

    if channel_mode:
        # Groups = (b, t) over channels; batch Gb time-groups per grid step.
        gb = _pick_group_block(T, C, needs_8_align=True)
        grid = (B, T // gb)
        x_spec = pl.BlockSpec((1, C, gb, D), lambda b, g: (b, 0, g, 0))
    else:
        # Groups = (b, c) over time; batch Gb channel-groups per grid step.
        gb = _pick_group_block(C, T, needs_8_align=False)
        grid = (B, C // gb)
        x_spec = pl.BlockSpec((1, gb, T, D), lambda b, g: (b, g, 0, 0))

    kernel = partial(_attn_kernel, num_heads=num_heads,
                     head_dim=D // num_heads, channel_mode=channel_mode)

    # NOTE: weight blocks have constant index_maps; they are tiny relative to
    # VMEM here, so explicit single-buffering (pl.Buffered(1)) is not needed.
    # TODO(synk): for production dims, pad D to a multiple of 128 so output
    # stores are unmasked lane-dense vst (D=32 here => masked partial stores).
    yv = pl.pallas_call(
        kernel,
        out_shape=jax.ShapeDtypeStruct((B, C, T, D), x.dtype),
        grid=grid,
        in_specs=[
            x_spec,
            pl.BlockSpec((D, 3 * D), lambda b, g: (0, 0)),   # Wqkv^T (bf16)
            pl.BlockSpec((D, D), lambda b, g: (0, 0)),       # Wproj^T (bf16)
            pl.BlockSpec((1, D), lambda b, g: (0, 0)),       # proj bias (f32)
        ],
        out_specs=x_spec,
        compiler_params=pltpu.CompilerParams(
            dimension_semantics=("parallel", "parallel"),
            vmem_limit_bytes=32 * 1024 * 1024),
    )(xv, params["wqkv_t"], params["wproj_t"], params["bproj"])

    # Output blocks were written back in the (B, C, T, D) layout, so this is
    # a free reshape — no HBM transpose on the way out either.
    return yv.reshape(B, N, D)


# ----------------------------------------------------------------------------
# Pure-JAX reference (mirrors the PyTorch forward, full f32)
# ----------------------------------------------------------------------------
def _reference(x, wqkv_t, wproj_t, bproj, *, in_chans, num_heads, block_idx):
    B, N, D = x.shape
    C = in_chans
    T = N // C
    head_dim = D // num_heads
    scale = head_dim ** -0.5

    if block_idx % 2 == 0:
        xg = x.reshape(B, C, T, D).transpose(0, 2, 1, 3).reshape(B * T, C, D)
    else:
        xg = x.reshape(B, C, T, D).reshape(B * C, T, D)

    G, S, _ = xg.shape
    qkv = xg @ wqkv_t                                             # (G, S, 3D)
    qkv = qkv.reshape(G, S, 3, num_heads, head_dim).transpose(2, 0, 3, 1, 4)
    q, k, v = qkv[0], qkv[1], qkv[2]                              # (G, H, S, hd)
    attn = (q * scale) @ jnp.swapaxes(k, -2, -1)
    attn = jax.nn.softmax(attn, axis=-1)
    o = attn @ v                                                  # (G, H, S, hd)
    o = o.transpose(0, 2, 1, 3).reshape(G, S, D)
    o = o @ wproj_t + bproj

    if block_idx % 2 == 0:
        return o.reshape(B, T, C, D).transpose(0, 2, 1, 3).reshape(B, N, D)
    return o.reshape(B, C, T, D).reshape(B, N, D)


# ----------------------------------------------------------------------------
if __name__ == "__main__":
    # Small config consistent with the module: dim % num_heads == 0,
    # N = in_chans * T, tokens ordered channel-major / time-minor.
    B, in_chans, T, D = 2, 4, 8, 32
    num_heads = 4
    N = in_chans * T

    key = jax.random.PRNGKey(0)
    kx, kq, kp, kb = jax.random.split(key, 4)

    x = jax.random.normal(kx, (B, N, D), dtype=jnp.float32)

    # PyTorch Linear weight is (out, in); we store the transpose so the kernel
    # does x @ W directly.
    wqkv_t = jax.random.normal(kq, (D, 3 * D), dtype=jnp.float32) * 0.05
    wproj_t = jax.random.normal(kp, (D, D), dtype=jnp.float32) * 0.05
    bproj = jax.random.normal(kb, (D,), dtype=jnp.float32) * 0.01

    params = prepare_params(wqkv_t, wproj_t, bproj, num_heads=num_heads)

    for block_idx in (0, 1):   # even: channel attention; odd: temporal attention
        fn = jax.jit(partial(alternating_attention, in_chans=in_chans,
                             num_heads=num_heads, block_idx=block_idx))
        out = fn(x, params)
        jax.block_until_ready(out)

        ref = _reference(x, wqkv_t, wproj_t, bproj, in_chans=in_chans,
                         num_heads=num_heads, block_idx=block_idx)
        assert out.shape == (B, N, D)
        max_err = float(jnp.max(jnp.abs(out - ref)))
        assert jnp.allclose(out, ref, atol=2e-2, rtol=2e-2), (
            f"mismatch vs reference (block_idx={block_idx}), max err {max_err}")

    print("KERNEL_OK")
</pallas_src>

<mosaic_0001>
module attributes {stable_mosaic.version = 11 : i64} {
  func.func @_attn_kernel(%arg0: i32, %arg1: i32, %arg2: memref<1x4x8x32xf32, #tpu.memory_space<vmem>>, %arg3: memref<32x96xbf16, #tpu.memory_space<vmem>>, %arg4: memref<32x32xbf16, #tpu.memory_space<vmem>>, %arg5: memref<1x32xf32, #tpu.memory_space<vmem>>, %arg6: memref<1x4x8x32xf32, #tpu.memory_space<vmem>>) attributes {dimension_semantics = [#tpu.dimension_semantics<parallel>, #tpu.dimension_semantics<parallel>], iteration_bounds = array<i64: 2, 1>, scalar_prefetch = 0 : i64, scratch_operands = 0 : i64, tpu.core_type = #tpu.core_type<tc>, window_params = [{transform_indices = @transform_0, window_bounds = array<i64: 1, 4, 8, 32>}, {pipeline_mode = #tpu.pipeline_mode<synchronous>, transform_indices = @transform_1, window_bounds = array<i64: 32, 96>}, {pipeline_mode = #tpu.pipeline_mode<synchronous>, transform_indices = @transform_2, window_bounds = array<i64: 32, 32>}, {pipeline_mode = #tpu.pipeline_mode<synchronous>, transform_indices = @transform_3, window_bounds = array<i64: 1, 32>}, {transform_indices = @transform_4, window_bounds = array<i64: 1, 4, 8, 32>}]} {
    %c0 = arith.constant 0 : index
    %c0_0 = arith.constant 0 : index
    %c0_1 = arith.constant 0 : index
    %c0_2 = arith.constant 0 : index
    %0 = vector.load %arg2[%c0, %c0_0, %c0_1, %c0_2] : memref<1x4x8x32xf32, #tpu.memory_space<vmem>>, vector<1x4x8x32xf32>
    %1 = vector.shape_cast %0 : vector<1x4x8x32xf32> to vector<4x8x32xf32>
    %2 = arith.truncf %1 : vector<4x8x32xf32> to vector<4x8x32xbf16>
    %3 = tpu.transpose %2, [1, 0, 2] : vector<4x8x32xbf16> -> vector<8x4x32xbf16>
    %4 = vector.shape_cast %3 : vector<8x4x32xbf16> to vector<32x32xbf16>
    %c0_3 = arith.constant 0 : index
    %c0_4 = arith.constant 0 : index
    %5 = vector.load %arg3[%c0_3, %c0_4] : memref<32x96xbf16, #tpu.memory_space<vmem>>, vector<32x96xbf16>
    %cst = arith.constant dense<0.000000e+00> : vector<32x96xf32>
    %6 = tpu.matmul %4, %5, %cst {dimension_numbers = #tpu.dot_dimension_numbers<[1], [0], [0], [1], [0, 0, 1, 1], [], []>} : vector<32x32xbf16>, vector<32x96xbf16>, vector<32x96xf32> -> vector<32x96xf32>
    %7 = arith.truncf %6 : vector<32x96xf32> to vector<32x96xbf16>
    %8 = vector.shape_cast %7 : vector<32x96xbf16> to vector<8x4x96xbf16>
    %9 = vector.extract_strided_slice %8 {offsets = [0, 0, 0], sizes = [8, 4, 8], strides = [1, 1, 1]} : vector<8x4x96xbf16> to vector<8x4x8xbf16>
    %10 = vector.extract_strided_slice %8 {offsets = [0, 0, 32], sizes = [8, 4, 8], strides = [1, 1, 1]} : vector<8x4x96xbf16> to vector<8x4x8xbf16>
    %11 = vector.extract_strided_slice %8 {offsets = [0, 0, 64], sizes = [8, 4, 8], strides = [1, 1, 1]} : vector<8x4x96xbf16> to vector<8x4x8xbf16>
    "tpu.trace_start"() <{level = 10 : i32, message = "gqe,gke->gqk"}> : () -> ()
    %cst_5 = arith.constant dense<0.000000e+00> : vector<8x4x4xf32>
    %12 = tpu.matmul %9, %10, %cst_5 {dimension_numbers = #tpu.dot_dimension_numbers<[2], [2], [1], [1], [0, 0, 0, 1, 1, 1], [0], [0]>} : vector<8x4x8xbf16>, vector<8x4x8xbf16>, vector<8x4x4xf32> -> vector<8x4x4xf32>
    "tpu.trace_stop"() : () -> ()
    %cst_6 = arith.constant dense<0xFF800000> : vector<8x4xf32>
    %13 = vector.multi_reduction <maximumf>, %12, %cst_6 [2] : vector<8x4x4xf32> to vector<8x4xf32>
    %14 = vector.shape_cast %13 : vector<8x4xf32> to vector<8x4x1xf32>
    %15 = vector.broadcast %14 : vector<8x4x1xf32> to vector<8x4x4xf32>
    %16 = arith.subf %12, %15 : vector<8x4x4xf32>
    %17 = math.exp %16 : vector<8x4x4xf32>
    %cst_7 = arith.constant dense<0.000000e+00> : vector<8x4xf32>
    %18 = vector.multi_reduction <add>, %17, %cst_7 [2] : vector<8x4x4xf32> to vector<8x4xf32>
    %19 = vector.shape_cast %18 : vector<8x4xf32> to vector<8x4x1xf32>
    %20 = tpu.reciprocal %19 {approx = true} : vector<8x4x1xf32> -> vector<8x4x1xf32>
    %21 = vector.broadcast %20 : vector<8x4x1xf32> to vector<8x4x4xf32>
    %22 = arith.mulf %17, %21 : vector<8x4x4xf32>
    %23 = arith.truncf %22 : vector<8x4x4xf32> to vector<8x4x4xbf16>
    "tpu.trace_start"() <{level = 10 : i32, message = "gqk,gke->gqe"}> : () -> ()
    %cst_8 = arith.constant dense<0.000000e+00> : vector<8x4x8xf32>
    %24 = tpu.matmul %23, %11, %cst_8 {dimension_numbers = #tpu.dot_dimension_numbers<[2], [1], [1], [2], [0, 0, 0, 1, 1, 2], [0], [0]>} : vector<8x4x4xbf16>, vector<8x4x8xbf16>, vector<8x4x8xf32> -> vector<8x4x8xf32>
    "tpu.trace_stop"() : () -> ()
    %25 = arith.truncf %24 : vector<8x4x8xf32> to vector<8x4x8xbf16>
    %26 = vector.extract_strided_slice %8 {offsets = [0, 0, 8], sizes = [8, 4, 8], strides = [1, 1, 1]} : vector<8x4x96xbf16> to vector<8x4x8xbf16>
    %27 = vector.extract_strided_slice %8 {offsets = [0, 0, 40], sizes = [8, 4, 8], strides = [1, 1, 1]} : vector<8x4x96xbf16> to vector<8x4x8xbf16>
    %28 = vector.extract_strided_slice %8 {offsets = [0, 0, 72], sizes = [8, 4, 8], strides = [1, 1, 1]} : vector<8x4x96xbf16> to vector<8x4x8xbf16>
    "tpu.trace_start"() <{level = 10 : i32, message = "gqe,gke->gqk"}> : () -> ()
    %cst_9 = arith.constant dense<0.000000e+00> : vector<8x4x4xf32>
    %29 = tpu.matmul %26, %27, %cst_9 {dimension_numbers = #tpu.dot_dimension_numbers<[2], [2], [1], [1], [0, 0, 0, 1, 1, 1], [0], [0]>} : vector<8x4x8xbf16>, vector<8x4x8xbf16>, vector<8x4x4xf32> -> vector<8x4x4xf32>
    "tpu.trace_stop"() : () -> ()
    %cst_10 = arith.constant dense<0xFF800000> : vector<8x4xf32>
    %30 = vector.multi_reduction <maximumf>, %29, %cst_10 [2] : vector<8x4x4xf32> to vector<8x4xf32>
    %31 = vector.shape_cast %30 : vector<8x4xf32> to vector<8x4x1xf32>
    %32 = vector.broadcast %31 : vector<8x4x1xf32> to vector<8x4x4xf32>
    %33 = arith.subf %29, %32 : vector<8x4x4xf32>
    %34 = math.exp %33 : vector<8x4x4xf32>
    %cst_11 = arith.constant dense<0.000000e+00> : vector<8x4xf32>
    %35 = vector.multi_reduction <add>, %34, %cst_11 [2] : vector<8x4x4xf32> to vector<8x4xf32>
    %36 = vector.shape_cast %35 : vector<8x4xf32> to vector<8x4x1xf32>
    %37 = tpu.reciprocal %36 {approx = true} : vector<8x4x1xf32> -> vector<8x4x1xf32>
    %38 = vector.broadcast %37 : vector<8x4x1xf32> to vector<8x4x4xf32>
    %39 = arith.mulf %34, %38 : vector<8x4x4xf32>
    %40 = arith.truncf %39 : vector<8x4x4xf32> to vector<8x4x4xbf16>
    "tpu.trace_start"() <{level = 10 : i32, message = "gqk,gke->gqe"}> : () -> ()
    %cst_12 = arith.constant dense<0.000000e+00> : vector<8x4x8xf32>
    %41 = tpu.matmul %40, %28, %cst_12 {dimension_numbers = #tpu.dot_dimension_numbers<[2], [1], [1], [2], [0, 0, 0, 1, 1, 2], [0], [0]>} : vector<8x4x4xbf16>, vector<8x4x8xbf16>, vector<8x4x8xf32> -> vector<8x4x8xf32>
    "tpu.trace_stop"() : () -> ()
    %42 = arith.truncf %41 : vector<8x4x8xf32> to vector<8x4x8xbf16>
    %43 = vector.extract_strided_slice %8 {offsets = [0, 0, 16], sizes = [8, 4, 8], strides = [1, 1, 1]} : vector<8x4x96xbf16> to vector<8x4x8xbf16>
    %44 = vector.extract_strided_slice %8 {offsets = [0, 0, 48], sizes = [8, 4, 8], strides = [1, 1, 1]} : vector<8x4x96xbf16> to vector<8x4x8xbf16>
    %45 = vector.extract_strided_slice %8 {offsets = [0, 0, 80], sizes = [8, 4, 8], strides = [1, 1, 1]} : vector<8x4x96xbf16> to vector<8x4x8xbf16>
    "tpu.trace_start"() <{level = 10 : i32, message = "gqe,gke->gqk"}> : () -> ()
    %cst_13 = arith.constant dense<0.000000e+00> : vector<8x4x4xf32>
    %46 = tpu.matmul %43, %44, %cst_13 {dimension_numbers = #tpu.dot_dimension_numbers<[2], [2], [1], [1], [0, 0, 0, 1, 1, 1], [0], [0]>} : vector<8x4x8xbf16>, vector<8x4x8xbf16>, vector<8x4x4xf32> -> vector<8x4x4xf32>
    "tpu.trace_stop"() : () -> ()
    %cst_14 = arith.constant dense<0xFF800000> : vector<8x4xf32>
    %47 = vector.multi_reduction <maximumf>, %46, %cst_14 [2] : vector<8x4x4xf32> to vector<8x4xf32>
    %48 = vector.shape_cast %47 : vector<8x4xf32> to vector<8x4x1xf32>
    %49 = vector.broadcast %48 : vector<8x4x1xf32> to vector<8x4x4xf32>
    %50 = arith.subf %46, %49 : vector<8x4x4xf32>
    %51 = math.exp %50 : vector<8x4x4xf32>
    %cst_15 = arith.constant dense<0.000000e+00> : vector<8x4xf32>
    %52 = vector.multi_reduction <add>, %51, %cst_15 [2] : vector<8x4x4xf32> to vector<8x4xf32>
    %53 = vector.shape_cast %52 : vector<8x4xf32> to vector<8x4x1xf32>
    %54 = tpu.reciprocal %53 {approx = true} : vector<8x4x1xf32> -> vector<8x4x1xf32>
    %55 = vector.broadcast %54 : vector<8x4x1xf32> to vector<8x4x4xf32>
    %56 = arith.mulf %51, %55 : vector<8x4x4xf32>
    %57 = arith.truncf %56 : vector<8x4x4xf32> to vector<8x4x4xbf16>
    "tpu.trace_start"() <{level = 10 : i32, message = "gqk,gke->gqe"}> : () -> ()
    %cst_16 = arith.constant dense<0.000000e+00> : vector<8x4x8xf32>
    %58 = tpu.matmul %57, %45, %cst_16 {dimension_numbers = #tpu.dot_dimension_numbers<[2], [1], [1], [2], [0, 0, 0, 1, 1, 2], [0], [0]>} : vector<8x4x4xbf16>, vector<8x4x8xbf16>, vector<8x4x8xf32> -> vector<8x4x8xf32>
    "tpu.trace_stop"() : () -> ()
    %59 = arith.truncf %58 : vector<8x4x8xf32> to vector<8x4x8xbf16>
    %60 = vector.extract_strided_slice %8 {offsets = [0, 0, 24], sizes = [8, 4, 8], strides = [1, 1, 1]} : vector<8x4x96xbf16> to vector<8x4x8xbf16>
    %61 = vector.extract_strided_slice %8 {offsets = [0, 0, 56], sizes = [8, 4, 8], strides = [1, 1, 1]} : vector<8x4x96xbf16> to vector<8x4x8xbf16>
    %62 = vector.extract_strided_slice %8 {offsets = [0, 0, 88], sizes = [8, 4, 8], strides = [1, 1, 1]} : vector<8x4x96xbf16> to vector<8x4x8xbf16>
    "tpu.trace_start"() <{level = 10 : i32, message = "gqe,gke->gqk"}> : () -> ()
    %cst_17 = arith.constant dense<0.000000e+00> : vector<8x4x4xf32>
    %63 = tpu.matmul %60, %61, %cst_17 {dimension_numbers = #tpu.dot_dimension_numbers<[2], [2], [1], [1], [0, 0, 0, 1, 1, 1], [0], [0]>} : vector<8x4x8xbf16>, vector<8x4x8xbf16>, vector<8x4x4xf32> -> vector<8x4x4xf32>
    "tpu.trace_stop"() : () -> ()
    %cst_18 = arith.constant dense<0xFF800000> : vector<8x4xf32>
    %64 = vector.multi_reduction <maximumf>, %63, %cst_18 [2] : vector<8x4x4xf32> to vector<8x4xf32>
    %65 = vector.shape_cast %64 : vector<8x4xf32> to vector<8x4x1xf32>
    %66 = vector.broadcast %65 : vector<8x4x1xf32> to vector<8x4x4xf32>
    %67 = arith.subf %63, %66 : vector<8x4x4xf32>
    %68 = math.exp %67 : vector<8x4x4xf32>
    %cst_19 = arith.constant dense<0.000000e+00> : vector<8x4xf32>
    %69 = vector.multi_reduction <add>, %68, %cst_19 [2] : vector<8x4x4xf32> to vector<8x4xf32>
    %70 = vector.shape_cast %69 : vector<8x4xf32> to vector<8x4x1xf32>
    %71 = tpu.reciprocal %70 {approx = true} : vector<8x4x1xf32> -> vector<8x4x1xf32>
    %72 = vector.broadcast %71 : vector<8x4x1xf32> to vector<8x4x4xf32>
    %73 = arith.mulf %68, %72 : vector<8x4x4xf32>
    %74 = arith.truncf %73 : vector<8x4x4xf32> to vector<8x4x4xbf16>
    "tpu.trace_start"() <{level = 10 : i32, message = "gqk,gke->gqe"}> : () -> ()
    %cst_20 = arith.constant dense<0.000000e+00> : vector<8x4x8xf32>
    %75 = tpu.matmul %74, %62, %cst_20 {dimension_numbers = #tpu.dot_dimension_numbers<[2], [1], [1], [2], [0, 0, 0, 1, 1, 2], [0], [0]>} : vector<8x4x4xbf16>, vector<8x4x8xbf16>, vector<8x4x8xf32> -> vector<8x4x8xf32>
    "tpu.trace_stop"() : () -> ()
    %76 = arith.truncf %75 : vector<8x4x8xf32> to vector<8x4x8xbf16>
    %77 = tpu.concatenate %25, %42, %59, %76 in 2 : vector<8x4x8xbf16>, vector<8x4x8xbf16>, vector<8x4x8xbf16>, vector<8x4x8xbf16> -> vector<8x4x32xbf16>
    %78 = vector.shape_cast %77 : vector<8x4x32xbf16> to vector<32x32xbf16>
    %c0_21 = arith.constant 0 : index
    %c0_22 = arith.constant 0 : index
    %79 = vector.load %arg4[%c0_21, %c0_22] : memref<32x32xbf16, #tpu.memory_space<vmem>>, vector<32x32xbf16>
    %cst_23 = arith.constant dense<0.000000e+00> : vector<32x32xf32>
    %80 = tpu.matmul %78, %79, %cst_23 {dimension_numbers = #tpu.dot_dimension_numbers<[1], [0], [0], [1], [0, 0, 1, 1], [], []>} : vector<32x32xbf16>, vector<32x32xbf16>, vector<32x32xf32> -> vector<32x32xf32>
    %c0_24 = arith.constant 0 : index
    %c0_25 = arith.constant 0 : index
    %81 = vector.load %arg5[%c0_24, %c0_25] : memref<1x32xf32, #tpu.memory_space<vmem>>, vector<1x32xf32>
    %82 = vector.broadcast %81 : vector<1x32xf32> to vector<32x32xf32>
    %83 = arith.addf %80, %82 : vector<32x32xf32>
    %84 = vector.shape_cast %83 : vector<32x32xf32> to vector<8x4x32xf32>
    %85 = tpu.transpose %84, [1, 0, 2] : vector<8x4x32xf32> -> vector<4x8x32xf32>
    %c0_26 = arith.constant 0 : index
    %c0_27 = arith.constant 0 : index
    %c0_28 = arith.constant 0 : index
    %c0_29 = arith.constant 0 : index
    %86 = vector.load %arg6[%c0_26, %c0_27, %c0_28, %c0_29] : memref<1x4x8x32xf32, #tpu.memory_space<vmem>>, vector<1x4x8x32xf32>
    %87 = vector.shape_cast %86 : vector<1x4x8x32xf32> to vector<4x8x32xf32>
    %88 = vector.shape_cast %85 : vector<4x8x32xf32> to vector<1x4x8x32xf32>
    tpu.vector_store %arg6[%c0_26, %c0_27, %c0_28, %c0_29], %88 {strides = array<i32>} : memref<1x4x8x32xf32, #tpu.memory_space<vmem>>, vector<1x4x8x32xf32>,
    return
  }
  func.func @transform_0(%arg0: i32, %arg1: i32) -> (i32, i32, i32, i32) {
    %c0_i32 = arith.constant 0 : i32
    %c0_i32_0 = arith.constant 0 : i32
    %c0_i32_1 = arith.constant 0 : i32
    return %arg0, %c0_i32, %arg1, %c0_i32_0 : i32, i32, i32, i32
  }
  func.func @transform_1(%arg0: i32, %arg1: i32) -> (i32, i32) {
    %c0_i32 = arith.constant 0 : i32
    %c0_i32_0 = arith.constant 0 : i32
    %c0_i32_1 = arith.constant 0 : i32
    return %c0_i32, %c0_i32_0 : i32, i32
  }
  func.func @transform_2(%arg0: i32, %arg1: i32) -> (i32, i32) {
    %c0_i32 = arith.constant 0 : i32
    %c0_i32_0 = arith.constant 0 : i32
    %c0_i32_1 = arith.constant 0 : i32
    return %c0_i32, %c0_i32_0 : i32, i32
  }
  func.func @transform_3(%arg0: i32, %arg1: i32) -> (i32, i32) {
    %c0_i32 = arith.constant 0 : i32
    %c0_i32_0 = arith.constant 0 : i32
    %c0_i32_1 = arith.constant 0 : i32
    return %c0_i32, %c0_i32_0 : i32, i32
  }
  func.func @transform_4(%arg0: i32, %arg1: i32) -> (i32, i32, i32, i32) {
    %c0_i32 = arith.constant 0 : i32
    %c0_i32_0 = arith.constant 0 : i32
    %c0_i32_1 = arith.constant 0 : i32
    return %arg0, %c0_i32, %arg1, %c0_i32_0 : i32, i32, i32, i32
  }
}

</mosaic_0001>

<llo_original>
// kernel: alternating_attention.1
$region0: #{alternating_attention.1}
  #allocation0 [shape = 'u32[]', space=smem, size = 0x4, offset = 0x4, fixed_abs, tag = 'smem constant byte address 0x4 - core index']
  #allocation1 [shape = 'u32[144,128]{1,0:T(1,128)}', space=vmem, size = 0x12000, scoped, tag = 'internal scratch']
  %s0 = inlined_call_operand.hbm [shape: f32[2,4,8,32], index: 0, kind: input, shape index: {}]
  %s1 = inlined_call_operand.hbm [shape: bf16[32,96], index: 1, kind: input, shape index: {}]
  %s2 = inlined_call_operand.hbm [shape: bf16[32,32], index: 2, kind: input, shape index: {}]
  %s3 = inlined_call_operand.vmem [shape: f32[1,32], index: 3, kind: input, shape index: {}]
  %s4 = inlined_call_operand.hbm [shape: f32[2,4,8,32], index: 4, kind: output, shape index: {}]
  %s5 = sld [smem:[#allocation0]]
  $region61: #{alternating_attention.1} parent=0
    _
  %s7 = ssub.s32 1, %s5
  %s8 = scalar_select 0, %s7, %s5
  $region1: #{alternating_attention.1} parent=0
    #allocation2 [shape = 'u8[32768]{0}', space=vmem, size = 0x8000, scoped, tag = 'input window, operand 0']
    #allocation3 [shape = 's32[2]{0}', space=sflag, size = 0x8, scoped, tag = 'scoped memory for alternating_attention.1']
    #allocation4 [shape = 's32[2]{0}', space=sflag, size = 0x8, scoped, tag = 'scoped memory for alternating_attention.1']
    #allocation5 [shape = 'u8[8192]{0}', space=vmem, size = 0x2000, scoped, tag = 'input window, operand 1, single buffered']
    #allocation6 [shape = 's32[1]{0}', space=sflag, size = 0x4, scoped, tag = 'scoped memory for alternating_attention.1']
    #allocation7 [shape = 'u8[8192]{0}', space=vmem, size = 0x2000, scoped, tag = 'input window, operand 2, single buffered']
    #allocation8 [shape = 'u8[32768]{0}', space=vmem, size = 0x8000, scoped, tag = 'output window, operand 0']
    %9 = vsyncpa [#allocation3], 0
    %s10 = scalar_lea.sflag [#allocation3], 1
    %11 = vsyncpa %s10, 0
    %12 = vsyncpa [#allocation6], 0
    %13 = vsyncpa [#allocation4], 0
    %s14 = scalar_lea.sflag [#allocation4], 1
    %15 = vsyncpa %s14, 0
    loop: start=0, step=1, limit=4
    $region2: #{alternating_attention.1} parent=1 // loop_pre_header
      _
    $region3: #{alternating_attention.1} parent=1 // loop_header
      %s17 = sphi 0, %s21
      %p18 = scmp.ge.s32.totalorder %s17, 4
      %s24 = sphi 0, %s36
      %s25 = sphi 0, %s32
      %s26 = sphi 0, %s24
      %s27 = sphi 0, %s25
      %s28 = sphi 0, %s26
      %s29 = sphi 0, %s27
      %s41 = sphi 0, %s43
      %s44 = sphi 0, %s41
      %s45 = sphi 0, %s44
      %s61 = sphi 0, %s45
      %s65 = sphi 0, %s65
      %s67 = sphi 0, %s65
      %s68 = sphi 0, %s67
      %s82 = sphi 0, %s68
      %s86 = sphi 0, %s86
      %s88 = sphi 0, %s86
      %s89 = sphi 0, %s88
      %s103 = sphi 0, %s89
      %s107 = sphi 0, %s107
      %s109 = sphi 0, %s107
      %s110 = sphi 0, %s109
      %s124 = sphi 0, %s110
      %s132 = sphi 0, %s134
      %s135 = sphi 0, %s132
      %s136 = sphi 0, %s135
      %s152 = sphi 0, %s136
    $region4: #{alternating_attention.1} parent=1 // loop_header_branch
      %20 = sbr.rel (%p18) target = $region8
    $region5: #{alternating_attention.1} parent=1 // loop_body
      %s22 = ssub.s32 %s17, 1
      %s23 = ssub.s32 %s17, 2
      %s30 = sadd.s32 1, %s25
      %p31 = scmp.ge.s32.totalorder %s30, 1
      %s32 = scalar_select %p31, 0, %s30
      %s33 = sadd.s32 1, %s24
      %s34 = scalar_select %p31, %s33, %s24
      %p35 = scmp.ge.s32.totalorder %s34, 2
      %s36 = scalar_select %p35, 0, %s34
      %s37 = ssub.s32 %s24, %s36
      %s38 = ssub.s32 %s25, %s32
      %s39 = sor.u32 %s37, %s38
      %p40 = scmp.eq.s32.totalorder %s39, 0
      %s42 = sadd.s32 %s41, 1
      %s43 = scalar_select %p40, %s41, %s42
      %p46 = pneg %p40
      %p47 = scmp.eq.s32.totalorder %s17, 1
      %p48 = por %p46, %p47
      %p49 = scmp.ne.s32.totalorder %s41, %s44
      %p50 = scmp.eq.s32.totalorder %s17, 0
      %p51 = por %p49, %p50
      %p52 = scmp.ne.s32.totalorder %s41, %s44
      %p53 = scmp.eq.s32.totalorder %s22, 1
      %p54 = por %p52, %p53
      %p55 = scmp.ne.s32.totalorder %s44, %s45
      %p56 = scmp.eq.s32.totalorder %s22, 0
      %p57 = por %p55, %p56
      %p58 = scmp.ne.s32.totalorder %s44, %s45
      %p59 = scmp.eq.s32.totalorder %s23, 1
      %p60 = por %p58, %p59
      %p62 = scmp.ne.s32.totalorder %s45, %s61
      %p63 = scmp.eq.s32.totalorder %s23, 0
      %p64 = por %p62, %p63
      %s66 = sadd.s32 %s65, 1
      %p69 = scmp.eq.s32.totalorder %s17, 1
      %p70 = scmp.ne.s32.totalorder %s65, %s67
      %p71 = scmp.eq.s32.totalorder %s17, 0
      %p72 = por %p70, %p71
      %p73 = scmp.ne.s32.totalorder %s65, %s67
      %p74 = scmp.eq.s32.totalorder %s22, 1
      %p75 = por %p73, %p74
      %p76 = scmp.ne.s32.totalorder %s67, %s68
      %p77 = scmp.eq.s32.totalorder %s22, 0
      %p78 = por %p76, %p77
      %p79 = scmp.ne.s32.totalorder %s67, %s68
      %p80 = scmp.eq.s32.totalorder %s23, 1
      %p81 = por %p79, %p80
      %p83 = scmp.ne.s32.totalorder %s68, %s82
      %p84 = scmp.eq.s32.totalorder %s23, 0
      %p85 = por %p83, %p84
      %s87 = sadd.s32 %s86, 1
      %p90 = scmp.eq.s32.totalorder %s17, 1
      %p91 = scmp.ne.s32.totalorder %s86, %s88
      %p92 = scmp.eq.s32.totalorder %s17, 0
      %p93 = por %p91, %p92
      %p94 = scmp.ne.s32.totalorder %s86, %s88
      %p95 = scmp.eq.s32.totalorder %s22, 1
      %p96 = por %p94, %p95
      %p97 = scmp.ne.s32.totalorder %s88, %s89
      %p98 = scmp.eq.s32.totalorder %s22, 0
      %p99 = por %p97, %p98
      %p100 = scmp.ne.s32.totalorder %s88, %s89
      %p101 = scmp.eq.s32.totalorder %s23, 1
      %p102 = por %p100, %p101
      %p104 = scmp.ne.s32.totalorder %s89, %s103
      %p105 = scmp.eq.s32.totalorder %s23, 0
      %p106 = por %p104, %p105
      %s108 = sadd.s32 %s107, 1
      %p111 = scmp.eq.s32.totalorder %s17, 1
      %p112 = scmp.ne.s32.totalorder %s107, %s109
      %p113 = scmp.eq.s32.totalorder %s17, 0
      %p114 = por %p112, %p113
      %p115 = scmp.ne.s32.totalorder %s107, %s109
      %p116 = scmp.eq.s32.totalorder %s22, 1
      %p117 = por %p115, %p116
      %p118 = scmp.ne.s32.totalorder %s109, %s110
      %p119 = scmp.eq.s32.totalorder %s22, 0
      %p120 = por %p118, %p119
      %p121 = scmp.ne.s32.totalorder %s109, %s110
      %p122 = scmp.eq.s32.totalorder %s23, 1
      %p123 = por %p121, %p122
      %p125 = scmp.ne.s32.totalorder %s110, %s124
      %p126 = scmp.eq.s32.totalorder %s23, 0
      %p127 = por %p125, %p126
      %s128 = ssub.s32 %s24, %s36
      %s129 = ssub.s32 %s25, %s32
      %s130 = sor.u32 %s128, %s129
      %p131 = scmp.eq.s32.totalorder %s130, 0
      %s133 = sadd.s32 %s132, 1
      %s134 = scalar_select %p131, %s132, %s133
      %p137 = pneg %p131
      %p138 = scmp.eq.s32.totalorder %s17, 1
      %p139 = por %p137, %p138
      %p140 = scmp.ne.s32.totalorder %s132, %s135
      %p141 = scmp.eq.s32.totalorder %s17, 0
      %p142 = por %p140, %p141
      %p143 = scmp.ne.s32.totalorder %s132, %s135
      %p144 = scmp.eq.s32.totalorder %s22, 1
      %p145 = por %p143, %p144
      %p146 = scmp.ne.s32.totalorder %s135, %s136
      %p147 = scmp.eq.s32.totalorder %s22, 0
      %p148 = por %p146, %p147
      %p149 = scmp.ne.s32.totalorder %s135, %s136
      %p150 = scmp.eq.s32.totalorder %s23, 1
      %p151 = por %p149, %p150
      %p153 = scmp.ne.s32.totalorder %s136, %s152
      %p154 = scmp.eq.s32.totalorder %s23, 0
      %p155 = por %p153, %p154
      %p156 = scmp.le.s32.totalorder 1, %s17
      %p157 = scmp.lt.s32.totalorder %s17, 3
      %p158 = pnand %p156, %p157
      %p159 = pneg %p158
      // Predicated region
      $region9: #{alternating_attention.1} parent=5 // pred_check
        _
      $region10: #{alternating_attention.1} parent=5 // pred_check_branch
        %161 = sbr.rel (%p158) target = $region12
      $region11: #{alternating_attention.1} parent=5 // pred_region
        %s162 = ssub.s32 %s17, 1
        // Predicated region
        $region13: #{alternating_attention.1} parent=11 // pred_check
          %p163 = pneg %p78
        $region14: #{alternating_attention.1} parent=11 // pred_check_branch
          %165 = sbr.rel (%p163) target = $region16
        $region15: #{alternating_attention.1} parent=11 // pred_region
          %s167 = ssub.s32 256, 256
          %168 = vsyncadd [#allocation6], %s167
          %s169 = sshll.u32 [#allocation5], 4
          %s170 = int_to_ptr.vmem [resolvable:$true] %s169
          %175 = dma.hbm_to_vmem [thread:$0]  %s1, 256, %s170, [#allocation6], 64, 64, 4
        $region16: #{alternating_attention.1} parent=11 // pred_fallthru
          _
        // Predicated region
        $region17: #{alternating_attention.1} parent=11 // pred_check
          %p176 = pneg %p99
        $region18: #{alternating_attention.1} parent=11 // pred_check_branch
          %178 = sbr.rel (%p176) target = $region20
        $region19: #{alternating_attention.1} parent=11 // pred_region
          %s180 = ssub.s32 256, 256
          %181 = vsyncadd [#allocation6], %s180
          %s182 = sshll.u32 [#allocation7], 4
          %s183 = int_to_ptr.vmem [resolvable:$true] %s182
          %188 = dma.hbm_to_vmem [thread:$0]  %s2, 256, %s183, [#allocation6], 64, 64, 4
        $region20: #{alternating_attention.1} parent=11 // pred_fallthru
          _
        // Predicated region
        $region21: #{alternating_attention.1} parent=11 // pred_check
          %p189 = pneg %p120
        $region22: #{alternating_attention.1} parent=11 // pred_check_branch
          %191 = sbr.rel (%p189) target = $region24
        $region23: #{alternating_attention.1} parent=11 // pred_region
          _
        $region24: #{alternating_attention.1} parent=11 // pred_fallthru
          _
      $region12: #{alternating_attention.1} parent=5 // pred_fallthru
        _
      %p192 = scmp.lt.s32.totalorder %s17, 2
      // Predicated region
      $region25: #{alternating_attention.1} parent=5 // pred_check
        %p193 = pneg %p192
      $region26: #{alternating_attention.1} parent=5 // pred_check_branch
        %195 = sbr.rel (%p193) target = $region28
      $region27: #{alternating_attention.1} parent=5 // pred_region
        // Predicated region
        $region29: #{alternating_attention.1} parent=27 // pred_check
          %p196 = pneg %p51
        $region30: #{alternating_attention.1} parent=27 // pred_check_branch
          %198 = sbr.rel (%p196) target = $region32
        $region31: #{alternating_attention.1} parent=27 // pred_region
          %s199 = sand.u32 %s41, 1
          %s200 = scalar_lea.sflag [#allocation3], %s199
          %s201 = sand.u32 %s41, 1
          %s202 = smul.addr %s201, 32
          %s203 = scalar_lea.vmem [#allocation2], %s202
          %s205 = ssub.s32 512, 512
          %206 = vsyncadd %s200, %s205
          %s207 = smul.addr %s24, 4
          %s208 = sadd.s32 %s25, %s207
          %s209 = smul.addr %s208, 128
          %s210 = scalar_lea.hbm %s0, %s209
          %s211 = sshll.u32 %s203, 4
          %s212 = int_to_ptr.vmem [resolvable:$true] %s211
          %217 = dma.hbm_to_vmem [thread:$0]  %s210, 512, %s212, %s200, 128, 128, 8
        $region32: #{alternating_attention.1} parent=27 // pred_fallthru
          _
      $region28: #{alternating_attention.1} parent=5 // pred_fallthru
        _
      %p218 = scmp.le.s32.totalorder 1, %s17
      %p219 = scmp.lt.s32.totalorder %s17, 3
      %p220 = pnand %p218, %p219
      %p221 = pneg %p220
      // Predicated region
      $region33: #{alternating_attention.1} parent=5 // pred_check
        _
      $region34: #{alternating_attention.1} parent=5 // pred_check_branch
        %223 = sbr.rel (%p220) target = $region36
      $region35: #{alternating_attention.1} parent=5 // pred_region
        %s224 = ssub.s32 %s17, 1
        %s225 = sand.u32 %s44, 1
        %s226 = scalar_lea.sflag [#allocation3], %s225
        %s227 = sand.u32 %s44, 1
        %s228 = smul.addr %s227, 32
        %s229 = scalar_lea.vmem [#allocation2], %s228
        // Predicated region
        $region37: #{alternating_attention.1} parent=35 // pred_check
          %p230 = pneg %p57
        $region38: #{alternating_attention.1} parent=35 // pred_check_branch
          %232 = sbr.rel (%p230) target = $region40
        $region39: #{alternating_attention.1} parent=35 // pred_region
          %233 = dma.done %s226, 512
        $region40: #{alternating_attention.1} parent=35 // pred_fallthru
          _
        // Predicated region
        $region41: #{alternating_attention.1} parent=35 // pred_check
          %p234 = pneg %p78
        $region42: #{alternating_attention.1} parent=35 // pred_check_branch
          %236 = sbr.rel (%p234) target = $region44
        $region43: #{alternating_attention.1} parent=35 // pred_region
          %237 = dma.done [#allocation6], 256
        $region44: #{alternating_attention.1} parent=35 // pred_fallthru
          _
        // Predicated region
        $region45: #{alternating_attention.1} parent=35 // pred_check
          %p238 = pneg %p99
        $region46: #{alternating_attention.1} parent=35 // pred_check_branch
          %240 = sbr.rel (%p238) target = $region48
        $region47: #{alternating_attention.1} parent=35 // pred_region
          %241 = dma.done [#allocation6], 256
        $region48: #{alternating_attention.1} parent=35 // pred_fallthru
          _
        %s242 = sand.u32 %s44, 1
        %s243 = scalar_lea.sflag [#allocation3], %s242
        %s244 = sand.u32 %s44, 1
        %s245 = smul.addr %s244, 32
        %s246 = scalar_lea.vmem [#allocation2], %s245
        %p247 = pneg %p57
        %p248 = pneg %p54
        %p249 = pneg %p78
        %p250 = pneg %p75
        %p251 = pneg %p99
        %p252 = pneg %p96
        %p253 = pneg %p120
        %p254 = pneg %p117
        %p255 = pneg %p148
        %p256 = pneg %p145
        %s257 = sand.u32 %s135, 1
        %s258 = scalar_lea.sflag [#allocation4], %s257
        %s259 = sand.u32 %s135, 1
        %s260 = smul.addr %s259, 32
        %s261 = scalar_lea.vmem [#allocation8], %s260
        %v263 = vld [vmem:[%s229] sm:$0xff]
        %v264 = vld [vmem:[%s229 + $0x8] sm:$0xff]
        %v265 = vld [vmem:[%s229 + $0x10] sm:$0xff]
        %v266 = vld [vmem:[%s229 + $0x18] sm:$0xff]
        %v267 = vpack.c.bf16 %v263, %v263
        %v269 = vunpack.c.l.s4 1983009808
        %v270 = vunpack.c.0.s8 %v269
        %v271 = vlaneseq
        %v272 = vshrl.u32 %v271, 7
        %v273 = vsub.s32 %v270, %v272
        %v274 = vrot.slane %v267, %v273
        %v275 = vpack.c.bf16 %v265, %v265
        %v277 = vunpack.c.l.s4 1983009808
        %v278 = vunpack.c.0.s8 %v277
        %v279 = vlaneseq
        %v280 = vshrl.u32 %v279, 7
        %v281 = vsub.s32 %v278, %v280
        %v282 = vrot.slane %v275, %v281
        %v283 = vcombine.low %v274, %v282
        %v284 = vcombine.high %v274, %v282
        %v286 = vunpack.c.l.s4 1934713408
        %v287 = vunpack.c.0.s8 %v286
        %v288 = vlaneseq
        %v289 = vshrl.u32 %v288, 7
        %v290 = vsub.s32 %v287, %v289
        %v291 = vrot.slane %v283, %v290
        %v293 = vunpack.c.l.s4 1934713408
        %v294 = vunpack.c.0.s8 %v293
        %v295 = vlaneseq
        %v296 = vshrl.u32 %v295, 7
        %v297 = vsub.s32 %v294, %v296
        %v298 = vrot.slane %v284, %v297
        %v299 = vcombine.high %v291, 0
        %v300 = vcombine.high %v298, 0
        %v301 = vpack.c.bf16 %v264, %v264
        %v303 = vunpack.c.l.s4 1983009808
        %v304 = vunpack.c.0.s8 %v303
        %v305 = vlaneseq
        %v306 = vshrl.u32 %v305, 7
        %v307 = vsub.s32 %v304, %v306
        %v308 = vrot.slane %v301, %v307
        %v309 = vpack.c.bf16 %v266, %v266
        %v311 = vunpack.c.l.s4 1983009808
        %v312 = vunpack.c.0.s8 %v311
        %v313 = vlaneseq
        %v314 = vshrl.u32 %v313, 7
        %v315 = vsub.s32 %v312, %v314
        %v316 = vrot.slane %v309, %v315
        %v317 = vcombine.low %v308, %v316
        %v318 = vcombine.high %v308, %v316
        %v320 = vunpack.c.l.s4 1934713408
        %v321 = vunpack.c.0.s8 %v320
        %v322 = vlaneseq
        %v323 = vshrl.u32 %v322, 7
        %v324 = vsub.s32 %v321, %v323
        %v325 = vrot.slane %v317, %v324
        %v327 = vunpack.c.l.s4 1934713408
        %v328 = vunpack.c.0.s8 %v327
        %v329 = vlaneseq
        %v330 = vshrl.u32 %v329, 7
        %v331 = vsub.s32 %v328, %v330
        %v332 = vrot.slane %v318, %v331
        %v333 = vcombine.high %v325, 0
        %v334 = vcombine.high %v332, 0
        %v337 = vpack.i.b16 %v325, %v291
        %v338 = vshrl.u32 %v291, 16
        %v339 = vshrl.u32 %v325, 16
        %v340 = vpack.i.b16 %v339, %v338
        %v343 = vpack.i.b16 %v333, %v299
        %v344 = vshrl.u32 %v299, 16
        %v345 = vshrl.u32 %v333, 16
        %v346 = vpack.i.b16 %v345, %v344
        %v349 = vpack.i.b16 %v332, %v298
        %v350 = vshrl.u32 %v298, 16
        %v351 = vshrl.u32 %v332, 16
        %v352 = vpack.i.b16 %v351, %v350
        %v355 = vpack.i.b16 %v334, %v300
        %v356 = vshrl.u32 %v300, 16
        %v357 = vshrl.u32 %v334, 16
        %v358 = vpack.i.b16 %v357, %v356
        %v359 = vld [vmem:[#allocation5] sm:$0xf]
        %v360 = vld [vmem:[#allocation5 + $0x4] sm:$0xf]
        %v361 = vld [vmem:[#allocation5 + $0x8] sm:$0xf]
        %v362 = vld [vmem:[#allocation5 + $0xc] sm:$0xf]
        %v363 = vcombine.low %v337, %v340
        %v364 = vcombine.low %v343, %v346
        %v366 = vunpack.c.l.s4 1983009808
        %v367 = vunpack.c.0.s8 %v366
        %v368 = vlaneseq
        %v369 = vshrl.u32 %v368, 7
        %v370 = vsub.s32 %v367, %v369
        %v371 = vrot.slane %v363, %v370
        %v373 = vunpack.c.l.s4 1983009808
        %v374 = vunpack.c.0.s8 %v373
        %v375 = vlaneseq
        %v376 = vshrl.u32 %v375, 7
        %v377 = vsub.s32 %v374, %v376
        %v378 = vrot.slane %v364, %v377
        %v379 = vcombine.low %v371, %v378
        %v380 = vcombine.low %v349, %v352
        %v381 = vcombine.low %v355, %v358
        %v383 = vunpack.c.l.s4 1983009808
        %v384 = vunpack.c.0.s8 %v383
        %v385 = vlaneseq
        %v386 = vshrl.u32 %v385, 7
        %v387 = vsub.s32 %v384, %v386
        %v388 = vrot.slane %v380, %v387
        %v390 = vunpack.c.l.s4 1983009808
        %v391 = vunpack.c.0.s8 %v390
        %v392 = vlaneseq
        %v393 = vshrl.u32 %v392, 7
        %v394 = vsub.s32 %v391, %v393
        %v395 = vrot.slane %v381, %v394
        %v396 = vcombine.low %v388, %v395
        %v401 = vunpack.c.l.b16 %v359
        %v402 = vunpack.c.l.b16 %v360
        %v403 = vunpack.c.l.b16 %v361
        %v404 = vunpack.c.l.b16 %v362
        %v405 = vpack.c.b16 %v402, %v401
        %v406 = vpack.c.b16 %v404, %v403
        %vm409 = vcmask 261120
        %v411 = vsel %vm409, %v379, 0
        %v414 = vsel %vm409, %v396, 0
        %416 = vmatprep.subr.bf16.mxu0 0
        %417 = vmatpush1.bf16.msra.mxu0 %v405
        %418 = vmatprep.subr.bf16.mxu0 0
        %419 = vmatpush1.bf16.msra.mxu0 %v406
        %420 = vmatprep.subr.bf16.mxu0 0
        %421 = vmatpush1.bf16.msra.mxu0 0
        %422 = vmatprep.subr.bf16.mxu0 0
        %423 = vmatpush1.bf16.msra.mxu0 0
        %424 = vmatprep.subr.bf16.mxu0 0
        %425 = vmatpush1.bf16.msra.mxu0 0
        %426 = vmatprep.subr.bf16.mxu0 0
        %427 = vmatpush1.bf16.msra.mxu0 0
        %428 = vmatprep.subr.bf16.mxu0 0
        %429 = vmatpush1.bf16.msra.mxu0 0
        %430 = vmatprep.subr.bf16.mxu0 0
        %431 = vmatpush1.bf16.msra.mxu0 0
        %432 = vmatprep.subr.bf16.mxu0 0
        %433 = vmatpush1.bf16.msra.mxu0 0
        %434 = vmatprep.subr.bf16.mxu0 0
        %435 = vmatpush1.bf16.msra.mxu0 0
        %436 = vmatprep.subr.bf16.mxu0 0
        %437 = vmatpush1.bf16.msra.mxu0 0
        %438 = vmatprep.subr.bf16.mxu0 0
        %439 = vmatpush1.bf16.msra.mxu0 0
        %440 = vmatprep.subr.bf16.mxu0 0
        %441 = vmatpush1.bf16.msra.mxu0 0
        %442 = vmatprep.subr.bf16.mxu0 0
        %443 = vmatpush1.bf16.msra.mxu0 0
        %444 = vmatprep.subr.bf16.mxu0 0
        %445 = vmatpush1.bf16.msra.mxu0 0
        %446 = vmatprep.subr.bf16.mxu0 0
        %447 = vmatpush1.bf16.msra.mxu0 0
        %448 = vmatprep.mubr.bf16.mxu0 0
        %449 = vmatmul.mubr.bf16.gmra.mrb[0].mxu0 %v411
        %v450 = vpop.f32.mrb[0].mxu0
        %v451 = vadd.f32 0.0, %v450
        %v452 = vpop.f32.mrb[0].mxu0
        %v453 = vpop.f32.mrb[0].mxu0
        %v454 = vadd.f32 0.0, %v453
        %v455 = vpop.f32.mrb[0].mxu0
        %456 = vmatprep.mubr.bf16.mxu0 0
        %457 = vmatmul.mubr.bf16.gmra.mrb[0].mxu0 %v414
        %v458 = vpop.f32.mrb[0].mxu0
        %v459 = vadd.f32 0.0, %v458
        %v460 = vpop.f32.mrb[0].mxu0
        %v461 = vpop.f32.mrb[0].mxu0
        %v462 = vadd.f32 0.0, %v461
        %v463 = vpop.f32.mrb[0].mxu0
        %464 = vdwg.mxu0
        %v465 = vpack.c.bf16 %v454, %v451
        %v466 = vpack.c.bf16 %v462, %v459
        %v469 = vcombine.high %v465, %v465
        %v471 = vunpack.c.l.s4 1983009808
        %v472 = vunpack.c.0.s8 %v471
        %v473 = vlaneseq
        %v474 = vshrl.u32 %v473, 7
        %v475 = vsub.s32 %v472, %v474
        %v476 = vrot.slane %v465, %v475
        %v478 = vunpack.c.l.s4 1983009808
        %v479 = vunpack.c.0.s8 %v478
        %v480 = vlaneseq
        %v481 = vshrl.u32 %v480, 7
        %v482 = vsub.s32 %v479, %v481
        %v483 = vrot.slane %v469, %v482
        %v484 = vcombine.high %v476, %v476
        %v485 = vcombine.high %v483, %v483
        %v486 = vcombine.high %v466, %v466
        %v488 = vunpack.c.l.s4 1983009808
        %v489 = vunpack.c.0.s8 %v488
        %v490 = vlaneseq
        %v491 = vshrl.u32 %v490, 7
        %v492 = vsub.s32 %v489, %v491
        %v493 = vrot.slane %v466, %v492
        %v495 = vunpack.c.l.s4 1983009808
        %v496 = vunpack.c.0.s8 %v495
        %v497 = vlaneseq
        %v498 = vshrl.u32 %v497, 7
        %v499 = vsub.s32 %v496, %v498
        %v500 = vrot.slane %v486, %v499
        %v501 = vcombine.high %v493, %v493
        %v502 = vcombine.high %v500, %v500
        %v504 = vunpack.c.l.s4 1983009808
        %v505 = vunpack.c.0.s8 %v504
        %v506 = vlaneseq
        %v507 = vshrl.u32 %v506, 7
        %v508 = vsub.s32 %v505, %v507
        %v509 = vrot.slane %v476, %v508
        %510 = vrot.lane.b32.xlu0 %v509, 96
        %v511 = vpop.permute.xlu0 %510
        %vm512 = vcmask 64512
        %v514 = vsel %vm512, %v476, 0
        %v517 = vsel %vm512, %v511, 0
        %519 = vmatprep.subr.bf16.mxu0 0
        %520 = vmatpush1.bf16.xpose.msra.mxu0 %v517
        %521 = vmatprep.subr.bf16.mxu0 0
        %522 = vmatpush1.bf16.xpose.msra.mxu0 0
        %523 = vmatprep.subr.bf16.mxu0 0
        %524 = vmatpush1.bf16.xpose.msra.mxu0 0
        %525 = vmatprep.subr.bf16.mxu0 0
        %526 = vmatpush1.bf16.xpose.msra.mxu0 0
        %527 = vmatprep.subr.bf16.mxu0 0
        %528 = vmatpush1.bf16.xpose.msra.mxu0 0
        %529 = vmatprep.subr.bf16.mxu0 0
        %530 = vmatpush1.bf16.xpose.msra.mxu0 0
        %531 = vmatprep.subr.bf16.mxu0 0
        %532 = vmatpush1.bf16.xpose.msra.mxu0 0
        %533 = vmatprep.subr.bf16.mxu0 0
        %534 = vmatpush1.bf16.xpose.msra.mxu0 0
        %535 = vmatprep.subr.bf16.mxu0 0
        %536 = vmatpush1.bf16.xpose.msra.mxu0 0
        %537 = vmatprep.subr.bf16.mxu0 0
        %538 = vmatpush1.bf16.xpose.msra.mxu0 0
        %539 = vmatprep.subr.bf16.mxu0 0
        %540 = vmatpush1.bf16.xpose.msra.mxu0 0
        %541 = vmatprep.subr.bf16.mxu0 0
        %542 = vmatpush1.bf16.xpose.msra.mxu0 0
        %543 = vmatprep.subr.bf16.mxu0 0
        %544 = vmatpush1.bf16.xpose.msra.mxu0 0
        %545 = vmatprep.subr.bf16.mxu0 0
        %546 = vmatpush1.bf16.xpose.msra.mxu0 0
        %547 = vmatprep.subr.bf16.mxu0 0
        %548 = vmatpush1.bf16.xpose.msra.mxu0 0
        %549 = vmatprep.subr.bf16.mxu0 0
        %550 = vmatpush1.bf16.xpose.msra.mxu0 0
        %551 = vmatprep.mubr.bf16.mxu0 0
        %552 = vmatmul.mubr.bf16.gmra.mrb[0].mxu0 %v514
        %v553 = vpop.f32.mrb[0].mxu0
        %v554 = vadd.f32 0.0, %v553
        %v555 = vpop.f32.mrb[0].mxu0
        %v556 = vpop.f32.mrb[0].mxu0
        %v557 = vpop.f32.mrb[0].mxu0
        %558 = vdwg.mxu0
        %v560 = vunpack.c.l.s4 1983009808
        %v561 = vunpack.c.0.s8 %v560
        %v562 = vlaneseq
        %v563 = vshrl.u32 %v562, 7
        %v564 = vsub.s32 %v561, %v563
        %v565 = vrot.slane %v484, %v564
        %566 = vrot.lane.b32.xlu0 %v565, 96
        %v567 = vpop.permute.xlu0 %566
        %v569 = vsel %vm512, %v484, 0
        %v572 = vsel %vm512, %v567, 0
        %574 = vmatprep.subr.bf16.mxu0 0
        %575 = vmatpush1.bf16.xpose.msra.mxu0 %v572
        %576 = vmatprep.subr.bf16.mxu0 0
        %577 = vmatpush1.bf16.xpose.msra.mxu0 0
        %578 = vmatprep.subr.bf16.mxu0 0
        %579 = vmatpush1.bf16.xpose.msra.mxu0 0
        %580 = vmatprep.subr.bf16.mxu0 0
        %581 = vmatpush1.bf16.xpose.msra.mxu0 0
        %582 = vmatprep.subr.bf16.mxu0 0
        %583 = vmatpush1.bf16.xpose.msra.mxu0 0
        %584 = vmatprep.subr.bf16.mxu0 0
        %585 = vmatpush1.bf16.xpose.msra.mxu0 0
        %586 = vmatprep.subr.bf16.mxu0 0
        %587 = vmatpush1.bf16.xpose.msra.mxu0 0
        %588 = vmatprep.subr.bf16.mxu0 0
        %589 = vmatpush1.bf16.xpose.msra.mxu0 0
        %590 = vmatprep.subr.bf16.mxu0 0
        %591 = vmatpush1.bf16.xpose.msra.mxu0 0
        %592 = vmatprep.subr.bf16.mxu0 0
        %593 = vmatpush1.bf16.xpose.msra.mxu0 0
        %594 = vmatprep.subr.bf16.mxu0 0
        %595 = vmatpush1.bf16.xpose.msra.mxu0 0
        %596 = vmatprep.subr.bf16.mxu0 0
        %597 = vmatpush1.bf16.xpose.msra.mxu0 0
        %598 = vmatprep.subr.bf16.mxu0 0
        %599 = vmatpush1.bf16.xpose.msra.mxu0 0
        %600 = vmatprep.subr.bf16.mxu0 0
        %601 = vmatpush1.bf16.xpose.msra.mxu0 0
        %602 = vmatprep.subr.bf16.mxu0 0
        %603 = vmatpush1.bf16.xpose.msra.mxu0 0
        %604 = vmatprep.subr.bf16.mxu0 0
        %605 = vmatpush1.bf16.xpose.msra.mxu0 0
        %606 = vmatprep.mubr.bf16.mxu0 0
        %607 = vmatmul.mubr.bf16.gmra.mrb[0].mxu0 %v569
        %v608 = vpop.f32.mrb[0].mxu0
        %v609 = vadd.f32 0.0, %v608
        %v610 = vpop.f32.mrb[0].mxu0
        %v611 = vpop.f32.mrb[0].mxu0
        %v612 = vpop.f32.mrb[0].mxu0
        %613 = vdwg.mxu0
        %v615 = vunpack.c.l.s4 1983009808
        %v616 = vunpack.c.0.s8 %v615
        %v617 = vlaneseq
        %v618 = vshrl.u32 %v617, 7
        %v619 = vsub.s32 %v616, %v618
        %v620 = vrot.slane %v483, %v619
        %621 = vrot.lane.b32.xlu0 %v620, 96
        %v622 = vpop.permute.xlu0 %621
        %v624 = vsel %vm512, %v483, 0
        %v627 = vsel %vm512, %v622, 0
        %629 = vmatprep.subr.bf16.mxu0 0
        %630 = vmatpush1.bf16.xpose.msra.mxu0 %v627
        %631 = vmatprep.subr.bf16.mxu0 0
        %632 = vmatpush1.bf16.xpose.msra.mxu0 0
        %633 = vmatprep.subr.bf16.mxu0 0
        %634 = vmatpush1.bf16.xpose.msra.mxu0 0
        %635 = vmatprep.subr.bf16.mxu0 0
        %636 = vmatpush1.bf16.xpose.msra.mxu0 0
        %637 = vmatprep.subr.bf16.mxu0 0
        %638 = vmatpush1.bf16.xpose.msra.mxu0 0
        %639 = vmatprep.subr.bf16.mxu0 0
        %640 = vmatpush1.bf16.xpose.msra.mxu0 0
        %641 = vmatprep.subr.bf16.mxu0 0
        %642 = vmatpush1.bf16.xpose.msra.mxu0 0
        %643 = vmatprep.subr.bf16.mxu0 0
        %644 = vmatpush1.bf16.xpose.msra.mxu0 0
        %645 = vmatprep.subr.bf16.mxu0 0
        %646 = vmatpush1.bf16.xpose.msra.mxu0 0
        %647 = vmatprep.subr.bf16.mxu0 0
        %648 = vmatpush1.bf16.xpose.msra.mxu0 0
        %649 = vmatprep.subr.bf16.mxu0 0
        %650 = vmatpush1.bf16.xpose.msra.mxu0 0
        %651 = vmatprep.subr.bf16.mxu0 0
        %652 = vmatpush1.bf16.xpose.msra.mxu0 0
        %653 = vmatprep.subr.bf16.mxu0 0
        %654 = vmatpush1.bf16.xpose.msra.mxu0 0
        %655 = vmatprep.subr.bf16.mxu0 0
        %656 = vmatpush1.bf16.xpose.msra.mxu0 0
        %657 = vmatprep.subr.bf16.mxu0 0
        %658 = vmatpush1.bf16.xpose.msra.mxu0 0
        %659 = vmatprep.subr.bf16.mxu0 0
        %660 = vmatpush1.bf16.xpose.msra.mxu0 0
        %661 = vmatprep.mubr.bf16.mxu0 0
        %662 = vmatmul.mubr.bf16.gmra.mrb[0].mxu0 %v624
        %v663 = vpop.f32.mrb[0].mxu0
        %v664 = vadd.f32 0.0, %v663
        %v665 = vpop.f32.mrb[0].mxu0
        %v666 = vpop.f32.mrb[0].mxu0
        %v667 = vpop.f32.mrb[0].mxu0
        %668 = vdwg.mxu0
        %v670 = vunpack.c.l.s4 1983009808
        %v671 = vunpack.c.0.s8 %v670
        %v672 = vlaneseq
        %v673 = vshrl.u32 %v672, 7
        %v674 = vsub.s32 %v671, %v673
        %v675 = vrot.slane %v485, %v674
        %676 = vrot.lane.b32.xlu0 %v675, 96
        %v677 = vpop.permute.xlu0 %676
        %v679 = vsel %vm512, %v485, 0
        %v682 = vsel %vm512, %v677, 0
        %684 = vmatprep.subr.bf16.mxu0 0
        %685 = vmatpush1.bf16.xpose.msra.mxu0 %v682
        %686 = vmatprep.subr.bf16.mxu0 0
        %687 = vmatpush1.bf16.xpose.msra.mxu0 0
        %688 = vmatprep.subr.bf16.mxu0 0
        %689 = vmatpush1.bf16.xpose.msra.mxu0 0
        %690 = vmatprep.subr.bf16.mxu0 0
        %691 = vmatpush1.bf16.xpose.msra.mxu0 0
        %692 = vmatprep.subr.bf16.mxu0 0
        %693 = vmatpush1.bf16.xpose.msra.mxu0 0
        %694 = vmatprep.subr.bf16.mxu0 0
        %695 = vmatpush1.bf16.xpose.msra.mxu0 0
        %696 = vmatprep.subr.bf16.mxu0 0
        %697 = vmatpush1.bf16.xpose.msra.mxu0 0
        %698 = vmatprep.subr.bf16.mxu0 0
        %699 = vmatpush1.bf16.xpose.msra.mxu0 0
        %700 = vmatprep.subr.bf16.mxu0 0
        %701 = vmatpush1.bf16.xpose.msra.mxu0 0
        %702 = vmatprep.subr.bf16.mxu0 0
        %703 = vmatpush1.bf16.xpose.msra.mxu0 0
        %704 = vmatprep.subr.bf16.mxu0 0
        %705 = vmatpush1.bf16.xpose.msra.mxu0 0
        %706 = vmatprep.subr.bf16.mxu0 0
        %707 = vmatpush1.bf16.xpose.msra.mxu0 0
        %708 = vmatprep.subr.bf16.mxu0 0
        %709 = vmatpush1.bf16.xpose.msra.mxu0 0
        %710 = vmatprep.subr.bf16.mxu0 0
        %711 = vmatpush1.bf16.xpose.msra.mxu0 0
        %712 = vmatprep.subr.bf16.mxu0 0
        %713 = vmatpush1.bf16.xpose.msra.mxu0 0
        %714 = vmatprep.subr.bf16.mxu0 0
        %715 = vmatpush1.bf16.xpose.msra.mxu0 0
        %716 = vmatprep.mubr.bf16.mxu0 0
        %717 = vmatmul.mubr.bf16.gmra.mrb[0].mxu0 %v679
        %v718 = vpop.f32.mrb[0].mxu0
        %v719 = vadd.f32 0.0, %v718
        %v720 = vpop.f32.mrb[0].mxu0
        %v721 = vpop.f32.mrb[0].mxu0
        %v722 = vpop.f32.mrb[0].mxu0
        %723 = vdwg.mxu0
        %v725 = vunpack.c.l.s4 1983009808
        %v726 = vunpack.c.0.s8 %v725
        %v727 = vlaneseq
        %v728 = vshrl.u32 %v727, 7
        %v729 = vsub.s32 %v726, %v728
        %v730 = vrot.slane %v493, %v729
        %731 = vrot.lane.b32.xlu0 %v730, 96
        %v732 = vpop.permute.xlu0 %731
        %v734 = vsel %vm512, %v493, 0
        %v737 = vsel %vm512, %v732, 0
        %739 = vmatprep.subr.bf16.mxu0 0
        %740 = vmatpush1.bf16.xpose.msra.mxu0 %v737
        %741 = vmatprep.subr.bf16.mxu0 0
        %742 = vmatpush1.bf16.xpose.msra.mxu0 0
        %743 = vmatprep.subr.bf16.mxu0 0
        %744 = vmatpush1.bf16.xpose.msra.mxu0 0
        %745 = vmatprep.subr.bf16.mxu0 0
        %746 = vmatpush1.bf16.xpose.msra.mxu0 0
        %747 = vmatprep.subr.bf16.mxu0 0
        %748 = vmatpush1.bf16.xpose.msra.mxu0 0
        %749 = vmatprep.subr.bf16.mxu0 0
        %750 = vmatpush1.bf16.xpose.msra.mxu0 0
        %751 = vmatprep.subr.bf16.mxu0 0
        %752 = vmatpush1.bf16.xpose.msra.mxu0 0
        %753 = vmatprep.subr.bf16.mxu0 0
        %754 = vmatpush1.bf16.xpose.msra.mxu0 0
        %755 = vmatprep.subr.bf16.mxu0 0
        %756 = vmatpush1.bf16.xpose.msra.mxu0 0
        %757 = vmatprep.subr.bf16.mxu0 0
        %758 = vmatpush1.bf16.xpose.msra.mxu0 0
        %759 = vmatprep.subr.bf16.mxu0 0
        %760 = vmatpush1.bf16.xpose.msra.mxu0 0
        %761 = vmatprep.subr.bf16.mxu0 0
        %762 = vmatpush1.bf16.xpose.msra.mxu0 0
        %763 = vmatprep.subr.bf16.mxu0 0
        %764 = vmatpush1.bf16.xpose.msra.mxu0 0
        %765 = vmatprep.subr.bf16.mxu0 0
        %766 = vmatpush1.bf16.xpose.msra.mxu0 0
        %767 = vmatprep.subr.bf16.mxu0 0
        %768 = vmatpush1.bf16.xpose.msra.mxu0 0
        %769 = vmatprep.subr.bf16.mxu0 0
        %770 = vmatpush1.bf16.xpose.msra.mxu0 0
        %771 = vmatprep.mubr.bf16.mxu0 0
        %772 = vmatmul.mubr.bf16.gmra.mrb[0].mxu0 %v734
        %v773 = vpop.f32.mrb[0].mxu0
        %v774 = vadd.f32 0.0, %v773
        %v775 = vpop.f32.mrb[0].mxu0
        %v776 = vpop.f32.mrb[0].mxu0
        %v777 = vpop.f32.mrb[0].mxu0
        %778 = vdwg.mxu0
        %v780 = vunpack.c.l.s4 1983009808
        %v781 = vunpack.c.0.s8 %v780
        %v782 = vlaneseq
        %v783 = vshrl.u32 %v782, 7
        %v784 = vsub.s32 %v781, %v783
        %v785 = vrot.slane %v501, %v784
        %786 = vrot.lane.b32.xlu0 %v785, 96
        %v787 = vpop.permute.xlu0 %786
        %v789 = vsel %vm512, %v501, 0
        %v792 = vsel %vm512, %v787, 0
        %794 = vmatprep.subr.bf16.mxu0 0
        %795 = vmatpush1.bf16.xpose.msra.mxu0 %v792
        %796 = vmatprep.subr.bf16.mxu0 0
        %797 = vmatpush1.bf16.xpose.msra.mxu0 0
        %798 = vmatprep.subr.bf16.mxu0 0
        %799 = vmatpush1.bf16.xpose.msra.mxu0 0
        %800 = vmatprep.subr.bf16.mxu0 0
        %801 = vmatpush1.bf16.xpose.msra.mxu0 0
        %802 = vmatprep.subr.bf16.mxu0 0
        %803 = vmatpush1.bf16.xpose.msra.mxu0 0
        %804 = vmatprep.subr.bf16.mxu0 0
        %805 = vmatpush1.bf16.xpose.msra.mxu0 0
        %806 = vmatprep.subr.bf16.mxu0 0
        %807 = vmatpush1.bf16.xpose.msra.mxu0 0
        %808 = vmatprep.subr.bf16.mxu0 0
        %809 = vmatpush1.bf16.xpose.msra.mxu0 0
        %810 = vmatprep.subr.bf16.mxu0 0
        %811 = vmatpush1.bf16.xpose.msra.mxu0 0
        %812 = vmatprep.subr.bf16.mxu0 0
        %813 = vmatpush1.bf16.xpose.msra.mxu0 0
        %814 = vmatprep.subr.bf16.mxu0 0
        %815 = vmatpush1.bf16.xpose.msra.mxu0 0
        %816 = vmatprep.subr.bf16.mxu0 0
        %817 = vmatpush1.bf16.xpose.msra.mxu0 0
        %818 = vmatprep.subr.bf16.mxu0 0
        %819 = vmatpush1.bf16.xpose.msra.mxu0 0
        %820 = vmatprep.subr.bf16.mxu0 0
        %821 = vmatpush1.bf16.xpose.msra.mxu0 0
        %822 = vmatprep.subr.bf16.mxu0 0
        %823 = vmatpush1.bf16.xpose.msra.mxu0 0
        %824 = vmatprep.subr.bf16.mxu0 0
        %825 = vmatpush1.bf16.xpose.msra.mxu0 0
        %826 = vmatprep.mubr.bf16.mxu0 0
        %827 = vmatmul.mubr.bf16.gmra.mrb[0].mxu0 %v789
        %v828 = vpop.f32.mrb[0].mxu0
        %v829 = vadd.f32 0.0, %v828
        %v830 = vpop.f32.mrb[0].mxu0
        %v831 = vpop.f32.mrb[0].mxu0
        %v832 = vpop.f32.mrb[0].mxu0
        %833 = vdwg.mxu0
        %v835 = vunpack.c.l.s4 1983009808
        %v836 = vunpack.c.0.s8 %v835
        %v837 = vlaneseq
        %v838 = vshrl.u32 %v837, 7
        %v839 = vsub.s32 %v836, %v838
        %v840 = vrot.slane %v500, %v839
        %841 = vrot.lane.b32.xlu0 %v840, 96
        %v842 = vpop.permute.xlu0 %841
        %v844 = vsel %vm512, %v500, 0
        %v847 = vsel %vm512, %v842, 0
        %849 = vmatprep.subr.bf16.mxu0 0
        %850 = vmatpush1.bf16.xpose.msra.mxu0 %v847
        %851 = vmatprep.subr.bf16.mxu0 0
        %852 = vmatpush1.bf16.xpose.msra.mxu0 0
        %853 = vmatprep.subr.bf16.mxu0 0
        %854 = vmatpush1.bf16.xpose.msra.mxu0 0
        %855 = vmatprep.subr.bf16.mxu0 0
        %856 = vmatpush1.bf16.xpose.msra.mxu0 0
        %857 = vmatprep.subr.bf16.mxu0 0
        %858 = vmatpush1.bf16.xpose.msra.mxu0 0
        %859 = vmatprep.subr.bf16.mxu0 0
        %860 = vmatpush1.bf16.xpose.msra.mxu0 0
        %861 = vmatprep.subr.bf16.mxu0 0
        %862 = vmatpush1.bf16.xpose.msra.mxu0 0
        %863 = vmatprep.subr.bf16.mxu0 0
        %864 = vmatpush1.bf16.xpose.msra.mxu0 0
        %865 = vmatprep.subr.bf16.mxu0 0
        %866 = vmatpush1.bf16.xpose.msra.mxu0 0
        %867 = vmatprep.subr.bf16.mxu0 0
        %868 = vmatpush1.bf16.xpose.msra.mxu0 0
        %869 = vmatprep.subr.bf16.mxu0 0
        %870 = vmatpush1.bf16.xpose.msra.mxu0 0
        %871 = vmatprep.subr.bf16.mxu0 0
        %872 = vmatpush1.bf16.xpose.msra.mxu0 0
        %873 = vmatprep.subr.bf16.mxu0 0
        %874 = vmatpush1.bf16.xpose.msra.mxu0 0
        %875 = vmatprep.subr.bf16.mxu0 0
        %876 = vmatpush1.bf16.xpose.msra.mxu0 0
        %877 = vmatprep.subr.bf16.mxu0 0
        %878 = vmatpush1.bf16.xpose.msra.mxu0 0
        %879 = vmatprep.subr.bf16.mxu0 0
        %880 = vmatpush1.bf16.xpose.msra.mxu0 0
        %881 = vmatprep.mubr.bf16.mxu0 0
        %882 = vmatmul.mubr.bf16.gmra.mrb[0].mxu0 %v844
        %v883 = vpop.f32.mrb[0].mxu0
        %v884 = vadd.f32 0.0, %v883
        %v885 = vpop.f32.mrb[0].mxu0
        %v886 = vpop.f32.mrb[0].mxu0
        %v887 = vpop.f32.mrb[0].mxu0
        %888 = vdwg.mxu0
        %v890 = vunpack.c.l.s4 1983009808
        %v891 = vunpack.c.0.s8 %v890
        %v892 = vlaneseq
        %v893 = vshrl.u32 %v892, 7
        %v894 = vsub.s32 %v891, %v893
        %v895 = vrot.slane %v502, %v894
        %896 = vrot.lane.b32.xlu0 %v895, 96
        %v897 = vpop.permute.xlu0 %896
        %v899 = vsel %vm512, %v502, 0
        %v902 = vsel %vm512, %v897, 0
        %904 = vmatprep.subr.bf16.mxu0 0
        %905 = vmatpush1.bf16.xpose.msra.mxu0 %v902
        %906 = vmatprep.subr.bf16.mxu0 0
        %907 = vmatpush1.bf16.xpose.msra.mxu0 0
        %908 = vmatprep.subr.bf16.mxu0 0
        %909 = vmatpush1.bf16.xpose.msra.mxu0 0
        %910 = vmatprep.subr.bf16.mxu0 0
        %911 = vmatpush1.bf16.xpose.msra.mxu0 0
        %912 = vmatprep.subr.bf16.mxu0 0
        %913 = vmatpush1.bf16.xpose.msra.mxu0 0
        %914 = vmatprep.subr.bf16.mxu0 0
        %915 = vmatpush1.bf16.xpose.msra.mxu0 0
        %916 = vmatprep.subr.bf16.mxu0 0
        %917 = vmatpush1.bf16.xpose.msra.mxu0 0
        %918 = vmatprep.subr.bf16.mxu0 0
        %919 = vmatpush1.bf16.xpose.msra.mxu0 0
        %920 = vmatprep.subr.bf16.mxu0 0
        %921 = vmatpush1.bf16.xpose.msra.mxu0 0
        %922 = vmatprep.subr.bf16.mxu0 0
        %923 = vmatpush1.bf16.xpose.msra.mxu0 0
        %924 = vmatprep.subr.bf16.mxu0 0
        %925 = vmatpush1.bf16.xpose.msra.mxu0 0
        %926 = vmatprep.subr.bf16.mxu0 0
        %927 = vmatpush1.bf16.xpose.msra.mxu0 0
        %928 = vmatprep.subr.bf16.mxu0 0
        %929 = vmatpush1.bf16.xpose.msra.mxu0 0
        %930 = vmatprep.subr.bf16.mxu0 0
        %931 = vmatpush1.bf16.xpose.msra.mxu0 0
        %932 = vmatprep.subr.bf16.mxu0 0
        %933 = vmatpush1.bf16.xpose.msra.mxu0 0
        %934 = vmatprep.subr.bf16.mxu0 0
        %935 = vmatpush1.bf16.xpose.msra.mxu0 0
        %936 = vmatprep.mubr.bf16.mxu0 0
        %937 = vmatmul.mubr.bf16.gmra.mrb[0].mxu0 %v899
        %v938 = vpop.f32.mrb[0].mxu0
        %v939 = vadd.f32 0.0, %v938
        %v940 = vpop.f32.mrb[0].mxu0
        %v941 = vpop.f32.mrb[0].mxu0
        %v942 = vpop.f32.mrb[0].mxu0
        %943 = vdwg.mxu0
        %vm944 = vcmask 27648
        %v945 = vsel %vm944, %v554, -inf
        %946 = vmax.xlane.f32.xlu0 %v945
        %v947 = vpop.xlane.xlu0 %946
        %v948 = vsel %vm944, %v609, -inf
        %949 = vmax.xlane.f32.xlu0 %v948
        %v950 = vpop.xlane.xlu0 %949
        %v951 = vsel %vm944, %v664, -inf
        %952 = vmax.xlane.f32.xlu0 %v951
        %v953 = vpop.xlane.xlu0 %952
        %v954 = vsel %vm944, %v719, -inf
        %955 = vmax.xlane.f32.xlu0 %v954
        %v956 = vpop.xlane.xlu0 %955
        %v957 = vsel %vm944, %v774, -inf
        %958 = vmax.xlane.f32.xlu0 %v957
        %v959 = vpop.xlane.xlu0 %958
        %v960 = vsel %vm944, %v829, -inf
        %961 = vmax.xlane.f32.xlu0 %v960
        %v962 = vpop.xlane.xlu0 %961
        %v963 = vsel %vm944, %v884, -inf
        %964 = vmax.xlane.f32.xlu0 %v963
        %v965 = vpop.xlane.xlu0 %964
        %v966 = vsel %vm944, %v939, -inf
        %967 = vmax.xlane.f32.xlu0 %v966
        %v968 = vpop.xlane.xlu0 %967
        %v969 = vsub.f32 %v554, %v947
        %v970 = vsub.f32 %v609, %v950
        %v971 = vsub.f32 %v664, %v953
        %v972 = vsub.f32 %v719, %v956
        %v973 = vsub.f32 %v774, %v959
        %v974 = vsub.f32 %v829, %v962
        %v975 = vsub.f32 %v884, %v965
        %v976 = vsub.f32 %v939, %v968
        %v977 = vmul.f32 %v969, 1.442695
        %v978 = vpow.pop %v977
        %v979 = vmul.f32 %v970, 1.442695
        %v980 = vpow.pop %v979
        %v981 = vmul.f32 %v971, 1.442695
        %v982 = vpow.pop %v981
        %v983 = vmul.f32 %v972, 1.442695
        %v984 = vpow.pop %v983
        %v985 = vmul.f32 %v973, 1.442695
        %v986 = vpow.pop %v985
        %v987 = vmul.f32 %v974, 1.442695
        %v988 = vpow.pop %v987
        %v989 = vmul.f32 %v975, 1.442695
        %v990 = vpow.pop %v989
        %v991 = vmul.f32 %v976, 1.442695
        %v992 = vpow.pop %v991
        %v993 = vsel %vm944, %v978, 0.0
        %994 = vadd.xlane.f32.xlu0 %v993
        %v995 = vpop.xlane.xlu0 %994
        %v996 = vsel %vm944, %v980, 0.0
        %997 = vadd.xlane.f32.xlu0 %v996
        %v998 = vpop.xlane.xlu0 %997
        %v999 = vsel %vm944, %v982, 0.0
        %1000 = vadd.xlane.f32.xlu0 %v999
        %v1001 = vpop.xlane.xlu0 %1000
        %v1002 = vsel %vm944, %v984, 0.0
        %1003 = vadd.xlane.f32.xlu0 %v1002
        %v1004 = vpop.xlane.xlu0 %1003
        %v1005 = vsel %vm944, %v986, 0.0
        %1006 = vadd.xlane.f32.xlu0 %v1005
        %v1007 = vpop.xlane.xlu0 %1006
        %v1008 = vsel %vm944, %v988, 0.0
        %1009 = vadd.xlane.f32.xlu0 %v1008
        %v1010 = vpop.xlane.xlu0 %1009
        %v1011 = vsel %vm944, %v990, 0.0
        %1012 = vadd.xlane.f32.xlu0 %v1011
        %v1013 = vpop.xlane.xlu0 %1012
        %v1014 = vsel %vm944, %v992, 0.0
        %1015 = vadd.xlane.f32.xlu0 %v1014
        %v1016 = vpop.xlane.xlu0 %1015
        %v1017 = vrcp.pop %v995
        %v1018 = vrcp.pop %v998
        %v1019 = vrcp.pop %v1001
        %v1020 = vrcp.pop %v1004
        %v1021 = vrcp.pop %v1007
        %v1022 = vrcp.pop %v1010
        %v1023 = vrcp.pop %v1013
        %v1024 = vrcp.pop %v1016
        %v1025 = vmul.f32 %v978, %v1017
        %v1026 = vmul.f32 %v980, %v1018
        %v1027 = vmul.f32 %v982, %v1019
        %v1028 = vmul.f32 %v984, %v1020
        %v1029 = vmul.f32 %v986, %v1021
        %v1030 = vmul.f32 %v988, %v1022
        %v1031 = vmul.f32 %v990, %v1023
        %v1032 = vmul.f32 %v992, %v1024
        %v1033 = vpack.c.bf16 %v1025, %v1025
        %v1034 = vpack.c.bf16 %v1026, %v1026
        %v1035 = vpack.c.bf16 %v1027, %v1027
        %v1036 = vpack.c.bf16 %v1028, %v1028
        %v1037 = vpack.c.bf16 %v1029, %v1029
        %v1038 = vpack.c.bf16 %v1030, %v1030
        %v1039 = vpack.c.bf16 %v1031, %v1031
        %v1040 = vpack.c.bf16 %v1032, %v1032
        %1041 = vrot.lane.b32.xlu0 %v509, 64
        %v1042 = vpop.permute.xlu0 %1041
        %vm1043 = vcmask 31744
        %v1045 = vsel %vm1043, %v1033, 0
        %vm1047 = vcmask 1041408
        %v1049 = vsel %vm1047, %v1042, 0
        %1051 = vmatprep.subr.bf16.mxu0 0
        %1052 = vmatpush1.bf16.msra.mxu0 %v1049
        %1053 = vmatprep.subr.bf16.mxu0 0
        %1054 = vmatpush1.bf16.msra.mxu0 0
        %1055 = vmatprep.subr.bf16.mxu0 0
        %1056 = vmatpush1.bf16.msra.mxu0 0
        %1057 = vmatprep.subr.bf16.mxu0 0
        %1058 = vmatpush1.bf16.msra.mxu0 0
        %1059 = vmatprep.subr.bf16.mxu0 0
        %1060 = vmatpush1.bf16.msra.mxu0 0
        %1061 = vmatprep.subr.bf16.mxu0 0
        %1062 = vmatpush1.bf16.msra.mxu0 0
        %1063 = vmatprep.subr.bf16.mxu0 0
        %1064 = vmatpush1.bf16.msra.mxu0 0
        %1065 = vmatprep.subr.bf16.mxu0 0
        %1066 = vmatpush1.bf16.msra.mxu0 0
        %1067 = vmatprep.subr.bf16.mxu0 0
        %1068 = vmatpush1.bf16.msra.mxu0 0
        %1069 = vmatprep.subr.bf16.mxu0 0
        %1070 = vmatpush1.bf16.msra.mxu0 0
        %1071 = vmatprep.subr.bf16.mxu0 0
        %1072 = vmatpush1.bf16.msra.mxu0 0
        %1073 = vmatprep.subr.bf16.mxu0 0
        %1074 = vmatpush1.bf16.msra.mxu0 0
        %1075 = vmatprep.subr.bf16.mxu0 0
        %1076 = vmatpush1.bf16.msra.mxu0 0
        %1077 = vmatprep.subr.bf16.mxu0 0
        %1078 = vmatpush1.bf16.msra.mxu0 0
        %1079 = vmatprep.subr.bf16.mxu0 0
        %1080 = vmatpush1.bf16.msra.mxu0 0
        %1081 = vmatprep.subr.bf16.mxu0 0
        %1082 = vmatpush1.bf16.msra.mxu0 0
        %1083 = vmatprep.mubr.bf16.mxu0 0
        %1084 = vmatmul.mubr.bf16.gmra.mrb[0].mxu0 %v1045
        %v1085 = vpop.f32.mrb[0].mxu0
        %v1086 = vadd.f32 0.0, %v1085
        %v1087 = vpop.f32.mrb[0].mxu0
        %v1088 = vpop.f32.mrb[0].mxu0
        %v1089 = vpop.f32.mrb[0].mxu0
        %1090 = vdwg.mxu0
        %1091 = vrot.lane.b32.xlu0 %v565, 64
        %v1092 = vpop.permute.xlu0 %1091
        %v1094 = vsel %vm1043, %v1034, 0
        %v1097 = vsel %vm1047, %v1092, 0
        %1099 = vmatprep.subr.bf16.mxu0 0
        %1100 = vmatpush1.bf16.msra.mxu0 %v1097
        %1101 = vmatprep.subr.bf16.mxu0 0
        %1102 = vmatpush1.bf16.msra.mxu0 0
        %1103 = vmatprep.subr.bf16.mxu0 0
        %1104 = vmatpush1.bf16.msra.mxu0 0
        %1105 = vmatprep.subr.bf16.mxu0 0
        %1106 = vmatpush1.bf16.msra.mxu0 0
        %1107 = vmatprep.subr.bf16.mxu0 0
        %1108 = vmatpush1.bf16.msra.mxu0 0
        %1109 = vmatprep.subr.bf16.mxu0 0
        %1110 = vmatpush1.bf16.msra.mxu0 0
        %1111 = vmatprep.subr.bf16.mxu0 0
        %1112 = vmatpush1.bf16.msra.mxu0 0
        %1113 = vmatprep.subr.bf16.mxu0 0
        %1114 = vmatpush1.bf16.msra.mxu0 0
        %1115 = vmatprep.subr.bf16.mxu0 0
        %1116 = vmatpush1.bf16.msra.mxu0 0
        %1117 = vmatprep.subr.bf16.mxu0 0
        %1118 = vmatpush1.bf16.msra.mxu0 0
        %1119 = vmatprep.subr.bf16.mxu0 0
        %1120 = vmatpush1.bf16.msra.mxu0 0
        %1121 = vmatprep.subr.bf16.mxu0 0
        %1122 = vmatpush1.bf16.msra.mxu0 0
        %1123 = vmatprep.subr.bf16.mxu0 0
        %1124 = vmatpush1.bf16.msra.mxu0 0
        %1125 = vmatprep.subr.bf16.mxu0 0
        %1126 = vmatpush1.bf16.msra.mxu0 0
        %1127 = vmatprep.subr.bf16.mxu0 0
        %1128 = vmatpush1.bf16.msra.mxu0 0
        %1129 = vmatprep.subr.bf16.mxu0 0
        %1130 = vmatpush1.bf16.msra.mxu0 0
        %1131 = vmatprep.mubr.bf16.mxu0 0
        %1132 = vmatmul.mubr.bf16.gmra.mrb[0].mxu0 %v1094
        %v1133 = vpop.f32.mrb[0].mxu0
        %v1134 = vadd.f32 0.0, %v1133
        %v1135 = vpop.f32.mrb[0].mxu0
        %v1136 = vpop.f32.mrb[0].mxu0
        %v1137 = vpop.f32.mrb[0].mxu0
        %1138 = vdwg.mxu0
        %1139 = vrot.lane.b32.xlu0 %v620, 64
        %v1140 = vpop.permute.xlu0 %1139
        %v1142 = vsel %vm1043, %v1035, 0
        %v1145 = vsel %vm1047, %v1140, 0
        %1147 = vmatprep.subr.bf16.mxu0 0
        %1148 = vmatpush1.bf16.msra.mxu0 %v1145
        %1149 = vmatprep.subr.bf16.mxu0 0
        %1150 = vmatpush1.bf16.msra.mxu0 0
        %1151 = vmatprep.subr.bf16.mxu0 0
        %1152 = vmatpush1.bf16.msra.mxu0 0
        %1153 = vmatprep.subr.bf16.mxu0 0
        %1154 = vmatpush1.bf16.msra.mxu0 0
        %1155 = vmatprep.subr.bf16.mxu0 0
        %1156 = vmatpush1.bf16.msra.mxu0 0
        %1157 = vmatprep.subr.bf16.mxu0 0
        %1158 = vmatpush1.bf16.msra.mxu0 0
        %1159 = vmatprep.subr.bf16.mxu0 0
        %1160 = vmatpush1.bf16.msra.mxu0 0
        %1161 = vmatprep.subr.bf16.mxu0 0
        %1162 = vmatpush1.bf16.msra.mxu0 0
        %1163 = vmatprep.subr.bf16.mxu0 0
        %1164 = vmatpush1.bf16.msra.mxu0 0
        %1165 = vmatprep.subr.bf16.mxu0 0
        %1166 = vmatpush1.bf16.msra.mxu0 0
        %1167 = vmatprep.subr.bf16.mxu0 0
        %1168 = vmatpush1.bf16.msra.mxu0 0
        %1169 = vmatprep.subr.bf16.mxu0 0
        %1170 = vmatpush1.bf16.msra.mxu0 0
        %1171 = vmatprep.subr.bf16.mxu0 0
        %1172 = vmatpush1.bf16.msra.mxu0 0
        %1173 = vmatprep.subr.bf16.mxu0 0
        %1174 = vmatpush1.bf16.msra.mxu0 0
        %1175 = vmatprep.subr.bf16.mxu0 0
        %1176 = vmatpush1.bf16.msra.mxu0 0
        %1177 = vmatprep.subr.bf16.mxu0 0
        %1178 = vmatpush1.bf16.msra.mxu0 0
        %1179 = vmatprep.mubr.bf16.mxu0 0
        %1180 = vmatmul.mubr.bf16.gmra.mrb[0].mxu0 %v1142
        %v1181 = vpop.f32.mrb[0].mxu0
        %v1182 = vadd.f32 0.0, %v1181
        %v1183 = vpop.f32.mrb[0].mxu0
        %v1184 = vpop.f32.mrb[0].mxu0
        %v1185 = vpop.f32.mrb[0].mxu0
        %1186 = vdwg.mxu0
        %1187 = vrot.lane.b32.xlu0 %v675, 64
        %v1188 = vpop.permute.xlu0 %1187
        %v1190 = vsel %vm1043, %v1036, 0
        %v1193 = vsel %vm1047, %v1188, 0
        %1195 = vmatprep.subr.bf16.mxu0 0
        %1196 = vmatpush1.bf16.msra.mxu0 %v1193
        %1197 = vmatprep.subr.bf16.mxu0 0
        %1198 = vmatpush1.bf16.msra.mxu0 0
        %1199 = vmatprep.subr.bf16.mxu0 0
        %1200 = vmatpush1.bf16.msra.mxu0 0
        %1201 = vmatprep.subr.bf16.mxu0 0
        %1202 = vmatpush1.bf16.msra.mxu0 0
        %1203 = vmatprep.subr.bf16.mxu0 0
        %1204 = vmatpush1.bf16.msra.mxu0 0
        %1205 = vmatprep.subr.bf16.mxu0 0
        %1206 = vmatpush1.bf16.msra.mxu0 0
        %1207 = vmatprep.subr.bf16.mxu0 0
        %1208 = vmatpush1.bf16.msra.mxu0 0
        %1209 = vmatprep.subr.bf16.mxu0 0
        %1210 = vmatpush1.bf16.msra.mxu0 0
        %1211 = vmatprep.subr.bf16.mxu0 0
        %1212 = vmatpush1.bf16.msra.mxu0 0
        %1213 = vmatprep.subr.bf16.mxu0 0
        %1214 = vmatpush1.bf16.msra.mxu0 0
        %1215 = vmatprep.subr.bf16.mxu0 0
        %1216 = vmatpush1.bf16.msra.mxu0 0
        %1217 = vmatprep.subr.bf16.mxu0 0
        %1218 = vmatpush1.bf16.msra.mxu0 0
        %1219 = vmatprep.subr.bf16.mxu0 0
        %1220 = vmatpush1.bf16.msra.mxu0 0
        %1221 = vmatprep.subr.bf16.mxu0 0
        %1222 = vmatpush1.bf16.msra.mxu0 0
        %1223 = vmatprep.subr.bf16.mxu0 0
        %1224 = vmatpush1.bf16.msra.mxu0 0
        %1225 = vmatprep.subr.bf16.mxu0 0
        %1226 = vmatpush1.bf16.msra.mxu0 0
        %1227 = vmatprep.mubr.bf16.mxu0 0
        %1228 = vmatmul.mubr.bf16.gmra.mrb[0].mxu0 %v1190
        %v1229 = vpop.f32.mrb[0].mxu0
        %v1230 = vadd.f32 0.0, %v1229
        %v1231 = vpop.f32.mrb[0].mxu0
        %v1232 = vpop.f32.mrb[0].mxu0
        %v1233 = vpop.f32.mrb[0].mxu0
        %1234 = vdwg.mxu0
        %1235 = vrot.lane.b32.xlu0 %v730, 64
        %v1236 = vpop.permute.xlu0 %1235
        %v1238 = vsel %vm1043, %v1037, 0
        %v1241 = vsel %vm1047, %v1236, 0
        %1243 = vmatprep.subr.bf16.mxu0 0
        %1244 = vmatpush1.bf16.msra.mxu0 %v1241
        %1245 = vmatprep.subr.bf16.mxu0 0
        %1246 = vmatpush1.bf16.msra.mxu0 0
        %1247 = vmatprep.subr.bf16.mxu0 0
        %1248 = vmatpush1.bf16.msra.mxu0 0
        %1249 = vmatprep.subr.bf16.mxu0 0
        %1250 = vmatpush1.bf16.msra.mxu0 0
        %1251 = vmatprep.subr.bf16.mxu0 0
        %1252 = vmatpush1.bf16.msra.mxu0 0
        %1253 = vmatprep.subr.bf16.mxu0 0
        %1254 = vmatpush1.bf16.msra.mxu0 0
        %1255 = vmatprep.subr.bf16.mxu0 0
        %1256 = vmatpush1.bf16.msra.mxu0 0
        %1257 = vmatprep.subr.bf16.mxu0 0
        %1258 = vmatpush1.bf16.msra.mxu0 0
        %1259 = vmatprep.subr.bf16.mxu0 0
        %1260 = vmatpush1.bf16.msra.mxu0 0
        %1261 = vmatprep.subr.bf16.mxu0 0
        %1262 = vmatpush1.bf16.msra.mxu0 0
        %1263 = vmatprep.subr.bf16.mxu0 0
        %1264 = vmatpush1.bf16.msra.mxu0 0
        %1265 = vmatprep.subr.bf16.mxu0 0
        %1266 = vmatpush1.bf16.msra.mxu0 0
        %1267 = vmatprep.subr.bf16.mxu0 0
        %1268 = vmatpush1.bf16.msra.mxu0 0
        %1269 = vmatprep.subr.bf16.mxu0 0
        %1270 = vmatpush1.bf16.msra.mxu0 0
        %1271 = vmatprep.subr.bf16.mxu0 0
        %1272 = vmatpush1.bf16.msra.mxu0 0
        %1273 = vmatprep.subr.bf16.mxu0 0
        %1274 = vmatpush1.bf16.msra.mxu0 0
        %1275 = vmatprep.mubr.bf16.mxu0 0
        %1276 = vmatmul.mubr.bf16.gmra.mrb[0].mxu0 %v1238
        %v1277 = vpop.f32.mrb[0].mxu0
        %v1278 = vadd.f32 0.0, %v1277
        %v1279 = vpop.f32.mrb[0].mxu0
        %v1280 = vpop.f32.mrb[0].mxu0
        %v1281 = vpop.f32.mrb[0].mxu0
        %1282 = vdwg.mxu0
        %1283 = vrot.lane.b32.xlu0 %v785, 64
        %v1284 = vpop.permute.xlu0 %1283
        %v1286 = vsel %vm1043, %v1038, 0
        %v1289 = vsel %vm1047, %v1284, 0
        %1291 = vmatprep.subr.bf16.mxu0 0
        %1292 = vmatpush1.bf16.msra.mxu0 %v1289
        %1293 = vmatprep.subr.bf16.mxu0 0
        %1294 = vmatpush1.bf16.msra.mxu0 0
        %1295 = vmatprep.subr.bf16.mxu0 0
        %1296 = vmatpush1.bf16.msra.mxu0 0
        %1297 = vmatprep.subr.bf16.mxu0 0
        %1298 = vmatpush1.bf16.msra.mxu0 0
        %1299 = vmatprep.subr.bf16.mxu0 0
        %1300 = vmatpush1.bf16.msra.mxu0 0
        %1301 = vmatprep.subr.bf16.mxu0 0
        %1302 = vmatpush1.bf16.msra.mxu0 0
        %1303 = vmatprep.subr.bf16.mxu0 0
        %1304 = vmatpush1.bf16.msra.mxu0 0
        %1305 = vmatprep.subr.bf16.mxu0 0
        %1306 = vmatpush1.bf16.msra.mxu0 0
        %1307 = vmatprep.subr.bf16.mxu0 0
        %1308 = vmatpush1.bf16.msra.mxu0 0
        %1309 = vmatprep.subr.bf16.mxu0 0
        %1310 = vmatpush1.bf16.msra.mxu0 0
        %1311 = vmatprep.subr.bf16.mxu0 0
        %1312 = vmatpush1.bf16.msra.mxu0 0
        %1313 = vmatprep.subr.bf16.mxu0 0
        %1314 = vmatpush1.bf16.msra.mxu0 0
        %1315 = vmatprep.subr.bf16.mxu0 0
        %1316 = vmatpush1.bf16.msra.mxu0 0
        %1317 = vmatprep.subr.bf16.mxu0 0
        %1318 = vmatpush1.bf16.msra.mxu0 0
        %1319 = vmatprep.subr.bf16.mxu0 0
        %1320 = vmatpush1.bf16.msra.mxu0 0
        %1321 = vmatprep.subr.bf16.mxu0 0
        %1322 = vmatpush1.bf16.msra.mxu0 0
        %1323 = vmatprep.mubr.bf16.mxu0 0
        %1324 = vmatmul.mubr.bf16.gmra.mrb[0].mxu0 %v1286
        %v1325 = vpop.f32.mrb[0].mxu0
        %v1326 = vadd.f32 0.0, %v1325
        %v1327 = vpop.f32.mrb[0].mxu0
        %v1328 = vpop.f32.mrb[0].mxu0
        %v1329 = vpop.f32.mrb[0].mxu0
        %1330 = vdwg.mxu0
        %1331 = vrot.lane.b32.xlu0 %v840, 64
        %v1332 = vpop.permute.xlu0 %1331
        %v1334 = vsel %vm1043, %v1039, 0
        %v1337 = vsel %vm1047, %v1332, 0
        %1339 = vmatprep.subr.bf16.mxu0 0
        %1340 = vmatpush1.bf16.msra.mxu0 %v1337
        %1341 = vmatprep.subr.bf16.mxu0 0
        %1342 = vmatpush1.bf16.msra.mxu0 0
        %1343 = vmatprep.subr.bf16.mxu0 0
        %1344 = vmatpush1.bf16.msra.mxu0 0
        %1345 = vmatprep.subr.bf16.mxu0 0
        %1346 = vmatpush1.bf16.msra.mxu0 0
        %1347 = vmatprep.subr.bf16.mxu0 0
        %1348 = vmatpush1.bf16.msra.mxu0 0
        %1349 = vmatprep.subr.bf16.mxu0 0
        %1350 = vmatpush1.bf16.msra.mxu0 0
        %1351 = vmatprep.subr.bf16.mxu0 0
        %1352 = vmatpush1.bf16.msra.mxu0 0
        %1353 = vmatprep.subr.bf16.mxu0 0
        %1354 = vmatpush1.bf16.msra.mxu0 0
        %1355 = vmatprep.subr.bf16.mxu0 0
        %1356 = vmatpush1.bf16.msra.mxu0 0
        %1357 = vmatprep.subr.bf16.mxu0 0
        %1358 = vmatpush1.bf16.msra.mxu0 0
        %1359 = vmatprep.subr.bf16.mxu0 0
        %1360 = vmatpush1.bf16.msra.mxu0 0
        %1361 = vmatprep.subr.bf16.mxu0 0
        %1362 = vmatpush1.bf16.msra.mxu0 0
        %1363 = vmatprep.subr.bf16.mxu0 0
        %1364 = vmatpush1.bf16.msra.mxu0 0
        %1365 = vmatprep.subr.bf16.mxu0 0
        %1366 = vmatpush1.bf16.msra.mxu0 0
        %1367 = vmatprep.subr.bf16.mxu0 0
        %1368 = vmatpush1.bf16.msra.mxu0 0
        %1369 = vmatprep.subr.bf16.mxu0 0
        %1370 = vmatpush1.bf16.msra.mxu0 0
        %1371 = vmatprep.mubr.bf16.mxu0 0
        %1372 = vmatmul.mubr.bf16.gmra.mrb[0].mxu0 %v1334
        %v1373 = vpop.f32.mrb[0].mxu0
        %v1374 = vadd.f32 0.0, %v1373
        %v1375 = vpop.f32.mrb[0].mxu0
        %v1376 = vpop.f32.mrb[0].mxu0
        %v1377 = vpop.f32.mrb[0].mxu0
        %1378 = vdwg.mxu0
        %1379 = vrot.lane.b32.xlu0 %v895, 64
        %v1380 = vpop.permute.xlu0 %1379
        %v1382 = vsel %vm1043, %v1040, 0
        %v1385 = vsel %vm1047, %v1380, 0
        %1387 = vmatprep.subr.bf16.mxu0 0
        %1388 = vmatpush1.bf16.msra.mxu0 %v1385
        %1389 = vmatprep.subr.bf16.mxu0 0
        %1390 = vmatpush1.bf16.msra.mxu0 0
        %1391 = vmatprep.subr.bf16.mxu0 0
        %1392 = vmatpush1.bf16.msra.mxu0 0
        %1393 = vmatprep.subr.bf16.mxu0 0
        %1394 = vmatpush1.bf16.msra.mxu0 0
        %1395 = vmatprep.subr.bf16.mxu0 0
        %1396 = vmatpush1.bf16.msra.mxu0 0
        %1397 = vmatprep.subr.bf16.mxu0 0
        %1398 = vmatpush1.bf16.msra.mxu0 0
        %1399 = vmatprep.subr.bf16.mxu0 0
        %1400 = vmatpush1.bf16.msra.mxu0 0
        %1401 = vmatprep.subr.bf16.mxu0 0
        %1402 = vmatpush1.bf16.msra.mxu0 0
        %1403 = vmatprep.subr.bf16.mxu0 0
        %1404 = vmatpush1.bf16.msra.mxu0 0
        %1405 = vmatprep.subr.bf16.mxu0 0
        %1406 = vmatpush1.bf16.msra.mxu0 0
        %1407 = vmatprep.subr.bf16.mxu0 0
        %1408 = vmatpush1.bf16.msra.mxu0 0
        %1409 = vmatprep.subr.bf16.mxu0 0
        %1410 = vmatpush1.bf16.msra.mxu0 0
        %1411 = vmatprep.subr.bf16.mxu0 0
        %1412 = vmatpush1.bf16.msra.mxu0 0
        %1413 = vmatprep.subr.bf16.mxu0 0
        %1414 = vmatpush1.bf16.msra.mxu0 0
        %1415 = vmatprep.subr.bf16.mxu0 0
        %1416 = vmatpush1.bf16.msra.mxu0 0
        %1417 = vmatprep.subr.bf16.mxu0 0
        %1418 = vmatpush1.bf16.msra.mxu0 0
        %1419 = vmatprep.mubr.bf16.mxu0 0
        %1420 = vmatmul.mubr.bf16.gmra.mrb[0].mxu0 %v1382
        %v1421 = vpop.f32.mrb[0].mxu0
        %v1422 = vadd.f32 0.0, %v1421
        %v1423 = vpop.f32.mrb[0].mxu0
        %v1424 = vpop.f32.mrb[0].mxu0
        %v1425 = vpop.f32.mrb[0].mxu0
        %1426 = vdwg.mxu0
        %v1427 = vpack.c.bf16 %v1086, %v1086
        %v1428 = vpack.c.bf16 %v1134, %v1134
        %v1429 = vpack.c.bf16 %v1182, %v1182
        %v1430 = vpack.c.bf16 %v1230, %v1230
        %v1431 = vpack.c.bf16 %v1278, %v1278
        %v1432 = vpack.c.bf16 %v1326, %v1326
        %v1433 = vpack.c.bf16 %v1374, %v1374
        %v1434 = vpack.c.bf16 %v1422, %v1422
        %1435 = vrot.lane.b32.xlu0 %v509, 120
        %v1436 = vpop.permute.xlu0 %1435
        %1437 = vrot.lane.b32.xlu0 %v509, 88
        %v1438 = vpop.permute.xlu0 %1437
        %v1440 = vsel %vm512, %v1436, 0
        %v1443 = vsel %vm512, %v1438, 0
        %1445 = vmatprep.subr.bf16.mxu0 0
        %1446 = vmatpush1.bf16.xpose.msra.mxu0 %v1443
        %1447 = vmatprep.subr.bf16.mxu0 0
        %1448 = vmatpush1.bf16.xpose.msra.mxu0 0
        %1449 = vmatprep.subr.bf16.mxu0 0
        %1450 = vmatpush1.bf16.xpose.msra.mxu0 0
        %1451 = vmatprep.subr.bf16.mxu0 0
        %1452 = vmatpush1.bf16.xpose.msra.mxu0 0
        %1453 = vmatprep.subr.bf16.mxu0 0
        %1454 = vmatpush1.bf16.xpose.msra.mxu0 0
        %1455 = vmatprep.subr.bf16.mxu0 0
        %1456 = vmatpush1.bf16.xpose.msra.mxu0 0
        %1457 = vmatprep.subr.bf16.mxu0 0
        %1458 = vmatpush1.bf16.xpose.msra.mxu0 0
        %1459 = vmatprep.subr.bf16.mxu0 0
        %1460 = vmatpush1.bf16.xpose.msra.mxu0 0
        %1461 = vmatprep.subr.bf16.mxu0 0
        %1462 = vmatpush1.bf16.xpose.msra.mxu0 0
        %1463 = vmatprep.subr.bf16.mxu0 0
        %1464 = vmatpush1.bf16.xpose.msra.mxu0 0
        %1465 = vmatprep.subr.bf16.mxu0 0
        %1466 = vmatpush1.bf16.xpose.msra.mxu0 0
        %1467 = vmatprep.subr.bf16.mxu0 0
        %1468 = vmatpush1.bf16.xpose.msra.mxu0 0
        %1469 = vmatprep.subr.bf16.mxu0 0
        %1470 = vmatpush1.bf16.xpose.msra.mxu0 0
        %1471 = vmatprep.subr.bf16.mxu0 0
        %1472 = vmatpush1.bf16.xpose.msra.mxu0 0
        %1473 = vmatprep.subr.bf16.mxu0 0
        %1474 = vmatpush1.bf16.xpose.msra.mxu0 0
        %1475 = vmatprep.subr.bf16.mxu0 0
        %1476 = vmatpush1.bf16.xpose.msra.mxu0 0
        %1477 = vmatprep.mubr.bf16.mxu0 0
        %1478 = vmatmul.mubr.bf16.gmra.mrb[0].mxu0 %v1440
        %v1479 = vpop.f32.mrb[0].mxu0
        %v1480 = vadd.f32 0.0, %v1479
        %v1481 = vpop.f32.mrb[0].mxu0
        %v1482 = vpop.f32.mrb[0].mxu0
        %v1483 = vpop.f32.mrb[0].mxu0
        %1484 = vdwg.mxu0
        %1485 = vrot.lane.b32.xlu0 %v565, 120
        %v1486 = vpop.permute.xlu0 %1485
        %1487 = vrot.lane.b32.xlu0 %v565, 88
        %v1488 = vpop.permute.xlu0 %1487
        %v1490 = vsel %vm512, %v1486, 0
        %v1493 = vsel %vm512, %v1488, 0
        %1495 = vmatprep.subr.bf16.mxu0 0
        %1496 = vmatpush1.bf16.xpose.msra.mxu0 %v1493
        %1497 = vmatprep.subr.bf16.mxu0 0
        %1498 = vmatpush1.bf16.xpose.msra.mxu0 0
        %1499 = vmatprep.subr.bf16.mxu0 0
        %1500 = vmatpush1.bf16.xpose.msra.mxu0 0
        %1501 = vmatprep.subr.bf16.mxu0 0
        %1502 = vmatpush1.bf16.xpose.msra.mxu0 0
        %1503 = vmatprep.subr.bf16.mxu0 0
        %1504 = vmatpush1.bf16.xpose.msra.mxu0 0
        %1505 = vmatprep.subr.bf16.mxu0 0
        %1506 = vmatpush1.bf16.xpose.msra.mxu0 0
        %1507 = vmatprep.subr.bf16.mxu0 0
        %1508 = vmatpush1.bf16.xpose.msra.mxu0 0
        %1509 = vmatprep.subr.bf16.mxu0 0
        %1510 = vmatpush1.bf16.xpose.msra.mxu0 0
        %1511 = vmatprep.subr.bf16.mxu0 0
        %1512 = vmatpush1.bf16.xpose.msra.mxu0 0
        %1513 = vmatprep.subr.bf16.mxu0 0
        %1514 = vmatpush1.bf16.xpose.msra.mxu0 0
        %1515 = vmatprep.subr.bf16.mxu0 0
        %1516 = vmatpush1.bf16.xpose.msra.mxu0 0
        %1517 = vmatprep.subr.bf16.mxu0 0
        %1518 = vmatpush1.bf16.xpose.msra.mxu0 0
        %1519 = vmatprep.subr.bf16.mxu0 0
        %1520 = vmatpush1.bf16.xpose.msra.mxu0 0
        %1521 = vmatprep.subr.bf16.mxu0 0
        %1522 = vmatpush1.bf16.xpose.msra.mxu0 0
        %1523 = vmatprep.subr.bf16.mxu0 0
        %1524 = vmatpush1.bf16.xpose.msra.mxu0 0
        %1525 = vmatprep.subr.bf16.mxu0 0
        %1526 = vmatpush1.bf16.xpose.msra.mxu0 0
        %1527 = vmatprep.mubr.bf16.mxu0 0
        %1528 = vmatmul.mubr.bf16.gmra.mrb[0].mxu0 %v1490
        %v1529 = vpop.f32.mrb[0].mxu0
        %v1530 = vadd.f32 0.0, %v1529
        %v1531 = vpop.f32.mrb[0].mxu0
        %v1532 = vpop.f32.mrb[0].mxu0
        %v1533 = vpop.f32.mrb[0].mxu0
        %1534 = vdwg.mxu0
        %1535 = vrot.lane.b32.xlu0 %v620, 120
        %v1536 = vpop.permute.xlu0 %1535
        %1537 = vrot.lane.b32.xlu0 %v620, 88
        %v1538 = vpop.permute.xlu0 %1537
        %v1540 = vsel %vm512, %v1536, 0
        %v1543 = vsel %vm512, %v1538, 0
        %1545 = vmatprep.subr.bf16.mxu0 0
        %1546 = vmatpush1.bf16.xpose.msra.mxu0 %v1543
        %1547 = vmatprep.subr.bf16.mxu0 0
        %1548 = vmatpush1.bf16.xpose.msra.mxu0 0
        %1549 = vmatprep.subr.bf16.mxu0 0
        %1550 = vmatpush1.bf16.xpose.msra.mxu0 0
        %1551 = vmatprep.subr.bf16.mxu0 0
        %1552 = vmatpush1.bf16.xpose.msra.mxu0 0
        %1553 = vmatprep.subr.bf16.mxu0 0
        %1554 = vmatpush1.bf16.xpose.msra.mxu0 0
        %1555 = vmatprep.subr.bf16.mxu0 0
        %1556 = vmatpush1.bf16.xpose.msra.mxu0 0
        %1557 = vmatprep.subr.bf16.mxu0 0
        %1558 = vmatpush1.bf16.xpose.msra.mxu0 0
        %1559 = vmatprep.subr.bf16.mxu0 0
        %1560 = vmatpush1.bf16.xpose.msra.mxu0 0
        %1561 = vmatprep.subr.bf16.mxu0 0
        %1562 = vmatpush1.bf16.xpose.msra.mxu0 0
        %1563 = vmatprep.subr.bf16.mxu0 0
        %1564 = vmatpush1.bf16.xpose.msra.mxu0 0
        %1565 = vmatprep.subr.bf16.mxu0 0
        %1566 = vmatpush1.bf16.xpose.msra.mxu0 0
        %1567 = vmatprep.subr.bf16.mxu0 0
        %1568 = vmatpush1.bf16.xpose.msra.mxu0 0
        %1569 = vmatprep.subr.bf16.mxu0 0
        %1570 = vmatpush1.bf16.xpose.msra.mxu0 0
        %1571 = vmatprep.subr.bf16.mxu0 0
        %1572 = vmatpush1.bf16.xpose.msra.mxu0 0
        %1573 = vmatprep.subr.bf16.mxu0 0
        %1574 = vmatpush1.bf16.xpose.msra.mxu0 0
        %1575 = vmatprep.subr.bf16.mxu0 0
        %1576 = vmatpush1.bf16.xpose.msra.mxu0 0
        %1577 = vmatprep.mubr.bf16.mxu0 0
        %1578 = vmatmul.mubr.bf16.gmra.mrb[0].mxu0 %v1540
        %v1579 = vpop.f32.mrb[0].mxu0
        %v1580 = vadd.f32 0.0, %v1579
        %v1581 = vpop.f32.mrb[0].mxu0
        %v1582 = vpop.f32.mrb[0].mxu0
        %v1583 = vpop.f32.mrb[0].mxu0
        %1584 = vdwg.mxu0
        %1585 = vrot.lane.b32.xlu0 %v675, 120
        %v1586 = vpop.permute.xlu0 %1585
        %1587 = vrot.lane.b32.xlu0 %v675, 88
        %v1588 = vpop.permute.xlu0 %1587
        %v1590 = vsel %vm512, %v1586, 0
        %v1593 = vsel %vm512, %v1588, 0
        %1595 = vmatprep.subr.bf16.mxu0 0
        %1596 = vmatpush1.bf16.xpose.msra.mxu0 %v1593
        %1597 = vmatprep.subr.bf16.mxu0 0
        %1598 = vmatpush1.bf16.xpose.msra.mxu0 0
        %1599 = vmatprep.subr.bf16.mxu0 0
        %1600 = vmatpush1.bf16.xpose.msra.mxu0 0
        %1601 = vmatprep.subr.bf16.mxu0 0
        %1602 = vmatpush1.bf16.xpose.msra.mxu0 0
        %1603 = vmatprep.subr.bf16.mxu0 0
        %1604 = vmatpush1.bf16.xpose.msra.mxu0 0
        %1605 = vmatprep.subr.bf16.mxu0 0
        %1606 = vmatpush1.bf16.xpose.msra.mxu0 0
        %1607 = vmatprep.subr.bf16.mxu0 0
        %1608 = vmatpush1.bf16.xpose.msra.mxu0 0
        %1609 = vmatprep.subr.bf16.mxu0 0
        %1610 = vmatpush1.bf16.xpose.msra.mxu0 0
        %1611 = vmatprep.subr.bf16.mxu0 0
        %1612 = vmatpush1.bf16.xpose.msra.mxu0 0
        %1613 = vmatprep.subr.bf16.mxu0 0
        %1614 = vmatpush1.bf16.xpose.msra.mxu0 0
        %1615 = vmatprep.subr.bf16.mxu0 0
        %1616 = vmatpush1.bf16.xpose.msra.mxu0 0
        %1617 = vmatprep.subr.bf16.mxu0 0
        %1618 = vmatpush1.bf16.xpose.msra.mxu0 0
        %1619 = vmatprep.subr.bf16.mxu0 0
        %1620 = vmatpush1.bf16.xpose.msra.mxu0 0
        %1621 = vmatprep.subr.bf16.mxu0 0
        %1622 = vmatpush1.bf16.xpose.msra.mxu0 0
        %1623 = vmatprep.subr.bf16.mxu0 0
        %1624 = vmatpush1.bf16.xpose.msra.mxu0 0
        %1625 = vmatprep.subr.bf16.mxu0 0
        %1626 = vmatpush1.bf16.xpose.msra.mxu0 0
        %1627 = vmatprep.mubr.bf16.mxu0 0
        %1628 = vmatmul.mubr.bf16.gmra.mrb[0].mxu0 %v1590
        %v1629 = vpop.f32.mrb[0].mxu0
        %v1630 = vadd.f32 0.0, %v1629
        %v1631 = vpop.f32.mrb[0].mxu0
        %v1632 = vpop.f32.mrb[0].mxu0
        %v1633 = vpop.f32.mrb[0].mxu0
        %1634 = vdwg.mxu0
        %1635 = vrot.lane.b32.xlu0 %v730, 120
        %v1636 = vpop.permute.xlu0 %1635
        %1637 = vrot.lane.b32.xlu0 %v730, 88
        %v1638 = vpop.permute.xlu0 %1637
        %v1640 = vsel %vm512, %v1636, 0
        %v1643 = vsel %vm512, %v1638, 0
        %1645 = vmatprep.subr.bf16.mxu0 0
        %1646 = vmatpush1.bf16.xpose.msra.mxu0 %v1643
        %1647 = vmatprep.subr.bf16.mxu0 0
        %1648 = vmatpush1.bf16.xpose.msra.mxu0 0
        %1649 = vmatprep.subr.bf16.mxu0 0
        %1650 = vmatpush1.bf16.xpose.msra.mxu0 0
        %1651 = vmatprep.subr.bf16.mxu0 0
        %1652 = vmatpush1.bf16.xpose.msra.mxu0 0
        %1653 = vmatprep.subr.bf16.mxu0 0
        %1654 = vmatpush1.bf16.xpose.msra.mxu0 0
        %1655 = vmatprep.subr.bf16.mxu0 0
        %1656 = vmatpush1.bf16.xpose.msra.mxu0 0
        %1657 = vmatprep.subr.bf16.mxu0 0
        %1658 = vmatpush1.bf16.xpose.msra.mxu0 0
        %1659 = vmatprep.subr.bf16.mxu0 0
        %1660 = vmatpush1.bf16.xpose.msra.mxu0 0
        %1661 = vmatprep.subr.bf16.mxu0 0
        %1662 = vmatpush1.bf16.xpose.msra.mxu0 0
        %1663 = vmatprep.subr.bf16.mxu0 0
        %1664 = vmatpush1.bf16.xpose.msra.mxu0 0
        %1665 = vmatprep.subr.bf16.mxu0 0
        %1666 = vmatpush1.bf16.xpose.msra.mxu0 0
        %1667 = vmatprep.subr.bf16.mxu0 0
        %1668 = vmatpush1.bf16.xpose.msra.mxu0 0
        %1669 = vmatprep.subr.bf16.mxu0 0
        %1670 = vmatpush1.bf16.xpose.msra.mxu0 0
        %1671 = vmatprep.subr.bf16.mxu0 0
        %1672 = vmatpush1.bf16.xpose.msra.mxu0 0
        %1673 = vmatprep.subr.bf16.mxu0 0
        %1674 = vmatpush1.bf16.xpose.msra.mxu0 0
        %1675 = vmatprep.subr.bf16.mxu0 0
        %1676 = vmatpush1.bf16.xpose.msra.mxu0 0
        %1677 = vmatprep.mubr.bf16.mxu0 0
        %1678 = vmatmul.mubr.bf16.gmra.mrb[0].mxu0 %v1640
        %v1679 = vpop.f32.mrb[0].mxu0
        %v1680 = vadd.f32 0.0, %v1679
        %v1681 = vpop.f32.mrb[0].mxu0
        %v1682 = vpop.f32.mrb[0].mxu0
        %v1683 = vpop.f32.mrb[0].mxu0
        %1684 = vdwg.mxu0
        %1685 = vrot.lane.b32.xlu0 %v785, 120
        %v1686 = vpop.permute.xlu0 %1685
        %1687 = vrot.lane.b32.xlu0 %v785, 88
        %v1688 = vpop.permute.xlu0 %1687
        %v1690 = vsel %vm512, %v1686, 0
        %v1693 = vsel %vm512, %v1688, 0
        %1695 = vmatprep.subr.bf16.mxu0 0
        %1696 = vmatpush1.bf16.xpose.msra.mxu0 %v1693
        %1697 = vmatprep.subr.bf16.mxu0 0
        %1698 = vmatpush1.bf16.xpose.msra.mxu0 0
        %1699 = vmatprep.subr.bf16.mxu0 0
        %1700 = vmatpush1.bf16.xpose.msra.mxu0 0
        %1701 = vmatprep.subr.bf16.mxu0 0
        %1702 = vmatpush1.bf16.xpose.msra.mxu0 0
        %1703 = vmatprep.subr.bf16.mxu0 0
        %1704 = vmatpush1.bf16.xpose.msra.mxu0 0
        %1705 = vmatprep.subr.bf16.mxu0 0
        %1706 = vmatpush1.bf16.xpose.msra.mxu0 0
        %1707 = vmatprep.subr.bf16.mxu0 0
        %1708 = vmatpush1.bf16.xpose.msra.mxu0 0
        %1709 = vmatprep.subr.bf16.mxu0 0
        %1710 = vmatpush1.bf16.xpose.msra.mxu0 0
        %1711 = vmatprep.subr.bf16.mxu0 0
        %1712 = vmatpush1.bf16.xpose.msra.mxu0 0
        %1713 = vmatprep.subr.bf16.mxu0 0
        %1714 = vmatpush1.bf16.xpose.msra.mxu0 0
        %1715 = vmatprep.subr.bf16.mxu0 0
        %1716 = vmatpush1.bf16.xpose.msra.mxu0 0
        %1717 = vmatprep.subr.bf16.mxu0 0
        %1718 = vmatpush1.bf16.xpose.msra.mxu0 0
        %1719 = vmatprep.subr.bf16.mxu0 0
        %1720 = vmatpush1.bf16.xpose.msra.mxu0 0
        %1721 = vmatprep.subr.bf16.mxu0 0
        %1722 = vmatpush1.bf16.xpose.msra.mxu0 0
        %1723 = vmatprep.subr.bf16.mxu0 0
        %1724 = vmatpush1.bf16.xpose.msra.mxu0 0
        %1725 = vmatprep.subr.bf16.mxu0 0
        %1726 = vmatpush1.bf16.xpose.msra.mxu0 0
        %1727 = vmatprep.mubr.bf16.mxu0 0
        %1728 = vmatmul.mubr.bf16.gmra.mrb[0].mxu0 %v1690
        %v1729 = vpop.f32.mrb[0].mxu0
        %v1730 = vadd.f32 0.0, %v1729
        %v1731 = vpop.f32.mrb[0].mxu0
        %v1732 = vpop.f32.mrb[0].mxu0
        %v1733 = vpop.f32.mrb[0].mxu0
        %1734 = vdwg.mxu0
        %1735 = vrot.lane.b32.xlu0 %v840, 120
        %v1736 = vpop.permute.xlu0 %1735
        %1737 = vrot.lane.b32.xlu0 %v840, 88
        %v1738 = vpop.permute.xlu0 %1737
        %v1740 = vsel %vm512, %v1736, 0
        %v1743 = vsel %vm512, %v1738, 0
        %1745 = vmatprep.subr.bf16.mxu0 0
        %1746 = vmatpush1.bf16.xpose.msra.mxu0 %v1743
        %1747 = vmatprep.subr.bf16.mxu0 0
        %1748 = vmatpush1.bf16.xpose.msra.mxu0 0
        %1749 = vmatprep.subr.bf16.mxu0 0
        %1750 = vmatpush1.bf16.xpose.msra.mxu0 0
        %1751 = vmatprep.subr.bf16.mxu0 0
        %1752 = vmatpush1.bf16.xpose.msra.mxu0 0
        %1753 = vmatprep.subr.bf16.mxu0 0
        %1754 = vmatpush1.bf16.xpose.msra.mxu0 0
        %1755 = vmatprep.subr.bf16.mxu0 0
        %1756 = vmatpush1.bf16.xpose.msra.mxu0 0
        %1757 = vmatprep.subr.bf16.mxu0 0
        %1758 = vmatpush1.bf16.xpose.msra.mxu0 0
        %1759 = vmatprep.subr.bf16.mxu0 0
        %1760 = vmatpush1.bf16.xpose.msra.mxu0 0
        %1761 = vmatprep.subr.bf16.mxu0 0
        %1762 = vmatpush1.bf16.xpose.msra.mxu0 0
        %1763 = vmatprep.subr.bf16.mxu0 0
        %1764 = vmatpush1.bf16.xpose.msra.mxu0 0
        %1765 = vmatprep.subr.bf16.mxu0 0
        %1766 = vmatpush1.bf16.xpose.msra.mxu0 0
        %1767 = vmatprep.subr.bf16.mxu0 0
        %1768 = vmatpush1.bf16.xpose.msra.mxu0 0
        %1769 = vmatprep.subr.bf16.mxu0 0
        %1770 = vmatpush1.bf16.xpose.msra.mxu0 0
        %1771 = vmatprep.subr.bf16.mxu0 0
        %1772 = vmatpush1.bf16.xpose.msra.mxu0 0
        %1773 = vmatprep.subr.bf16.mxu0 0
        %1774 = vmatpush1.bf16.xpose.msra.mxu0 0
        %1775 = vmatprep.subr.bf16.mxu0 0
        %1776 = vmatpush1.bf16.xpose.msra.mxu0 0
        %1777 = vmatprep.mubr.bf16.mxu0 0
        %1778 = vmatmul.mubr.bf16.gmra.mrb[0].mxu0 %v1740
        %v1779 = vpop.f32.mrb[0].mxu0
        %v1780 = vadd.f32 0.0, %v1779
        %v1781 = vpop.f32.mrb[0].mxu0
        %v1782 = vpop.f32.mrb[0].mxu0
        %v1783 = vpop.f32.mrb[0].mxu0
        %1784 = vdwg.mxu0
        %1785 = vrot.lane.b32.xlu0 %v895, 120
        %v1786 = vpop.permute.xlu0 %1785
        %1787 = vrot.lane.b32.xlu0 %v895, 88
        %v1788 = vpop.permute.xlu0 %1787
        %v1790 = vsel %vm512, %v1786, 0
        %v1793 = vsel %vm512, %v1788, 0
        %1795 = vmatprep.subr.bf16.mxu0 0
        %1796 = vmatpush1.bf16.xpose.msra.mxu0 %v1793
        %1797 = vmatprep.subr.bf16.mxu0 0
        %1798 = vmatpush1.bf16.xpose.msra.mxu0 0
        %1799 = vmatprep.subr.bf16.mxu0 0
        %1800 = vmatpush1.bf16.xpose.msra.mxu0 0
        %1801 = vmatprep.subr.bf16.mxu0 0
        %1802 = vmatpush1.bf16.xpose.msra.mxu0 0
        %1803 = vmatprep.subr.bf16.mxu0 0
        %1804 = vmatpush1.bf16.xpose.msra.mxu0 0
        %1805 = vmatprep.subr.bf16.mxu0 0
        %1806 = vmatpush1.bf16.xpose.msra.mxu0 0
        %1807 = vmatprep.subr.bf16.mxu0 0
        %1808 = vmatpush1.bf16.xpose.msra.mxu0 0
        %1809 = vmatprep.subr.bf16.mxu0 0
        %1810 = vmatpush1.bf16.xpose.msra.mxu0 0
        %1811 = vmatprep.subr.bf16.mxu0 0
        %1812 = vmatpush1.bf16.xpose.msra.mxu0 0
        %1813 = vmatprep.subr.bf16.mxu0 0
        %1814 = vmatpush1.bf16.xpose.msra.mxu0 0
        %1815 = vmatprep.subr.bf16.mxu0 0
        %1816 = vmatpush1.bf16.xpose.msra.mxu0 0
        %1817 = vmatprep.subr.bf16.mxu0 0
        %1818 = vmatpush1.bf16.xpose.msra.mxu0 0
        %1819 = vmatprep.subr.bf16.mxu0 0
        %1820 = vmatpush1.bf16.xpose.msra.mxu0 0
        %1821 = vmatprep.subr.bf16.mxu0 0
        %1822 = vmatpush1.bf16.xpose.msra.mxu0 0
        %1823 = vmatprep.subr.bf16.mxu0 0
        %1824 = vmatpush1.bf16.xpose.msra.mxu0 0
        %1825 = vmatprep.subr.bf16.mxu0 0
        %1826 = vmatpush1.bf16.xpose.msra.mxu0 0
        %1827 = vmatprep.mubr.bf16.mxu0 0
        %1828 = vmatmul.mubr.bf16.gmra.mrb[0].mxu0 %v1790
        %v1829 = vpop.f32.mrb[0].mxu0
        %v1830 = vadd.f32 0.0, %v1829
        %v1831 = vpop.f32.mrb[0].mxu0
        %v1832 = vpop.f32.mrb[0].mxu0
        %v1833 = vpop.f32.mrb[0].mxu0
        %1834 = vdwg.mxu0
        %v1835 = vsel %vm944, %v1480, -inf
        %1836 = vmax.xlane.f32.xlu0 %v1835
        %v1837 = vpop.xlane.xlu0 %1836
        %v1838 = vsel %vm944, %v1530, -inf
        %1839 = vmax.xlane.f32.xlu0 %v1838
        %v1840 = vpop.xlane.xlu0 %1839
        %v1841 = vsel %vm944, %v1580, -inf
        %1842 = vmax.xlane.f32.xlu0 %v1841
        %v1843 = vpop.xlane.xlu0 %1842
        %v1844 = vsel %vm944, %v1630, -inf
        %1845 = vmax.xlane.f32.xlu0 %v1844
        %v1846 = vpop.xlane.xlu0 %1845
        %v1847 = vsel %vm944, %v1680, -inf
        %1848 = vmax.xlane.f32.xlu0 %v1847
        %v1849 = vpop.xlane.xlu0 %1848
        %v1850 = vsel %vm944, %v1730, -inf
        %1851 = vmax.xlane.f32.xlu0 %v1850
        %v1852 = vpop.xlane.xlu0 %1851
        %v1853 = vsel %vm944, %v1780, -inf
        %1854 = vmax.xlane.f32.xlu0 %v1853
        %v1855 = vpop.xlane.xlu0 %1854
        %v1856 = vsel %vm944, %v1830, -inf
        %1857 = vmax.xlane.f32.xlu0 %v1856
        %v1858 = vpop.xlane.xlu0 %1857
        %v1859 = vsub.f32 %v1480, %v1837
        %v1860 = vsub.f32 %v1530, %v1840
        %v1861 = vsub.f32 %v1580, %v1843
        %v1862 = vsub.f32 %v1630, %v1846
        %v1863 = vsub.f32 %v1680, %v1849
        %v1864 = vsub.f32 %v1730, %v1852
        %v1865 = vsub.f32 %v1780, %v1855
        %v1866 = vsub.f32 %v1830, %v1858
        %v1867 = vmul.f32 %v1859, 1.442695
        %v1868 = vpow.pop %v1867
        %v1869 = vmul.f32 %v1860, 1.442695
        %v1870 = vpow.pop %v1869
        %v1871 = vmul.f32 %v1861, 1.442695
        %v1872 = vpow.pop %v1871
        %v1873 = vmul.f32 %v1862, 1.442695
        %v1874 = vpow.pop %v1873
        %v1875 = vmul.f32 %v1863, 1.442695
        %v1876 = vpow.pop %v1875
        %v1877 = vmul.f32 %v1864, 1.442695
        %v1878 = vpow.pop %v1877
        %v1879 = vmul.f32 %v1865, 1.442695
        %v1880 = vpow.pop %v1879
        %v1881 = vmul.f32 %v1866, 1.442695
        %v1882 = vpow.pop %v1881
        %v1883 = vsel %vm944, %v1868, 0.0
        %1884 = vadd.xlane.f32.xlu0 %v1883
        %v1885 = vpop.xlane.xlu0 %1884
        %v1886 = vsel %vm944, %v1870, 0.0
        %1887 = vadd.xlane.f32.xlu0 %v1886
        %v1888 = vpop.xlane.xlu0 %1887
        %v1889 = vsel %vm944, %v1872, 0.0
        %1890 = vadd.xlane.f32.xlu0 %v1889
        %v1891 = vpop.xlane.xlu0 %1890
        %v1892 = vsel %vm944, %v1874, 0.0
        %1893 = vadd.xlane.f32.xlu0 %v1892
        %v1894 = vpop.xlane.xlu0 %1893
        %v1895 = vsel %vm944, %v1876, 0.0
        %1896 = vadd.xlane.f32.xlu0 %v1895
        %v1897 = vpop.xlane.xlu0 %1896
        %v1898 = vsel %vm944, %v1878, 0.0
        %1899 = vadd.xlane.f32.xlu0 %v1898
        %v1900 = vpop.xlane.xlu0 %1899
        %v1901 = vsel %vm944, %v1880, 0.0
        %1902 = vadd.xlane.f32.xlu0 %v1901
        %v1903 = vpop.xlane.xlu0 %1902
        %v1904 = vsel %vm944, %v1882, 0.0
        %1905 = vadd.xlane.f32.xlu0 %v1904
        %v1906 = vpop.xlane.xlu0 %1905
        %v1907 = vrcp.pop %v1885
        %v1908 = vrcp.pop %v1888
        %v1909 = vrcp.pop %v1891
        %v1910 = vrcp.pop %v1894
        %v1911 = vrcp.pop %v1897
        %v1912 = vrcp.pop %v1900
        %v1913 = vrcp.pop %v1903
        %v1914 = vrcp.pop %v1906
        %v1915 = vmul.f32 %v1868, %v1907
        %v1916 = vmul.f32 %v1870, %v1908
        %v1917 = vmul.f32 %v1872, %v1909
        %v1918 = vmul.f32 %v1874, %v1910
        %v1919 = vmul.f32 %v1876, %v1911
        %v1920 = vmul.f32 %v1878, %v1912
        %v1921 = vmul.f32 %v1880, %v1913
        %v1922 = vmul.f32 %v1882, %v1914
        %v1923 = vpack.c.bf16 %v1915, %v1915
        %v1924 = vpack.c.bf16 %v1916, %v1916
        %v1925 = vpack.c.bf16 %v1917, %v1917
        %v1926 = vpack.c.bf16 %v1918, %v1918
        %v1927 = vpack.c.bf16 %v1919, %v1919
        %v1928 = vpack.c.bf16 %v1920, %v1920
        %v1929 = vpack.c.bf16 %v1921, %v1921
        %v1930 = vpack.c.bf16 %v1922, %v1922
        %1931 = vrot.lane.b32.xlu0 %v509, 56
        %v1932 = vpop.permute.xlu0 %1931
        %v1934 = vsel %vm1043, %v1923, 0
        %v1937 = vsel %vm1047, %v1932, 0
        %1939 = vmatprep.subr.bf16.mxu0 0
        %1940 = vmatpush1.bf16.msra.mxu0 %v1937
        %1941 = vmatprep.subr.bf16.mxu0 0
        %1942 = vmatpush1.bf16.msra.mxu0 0
        %1943 = vmatprep.subr.bf16.mxu0 0
        %1944 = vmatpush1.bf16.msra.mxu0 0
        %1945 = vmatprep.subr.bf16.mxu0 0
        %1946 = vmatpush1.bf16.msra.mxu0 0
        %1947 = vmatprep.subr.bf16.mxu0 0
        %1948 = vmatpush1.bf16.msra.mxu0 0
        %1949 = vmatprep.subr.bf16.mxu0 0
        %1950 = vmatpush1.bf16.msra.mxu0 0
        %1951 = vmatprep.subr.bf16.mxu0 0
        %1952 = vmatpush1.bf16.msra.mxu0 0
        %1953 = vmatprep.subr.bf16.mxu0 0
        %1954 = vmatpush1.bf16.msra.mxu0 0
        %1955 = vmatprep.subr.bf16.mxu0 0
        %1956 = vmatpush1.bf16.msra.mxu0 0
        %1957 = vmatprep.subr.bf16.mxu0 0
        %1958 = vmatpush1.bf16.msra.mxu0 0
        %1959 = vmatprep.subr.bf16.mxu0 0
        %1960 = vmatpush1.bf16.msra.mxu0 0
        %1961 = vmatprep.subr.bf16.mxu0 0
        %1962 = vmatpush1.bf16.msra.mxu0 0
        %1963 = vmatprep.subr.bf16.mxu0 0
        %1964 = vmatpush1.bf16.msra.mxu0 0
        %1965 = vmatprep.subr.bf16.mxu0 0
        %1966 = vmatpush1.bf16.msra.mxu0 0
        %1967 = vmatprep.subr.bf16.mxu0 0
        %1968 = vmatpush1.bf16.msra.mxu0 0
        %1969 = vmatprep.subr.bf16.mxu0 0
        %1970 = vmatpush1.bf16.msra.mxu0 0
        %1971 = vmatprep.mubr.bf16.mxu0 0
        %1972 = vmatmul.mubr.bf16.gmra.mrb[0].mxu0 %v1934
        %v1973 = vpop.f32.mrb[0].mxu0
        %v1974 = vadd.f32 0.0, %v1973
        %v1975 = vpop.f32.mrb[0].mxu0
        %v1976 = vpop.f32.mrb[0].mxu0
        %v1977 = vpop.f32.mrb[0].mxu0
        %1978 = vdwg.mxu0
        %1979 = vrot.lane.b32.xlu0 %v565, 56
        %v1980 = vpop.permute.xlu0 %1979
        %v1982 = vsel %vm1043, %v1924, 0
        %v1985 = vsel %vm1047, %v1980, 0
        %1987 = vmatprep.subr.bf16.mxu0 0
        %1988 = vmatpush1.bf16.msra.mxu0 %v1985
        %1989 = vmatprep.subr.bf16.mxu0 0
        %1990 = vmatpush1.bf16.msra.mxu0 0
        %1991 = vmatprep.subr.bf16.mxu0 0
        %1992 = vmatpush1.bf16.msra.mxu0 0
        %1993 = vmatprep.subr.bf16.mxu0 0
        %1994 = vmatpush1.bf16.msra.mxu0 0
        %1995 = vmatprep.subr.bf16.mxu0 0
        %1996 = vmatpush1.bf16.msra.mxu0 0
        %1997 = vmatprep.subr.bf16.mxu0 0
        %1998 = vmatpush1.bf16.msra.mxu0 0
        %1999 = vmatprep.subr.bf16.mxu0 0
        %2000 = vmatpush1.bf16.msra.mxu0 0
        %2001 = vmatprep.subr.bf16.mxu0 0
        %2002 = vmatpush1.bf16.msra.mxu0 0
        %2003 = vmatprep.subr.bf16.mxu0 0
        %2004 = vmatpush1.bf16.msra.mxu0 0
        %2005 = vmatprep.subr.bf16.mxu0 0
        %2006 = vmatpush1.bf16.msra.mxu0 0
        %2007 = vmatprep.subr.bf16.mxu0 0
        %2008 = vmatpush1.bf16.msra.mxu0 0
        %2009 = vmatprep.subr.bf16.mxu0 0
        %2010 = vmatpush1.bf16.msra.mxu0 0
        %2011 = vmatprep.subr.bf16.mxu0 0
        %2012 = vmatpush1.bf16.msra.mxu0 0
        %2013 = vmatprep.subr.bf16.mxu0 0
        %2014 = vmatpush1.bf16.msra.mxu0 0
        %2015 = vmatprep.subr.bf16.mxu0 0
        %2016 = vmatpush1.bf16.msra.mxu0 0
        %2017 = vmatprep.subr.bf16.mxu0 0
        %2018 = vmatpush1.bf16.msra.mxu0 0
        %2019 = vmatprep.mubr.bf16.mxu0 0
        %2020 = vmatmul.mubr.bf16.gmra.mrb[0].mxu0 %v1982
        %v2021 = vpop.f32.mrb[0].mxu0
        %v2022 = vadd.f32 0.0, %v2021
        %v2023 = vpop.f32.mrb[0].mxu0
        %v2024 = vpop.f32.mrb[0].mxu0
        %v2025 = vpop.f32.mrb[0].mxu0
        %2026 = vdwg.mxu0
        %2027 = vrot.lane.b32.xlu0 %v620, 56
        %v2028 = vpop.permute.xlu0 %2027
        %v2030 = vsel %vm1043, %v1925, 0
        %v2033 = vsel %vm1047, %v2028, 0
        %2035 = vmatprep.subr.bf16.mxu0 0
        %2036 = vmatpush1.bf16.msra.mxu0 %v2033
        %2037 = vmatprep.subr.bf16.mxu0 0
        %2038 = vmatpush1.bf16.msra.mxu0 0
        %2039 = vmatprep.subr.bf16.mxu0 0
        %2040 = vmatpush1.bf16.msra.mxu0 0
        %2041 = vmatprep.subr.bf16.mxu0 0
        %2042 = vmatpush1.bf16.msra.mxu0 0
        %2043 = vmatprep.subr.bf16.mxu0 0
        %2044 = vmatpush1.bf16.msra.mxu0 0
        %2045 = vmatprep.subr.bf16.mxu0 0
        %2046 = vmatpush1.bf16.msra.mxu0 0
        %2047 = vmatprep.subr.bf16.mxu0 0
        %2048 = vmatpush1.bf16.msra.mxu0 0
        %2049 = vmatprep.subr.bf16.mxu0 0
        %2050 = vmatpush1.bf16.msra.mxu0 0
        %2051 = vmatprep.subr.bf16.mxu0 0
        %2052 = vmatpush1.bf16.msra.mxu0 0
        %2053 = vmatprep.subr.bf16.mxu0 0
        %2054 = vmatpush1.bf16.msra.mxu0 0
        %2055 = vmatprep.subr.bf16.mxu0 0
        %2056 = vmatpush1.bf16.msra.mxu0 0
        %2057 = vmatprep.subr.bf16.mxu0 0
        %2058 = vmatpush1.bf16.msra.mxu0 0
        %2059 = vmatprep.subr.bf16.mxu0 0
        %2060 = vmatpush1.bf16.msra.mxu0 0
        %2061 = vmatprep.subr.bf16.mxu0 0
        %2062 = vmatpush1.bf16.msra.mxu0 0
        %2063 = vmatprep.subr.bf16.mxu0 0
        %2064 = vmatpush1.bf16.msra.mxu0 0
        %2065 = vmatprep.subr.bf16.mxu0 0
        %2066 = vmatpush1.bf16.msra.mxu0 0
        %2067 = vmatprep.mubr.bf16.mxu0 0
        %2068 = vmatmul.mubr.bf16.gmra.mrb[0].mxu0 %v2030
        %v2069 = vpop.f32.mrb[0].mxu0
        %v2070 = vadd.f32 0.0, %v2069
        %v2071 = vpop.f32.mrb[0].mxu0
        %v2072 = vpop.f32.mrb[0].mxu0
        %v2073 = vpop.f32.mrb[0].mxu0
        %2074 = vdwg.mxu0
        %2075 = vrot.lane.b32.xlu0 %v675, 56
        %v2076 = vpop.permute.xlu0 %2075
        %v2078 = vsel %vm1043, %v1926, 0
        %v2081 = vsel %vm1047, %v2076, 0
        %2083 = vmatprep.subr.bf16.mxu0 0
        %2084 = vmatpush1.bf16.msra.mxu0 %v2081
        %2085 = vmatprep.subr.bf16.mxu0 0
        %2086 = vmatpush1.bf16.msra.mxu0 0
        %2087 = vmatprep.subr.bf16.mxu0 0
        %2088 = vmatpush1.bf16.msra.mxu0 0
        %2089 = vmatprep.subr.bf16.mxu0 0
        %2090 = vmatpush1.bf16.msra.mxu0 0
        %2091 = vmatprep.subr.bf16.mxu0 0
        %2092 = vmatpush1.bf16.msra.mxu0 0
        %2093 = vmatprep.subr.bf16.mxu0 0
        %2094 = vmatpush1.bf16.msra.mxu0 0
        %2095 = vmatprep.subr.bf16.mxu0 0
        %2096 = vmatpush1.bf16.msra.mxu0 0
        %2097 = vmatprep.subr.bf16.mxu0 0
        %2098 = vmatpush1.bf16.msra.mxu0 0
        %2099 = vmatprep.subr.bf16.mxu0 0
        %2100 = vmatpush1.bf16.msra.mxu0 0
        %2101 = vmatprep.subr.bf16.mxu0 0
        %2102 = vmatpush1.bf16.msra.mxu0 0
        %2103 = vmatprep.subr.bf16.mxu0 0
        %2104 = vmatpush1.bf16.msra.mxu0 0
        %2105 = vmatprep.subr.bf16.mxu0 0
        %2106 = vmatpush1.bf16.msra.mxu0 0
        %2107 = vmatprep.subr.bf16.mxu0 0
        %2108 = vmatpush1.bf16.msra.mxu0 0
        %2109 = vmatprep.subr.bf16.mxu0 0
        %2110 = vmatpush1.bf16.msra.mxu0 0
        %2111 = vmatprep.subr.bf16.mxu0 0
        %2112 = vmatpush1.bf16.msra.mxu0 0
        %2113 = vmatprep.subr.bf16.mxu0 0
        %2114 = vmatpush1.bf16.msra.mxu0 0
        %2115 = vmatprep.mubr.bf16.mxu0 0
        %2116 = vmatmul.mubr.bf16.gmra.mrb[0].mxu0 %v2078
        %v2117 = vpop.f32.mrb[0].mxu0
        %v2118 = vadd.f32 0.0, %v2117
        %v2119 = vpop.f32.mrb[0].mxu0
        %v2120 = vpop.f32.mrb[0].mxu0
        %v2121 = vpop.f32.mrb[0].mxu0
        %2122 = vdwg.mxu0
        %2123 = vrot.lane.b32.xlu0 %v730, 56
        %v2124 = vpop.permute.xlu0 %2123
        %v2126 = vsel %vm1043, %v1927, 0
        %v2129 = vsel %vm1047, %v2124, 0
        %2131 = vmatprep.subr.bf16.mxu0 0
        %2132 = vmatpush1.bf16.msra.mxu0 %v2129
        %2133 = vmatprep.subr.bf16.mxu0 0
        %2134 = vmatpush1.bf16.msra.mxu0 0
        %2135 = vmatprep.subr.bf16.mxu0 0
        %2136 = vmatpush1.bf16.msra.mxu0 0
        %2137 = vmatprep.subr.bf16.mxu0 0
        %2138 = vmatpush1.bf16.msra.mxu0 0
        %2139 = vmatprep.subr.bf16.mxu0 0
        %2140 = vmatpush1.bf16.msra.mxu0 0
        %2141 = vmatprep.subr.bf16.mxu0 0
        %2142 = vmatpush1.bf16.msra.mxu0 0
        %2143 = vmatprep.subr.bf16.mxu0 0
        %2144 = vmatpush1.bf16.msra.mxu0 0
        %2145 = vmatprep.subr.bf16.mxu0 0
        %2146 = vmatpush1.bf16.msra.mxu0 0
        %2147 = vmatprep.subr.bf16.mxu0 0
        %2148 = vmatpush1.bf16.msra.mxu0 0
        %2149 = vmatprep.subr.bf16.mxu0 0
        %2150 = vmatpush1.bf16.msra.mxu0 0
        %2151 = vmatprep.subr.bf16.mxu0 0
        %2152 = vmatpush1.bf16.msra.mxu0 0
        %2153 = vmatprep.subr.bf16.mxu0 0
        %2154 = vmatpush1.bf16.msra.mxu0 0
        %2155 = vmatprep.subr.bf16.mxu0 0
        %2156 = vmatpush1.bf16.msra.mxu0 0
        %2157 = vmatprep.subr.bf16.mxu0 0
        %2158 = vmatpush1.bf16.msra.mxu0 0
        %2159 = vmatprep.subr.bf16.mxu0 0
        %2160 = vmatpush1.bf16.msra.mxu0 0
        %2161 = vmatprep.subr.bf16.mxu0 0
        %2162 = vmatpush1.bf16.msra.mxu0 0
        %2163 = vmatprep.mubr.bf16.mxu0 0
        %2164 = vmatmul.mubr.bf16.gmra.mrb[0].mxu0 %v2126
        %v2165 = vpop.f32.mrb[0].mxu0
        %v2166 = vadd.f32 0.0, %v2165
        %v2167 = vpop.f32.mrb[0].mxu0
        %v2168 = vpop.f32.mrb[0].mxu0
        %v2169 = vpop.f32.mrb[0].mxu0
        %2170 = vdwg.mxu0
        %2171 = vrot.lane.b32.xlu0 %v785, 56
        %v2172 = vpop.permute.xlu0 %2171
        %v2174 = vsel %vm1043, %v1928, 0
        %v2177 = vsel %vm1047, %v2172, 0
        %2179 = vmatprep.subr.bf16.mxu0 0
        %2180 = vmatpush1.bf16.msra.mxu0 %v2177
        %2181 = vmatprep.subr.bf16.mxu0 0
        %2182 = vmatpush1.bf16.msra.mxu0 0
        %2183 = vmatprep.subr.bf16.mxu0 0
        %2184 = vmatpush1.bf16.msra.mxu0 0
        %2185 = vmatprep.subr.bf16.mxu0 0
        %2186 = vmatpush1.bf16.msra.mxu0 0
        %2187 = vmatprep.subr.bf16.mxu0 0
        %2188 = vmatpush1.bf16.msra.mxu0 0
        %2189 = vmatprep.subr.bf16.mxu0 0
        %2190 = vmatpush1.bf16.msra.mxu0 0
        %2191 = vmatprep.subr.bf16.mxu0 0
        %2192 = vmatpush1.bf16.msra.mxu0 0
        %2193 = vmatprep.subr.bf16.mxu0 0
        %2194 = vmatpush1.bf16.msra.mxu0 0
        %2195 = vmatprep.subr.bf16.mxu0 0
        %2196 = vmatpush1.bf16.msra.mxu0 0
        %2197 = vmatprep.subr.bf16.mxu0 0
        %2198 = vmatpush1.bf16.msra.mxu0 0
        %2199 = vmatprep.subr.bf16.mxu0 0
        %2200 = vmatpush1.bf16.msra.mxu0 0
        %2201 = vmatprep.subr.bf16.mxu0 0
        %2202 = vmatpush1.bf16.msra.mxu0 0
        %2203 = vmatprep.subr.bf16.mxu0 0
        %2204 = vmatpush1.bf16.msra.mxu0 0
        %2205 = vmatprep.subr.bf16.mxu0 0
        %2206 = vmatpush1.bf16.msra.mxu0 0
        %2207 = vmatprep.subr.bf16.mxu0 0
        %2208 = vmatpush1.bf16.msra.mxu0 0
        %2209 = vmatprep.subr.bf16.mxu0 0
        %2210 = vmatpush1.bf16.msra.mxu0 0
        %2211 = vmatprep.mubr.bf16.mxu0 0
        %2212 = vmatmul.mubr.bf16.gmra.mrb[0].mxu0 %v2174
        %v2213 = vpop.f32.mrb[0].mxu0
        %v2214 = vadd.f32 0.0, %v2213
        %v2215 = vpop.f32.mrb[0].mxu0
        %v2216 = vpop.f32.mrb[0].mxu0
        %v2217 = vpop.f32.mrb[0].mxu0
        %2218 = vdwg.mxu0
        %2219 = vrot.lane.b32.xlu0 %v840, 56
        %v2220 = vpop.permute.xlu0 %2219
        %v2222 = vsel %vm1043, %v1929, 0
        %v2225 = vsel %vm1047, %v2220, 0
        %2227 = vmatprep.subr.bf16.mxu0 0
        %2228 = vmatpush1.bf16.msra.mxu0 %v2225
        %2229 = vmatprep.subr.bf16.mxu0 0
        %2230 = vmatpush1.bf16.msra.mxu0 0
        %2231 = vmatprep.subr.bf16.mxu0 0
        %2232 = vmatpush1.bf16.msra.mxu0 0
        %2233 = vmatprep.subr.bf16.mxu0 0
        %2234 = vmatpush1.bf16.msra.mxu0 0
        %2235 = vmatprep.subr.bf16.mxu0 0
        %2236 = vmatpush1.bf16.msra.mxu0 0
        %2237 = vmatprep.subr.bf16.mxu0 0
        %2238 = vmatpush1.bf16.msra.mxu0 0
        %2239 = vmatprep.subr.bf16.mxu0 0
        %2240 = vmatpush1.bf16.msra.mxu0 0
        %2241 = vmatprep.subr.bf16.mxu0 0
        %2242 = vmatpush1.bf16.msra.mxu0 0
        %2243 = vmatprep.subr.bf16.mxu0 0
        %2244 = vmatpush1.bf16.msra.mxu0 0
        %2245 = vmatprep.subr.bf16.mxu0 0
        %2246 = vmatpush1.bf16.msra.mxu0 0
        %2247 = vmatprep.subr.bf16.mxu0 0
        %2248 = vmatpush1.bf16.msra.mxu0 0
        %2249 = vmatprep.subr.bf16.mxu0 0
        %2250 = vmatpush1.bf16.msra.mxu0 0
        %2251 = vmatprep.subr.bf16.mxu0 0
        %2252 = vmatpush1.bf16.msra.mxu0 0
        %2253 = vmatprep.subr.bf16.mxu0 0
        %2254 = vmatpush1.bf16.msra.mxu0 0
        %2255 = vmatprep.subr.bf16.mxu0 0
        %2256 = vmatpush1.bf16.msra.mxu0 0
        %2257 = vmatprep.subr.bf16.mxu0 0
        %2258 = vmatpush1.bf16.msra.mxu0 0
        %2259 = vmatprep.mubr.bf16.mxu0 0
        %2260 = vmatmul.mubr.bf16.gmra.mrb[0].mxu0 %v2222
        %v2261 = vpop.f32.mrb[0].mxu0
        %v2262 = vadd.f32 0.0, %v2261
        %v2263 = vpop.f32.mrb[0].mxu0
        %v2264 = vpop.f32.mrb[0].mxu0
        %v2265 = vpop.f32.mrb[0].mxu0
        %2266 = vdwg.mxu0
        %2267 = vrot.lane.b32.xlu0 %v895, 56
        %v2268 = vpop.permute.xlu0 %2267
        %v2270 = vsel %vm1043, %v1930, 0
        %v2273 = vsel %vm1047, %v2268, 0
        %2275 = vmatprep.subr.bf16.mxu0 0
        %2276 = vmatpush1.bf16.msra.mxu0 %v2273
        %2277 = vmatprep.subr.bf16.mxu0 0
        %2278 = vmatpush1.bf16.msra.mxu0 0
        %2279 = vmatprep.subr.bf16.mxu0 0
        %2280 = vmatpush1.bf16.msra.mxu0 0
        %2281 = vmatprep.subr.bf16.mxu0 0
        %2282 = vmatpush1.bf16.msra.mxu0 0
        %2283 = vmatprep.subr.bf16.mxu0 0
        %2284 = vmatpush1.bf16.msra.mxu0 0
        %2285 = vmatprep.subr.bf16.mxu0 0
        %2286 = vmatpush1.bf16.msra.mxu0 0
        %2287 = vmatprep.subr.bf16.mxu0 0
        %2288 = vmatpush1.bf16.msra.mxu0 0
        %2289 = vmatprep.subr.bf16.mxu0 0
        %2290 = vmatpush1.bf16.msra.mxu0 0
        %2291 = vmatprep.subr.bf16.mxu0 0
        %2292 = vmatpush1.bf16.msra.mxu0 0
        %2293 = vmatprep.subr.bf16.mxu0 0
        %2294 = vmatpush1.bf16.msra.mxu0 0
        %2295 = vmatprep.subr.bf16.mxu0 0
        %2296 = vmatpush1.bf16.msra.mxu0 0
        %2297 = vmatprep.subr.bf16.mxu0 0
        %2298 = vmatpush1.bf16.msra.mxu0 0
        %2299 = vmatprep.subr.bf16.mxu0 0
        %2300 = vmatpush1.bf16.msra.mxu0 0
        %2301 = vmatprep.subr.bf16.mxu0 0
        %2302 = vmatpush1.bf16.msra.mxu0 0
        %2303 = vmatprep.subr.bf16.mxu0 0
        %2304 = vmatpush1.bf16.msra.mxu0 0
        %2305 = vmatprep.subr.bf16.mxu0 0
        %2306 = vmatpush1.bf16.msra.mxu0 0
        %2307 = vmatprep.mubr.bf16.mxu0 0
        %2308 = vmatmul.mubr.bf16.gmra.mrb[0].mxu0 %v2270
        %v2309 = vpop.f32.mrb[0].mxu0
        %v2310 = vadd.f32 0.0, %v2309
        %v2311 = vpop.f32.mrb[0].mxu0
        %v2312 = vpop.f32.mrb[0].mxu0
        %v2313 = vpop.f32.mrb[0].mxu0
        %2314 = vdwg.mxu0
        %v2315 = vpack.c.bf16 %v1974, %v1974
        %v2316 = vpack.c.bf16 %v2022, %v2022
        %v2317 = vpack.c.bf16 %v2070, %v2070
        %v2318 = vpack.c.bf16 %v2118, %v2118
        %v2319 = vpack.c.bf16 %v2166, %v2166
        %v2320 = vpack.c.bf16 %v2214, %v2214
        %v2321 = vpack.c.bf16 %v2262, %v2262
        %v2322 = vpack.c.bf16 %v2310, %v2310
        %2323 = vrot.lane.b32.xlu0 %v509, 112
        %v2324 = vpop.permute.xlu0 %2323
        %2325 = vrot.lane.b32.xlu0 %v509, 80
        %v2326 = vpop.permute.xlu0 %2325
        %v2328 = vsel %vm512, %v2324, 0
        %v2331 = vsel %vm512, %v2326, 0
        %2333 = vmatprep.subr.bf16.mxu0 0
        %2334 = vmatpush1.bf16.xpose.msra.mxu0 %v2331
        %2335 = vmatprep.subr.bf16.mxu0 0
        %2336 = vmatpush1.bf16.xpose.msra.mxu0 0
        %2337 = vmatprep.subr.bf16.mxu0 0
        %2338 = vmatpush1.bf16.xpose.msra.mxu0 0
        %2339 = vmatprep.subr.bf16.mxu0 0
        %2340 = vmatpush1.bf16.xpose.msra.mxu0 0
        %2341 = vmatprep.subr.bf16.mxu0 0
        %2342 = vmatpush1.bf16.xpose.msra.mxu0 0
        %2343 = vmatprep.subr.bf16.mxu0 0
        %2344 = vmatpush1.bf16.xpose.msra.mxu0 0
        %2345 = vmatprep.subr.bf16.mxu0 0
        %2346 = vmatpush1.bf16.xpose.msra.mxu0 0
        %2347 = vmatprep.subr.bf16.mxu0 0
        %2348 = vmatpush1.bf16.xpose.msra.mxu0 0
        %2349 = vmatprep.subr.bf16.mxu0 0
        %2350 = vmatpush1.bf16.xpose.msra.mxu0 0
        %2351 = vmatprep.subr.bf16.mxu0 0
        %2352 = vmatpush1.bf16.xpose.msra.mxu0 0
        %2353 = vmatprep.subr.bf16.mxu0 0
        %2354 = vmatpush1.bf16.xpose.msra.mxu0 0
        %2355 = vmatprep.subr.bf16.mxu0 0
        %2356 = vmatpush1.bf16.xpose.msra.mxu0 0
        %2357 = vmatprep.subr.bf16.mxu0 0
        %2358 = vmatpush1.bf16.xpose.msra.mxu0 0
        %2359 = vmatprep.subr.bf16.mxu0 0
        %2360 = vmatpush1.bf16.xpose.msra.mxu0 0
        %2361 = vmatprep.subr.bf16.mxu0 0
        %2362 = vmatpush1.bf16.xpose.msra.mxu0 0
        %2363 = vmatprep.subr.bf16.mxu0 0
        %2364 = vmatpush1.bf16.xpose.msra.mxu0 0
        %2365 = vmatprep.mubr.bf16.mxu0 0
        %2366 = vmatmul.mubr.bf16.gmra.mrb[0].mxu0 %v2328
        %v2367 = vpop.f32.mrb[0].mxu0
        %v2368 = vadd.f32 0.0, %v2367
        %v2369 = vpop.f32.mrb[0].mxu0
        %v2370 = vpop.f32.mrb[0].mxu0
        %v2371 = vpop.f32.mrb[0].mxu0
        %2372 = vdwg.mxu0
        %2373 = vrot.lane.b32.xlu0 %v565, 112
        %v2374 = vpop.permute.xlu0 %2373
        %2375 = vrot.lane.b32.xlu0 %v565, 80
        %v2376 = vpop.permute.xlu0 %2375
        %v2378 = vsel %vm512, %v2374, 0
        %v2381 = vsel %vm512, %v2376, 0
        %2383 = vmatprep.subr.bf16.mxu0 0
        %2384 = vmatpush1.bf16.xpose.msra.mxu0 %v2381
        %2385 = vmatprep.subr.bf16.mxu0 0
        %2386 = vmatpush1.bf16.xpose.msra.mxu0 0
        %2387 = vmatprep.subr.bf16.mxu0 0
        %2388 = vmatpush1.bf16.xpose.msra.mxu0 0
        %2389 = vmatprep.subr.bf16.mxu0 0
        %2390 = vmatpush1.bf16.xpose.msra.mxu0 0
        %2391 = vmatprep.subr.bf16.mxu0 0
        %2392 = vmatpush1.bf16.xpose.msra.mxu0 0
        %2393 = vmatprep.subr.bf16.mxu0 0
        %2394 = vmatpush1.bf16.xpose.msra.mxu0 0
        %2395 = vmatprep.subr.bf16.mxu0 0
        %2396 = vmatpush1.bf16.xpose.msra.mxu0 0
        %2397 = vmatprep.subr.bf16.mxu0 0
        %2398 = vmatpush1.bf16.xpose.msra.mxu0 0
        %2399 = vmatprep.subr.bf16.mxu0 0
        %2400 = vmatpush1.bf16.xpose.msra.mxu0 0
        %2401 = vmatprep.subr.bf16.mxu0 0
        %2402 = vmatpush1.bf16.xpose.msra.mxu0 0
        %2403 = vmatprep.subr.bf16.mxu0 0
        %2404 = vmatpush1.bf16.xpose.msra.mxu0 0
        %2405 = vmatprep.subr.bf16.mxu0 0
        %2406 = vmatpush1.bf16.xpose.msra.mxu0 0
        %2407 = vmatprep.subr.bf16.mxu0 0
        %2408 = vmatpush1.bf16.xpose.msra.mxu0 0
        %2409 = vmatprep.subr.bf16.mxu0 0
        %2410 = vmatpush1.bf16.xpose.msra.mxu0 0
        %2411 = vmatprep.subr.bf16.mxu0 0
        %2412 = vmatpush1.bf16.xpose.msra.mxu0 0
        %2413 = vmatprep.subr.bf16.mxu0 0
        %2414 = vmatpush1.bf16.xpose.msra.mxu0 0
        %2415 = vmatprep.mubr.bf16.mxu0 0
        %2416 = vmatmul.mubr.bf16.gmra.mrb[0].mxu0 %v2378
        %v2417 = vpop.f32.mrb[0].mxu0
        %v2418 = vadd.f32 0.0, %v2417
        %v2419 = vpop.f32.mrb[0].mxu0
        %v2420 = vpop.f32.mrb[0].mxu0
        %v2421 = vpop.f32.mrb[0].mxu0
        %2422 = vdwg.mxu0
        %2423 = vrot.lane.b32.xlu0 %v620, 112
        %v2424 = vpop.permute.xlu0 %2423
        %2425 = vrot.lane.b32.xlu0 %v620, 80
        %v2426 = vpop.permute.xlu0 %2425
        %v2428 = vsel %vm512, %v2424, 0
        %v2431 = vsel %vm512, %v2426, 0
        %2433 = vmatprep.subr.bf16.mxu0 0
        %2434 = vmatpush1.bf16.xpose.msra.mxu0 %v2431
        %2435 = vmatprep.subr.bf16.mxu0 0
        %2436 = vmatpush1.bf16.xpose.msra.mxu0 0
        %2437 = vmatprep.subr.bf16.mxu0 0
        %2438 = vmatpush1.bf16.xpose.msra.mxu0 0
        %2439 = vmatprep.subr.bf16.mxu0 0
        %2440 = vmatpush1.bf16.xpose.msra.mxu0 0
        %2441 = vmatprep.subr.bf16.mxu0 0
        %2442 = vmatpush1.bf16.xpose.msra.mxu0 0
        %2443 = vmatprep.subr.bf16.mxu0 0
        %2444 = vmatpush1.bf16.xpose.msra.mxu0 0
        %2445 = vmatprep.subr.bf16.mxu0 0
        %2446 = vmatpush1.bf16.xpose.msra.mxu0 0
        %2447 = vmatprep.subr.bf16.mxu0 0
        %2448 = vmatpush1.bf16.xpose.msra.mxu0 0
        %2449 = vmatprep.subr.bf16.mxu0 0
        %2450 = vmatpush1.bf16.xpose.msra.mxu0 0
        %2451 = vmatprep.subr.bf16.mxu0 0
        %2452 = vmatpush1.bf16.xpose.msra.mxu0 0
        %2453 = vmatprep.subr.bf16.mxu0 0
        %2454 = vmatpush1.bf16.xpose.msra.mxu0 0
        %2455 = vmatprep.subr.bf16.mxu0 0
        %2456 = vmatpush1.bf16.xpose.msra.mxu0 0
        %2457 = vmatprep.subr.bf16.mxu0 0
        %2458 = vmatpush1.bf16.xpose.msra.mxu0 0
        %2459 = vmatprep.subr.bf16.mxu0 0
        %2460 = vmatpush1.bf16.xpose.msra.mxu0 0
        %2461 = vmatprep.subr.bf16.mxu0 0
        %2462 = vmatpush1.bf16.xpose.msra.mxu0 0
        %2463 = vmatprep.subr.bf16.mxu0 0
        %2464 = vmatpush1.bf16.xpose.msra.mxu0 0
        %2465 = vmatprep.mubr.bf16.mxu0 0
        %2466 = vmatmul.mubr.bf16.gmra.mrb[0].mxu0 %v2428
        %v2467 = vpop.f32.mrb[0].mxu0
        %v2468 = vadd.f32 0.0, %v2467
        %v2469 = vpop.f32.mrb[0].mxu0
        %v2470 = vpop.f32.mrb[0].mxu0
        %v2471 = vpop.f32.mrb[0].mxu0
        %2472 = vdwg.mxu0
        %2473 = vrot.lane.b32.xlu0 %v675, 112
        %v2474 = vpop.permute.xlu0 %2473
        %2475 = vrot.lane.b32.xlu0 %v675, 80
        %v2476 = vpop.permute.xlu0 %2475
        %v2478 = vsel %vm512, %v2474, 0
        %v2481 = vsel %vm512, %v2476, 0
        %2483 = vmatprep.subr.bf16.mxu0 0
        %2484 = vmatpush1.bf16.xpose.msra.mxu0 %v2481
        %2485 = vmatprep.subr.bf16.mxu0 0
        %2486 = vmatpush1.bf16.xpose.msra.mxu0 0
        %2487 = vmatprep.subr.bf16.mxu0 0
        %2488 = vmatpush1.bf16.xpose.msra.mxu0 0
        %2489 = vmatprep.subr.bf16.mxu0 0
        %2490 = vmatpush1.bf16.xpose.msra.mxu0 0
        %2491 = vmatprep.subr.bf16.mxu0 0
        %2492 = vmatpush1.bf16.xpose.msra.mxu0 0
        %2493 = vmatprep.subr.bf16.mxu0 0
        %2494 = vmatpush1.bf16.xpose.msra.mxu0 0
        %2495 = vmatprep.subr.bf16.mxu0 0
        %2496 = vmatpush1.bf16.xpose.msra.mxu0 0
        %2497 = vmatprep.subr.bf16.mxu0 0
        %2498 = vmatpush1.bf16.xpose.msra.mxu0 0
        %2499 = vmatprep.subr.bf16.mxu0 0
        %2500 = vmatpush1.bf16.xpose.msra.mxu0 0
        %2501 = vmatprep.subr.bf16.mxu0 0
        %2502 = vmatpush1.bf16.xpose.msra.mxu0 0
        %2503 = vmatprep.subr.bf16.mxu0 0
        %2504 = vmatpush1.bf16.xpose.msra.mxu0 0
        %2505 = vmatprep.subr.bf16.mxu0 0
        %2506 = vmatpush1.bf16.xpose.msra.mxu0 0
        %2507 = vmatprep.subr.bf16.mxu0 0
        %2508 = vmatpush1.bf16.xpose.msra.mxu0 0
        %2509 = vmatprep.subr.bf16.mxu0 0
        %2510 = vmatpush1.bf16.xpose.msra.mxu0 0
        %2511 = vmatprep.subr.bf16.mxu0 0
        %2512 = vmatpush1.bf16.xpose.msra.mxu0 0
        %2513 = vmatprep.subr.bf16.mxu0 0
        %2514 = vmatpush1.bf16.xpose.msra.mxu0 0
        %2515 = vmatprep.mubr.bf16.mxu0 0
        %2516 = vmatmul.mubr.bf16.gmra.mrb[0].mxu0 %v2478
        %v2517 = vpop.f32.mrb[0].mxu0
        %v2518 = vadd.f32 0.0, %v2517
        %v2519 = vpop.f32.mrb[0].mxu0
        %v2520 = vpop.f32.mrb[0].mxu0
        %v2521 = vpop.f32.mrb[0].mxu0
        %2522 = vdwg.mxu0
        %2523 = vrot.lane.b32.xlu0 %v730, 112
        %v2524 = vpop.permute.xlu0 %2523
        %2525 = vrot.lane.b32.xlu0 %v730, 80
        %v2526 = vpop.permute.xlu0 %2525
        %v2528 = vsel %vm512, %v2524, 0
        %v2531 = vsel %vm512, %v2526, 0
        %2533 = vmatprep.subr.bf16.mxu0 0
        %2534 = vmatpush1.bf16.xpose.msra.mxu0 %v2531
        %2535 = vmatprep.subr.bf16.mxu0 0
        %2536 = vmatpush1.bf16.xpose.msra.mxu0 0
        %2537 = vmatprep.subr.bf16.mxu0 0
        %2538 = vmatpush1.bf16.xpose.msra.mxu0 0
        %2539 = vmatprep.subr.bf16.mxu0 0
        %2540 = vmatpush1.bf16.xpose.msra.mxu0 0
        %2541 = vmatprep.subr.bf16.mxu0 0
        %2542 = vmatpush1.bf16.xpose.msra.mxu0 0
        %2543 = vmatprep.subr.bf16.mxu0 0
        %2544 = vmatpush1.bf16.xpose.msra.mxu0 0
        %2545 = vmatprep.subr.bf16.mxu0 0
        %2546 = vmatpush1.bf16.xpose.msra.mxu0 0
        %2547 = vmatprep.subr.bf16.mxu0 0
        %2548 = vmatpush1.bf16.xpose.msra.mxu0 0
        %2549 = vmatprep.subr.bf16.mxu0 0
        %2550 = vmatpush1.bf16.xpose.msra.mxu0 0
        %2551 = vmatprep.subr.bf16.mxu0 0
        %2552 = vmatpush1.bf16.xpose.msra.mxu0 0
        %2553 = vmatprep.subr.bf16.mxu0 0
        %2554 = vmatpush1.bf16.xpose.msra.mxu0 0
        %2555 = vmatprep.subr.bf16.mxu0 0
        %2556 = vmatpush1.bf16.xpose.msra.mxu0 0
        %2557 = vmatprep.subr.bf16.mxu0 0
        %2558 = vmatpush1.bf16.xpose.msra.mxu0 0
        %2559 = vmatprep.subr.bf16.mxu0 0
        %2560 = vmatpush1.bf16.xpose.msra.mxu0 0
        %2561 = vmatprep.subr.bf16.mxu0 0
        %2562 = vmatpush1.bf16.xpose.msra.mxu0 0
        %2563 = vmatprep.subr.bf16.mxu0 0
        %2564 = vmatpush1.bf16.xpose.msra.mxu0 0
        %2565 = vmatprep.mubr.bf16.mxu0 0
        %2566 = vmatmul.mubr.bf16.gmra.mrb[0].mxu0 %v2528
        %v2567 = vpop.f32.mrb[0].mxu0
        %v2568 = vadd.f32 0.0, %v2567
        %v2569 = vpop.f32.mrb[0].mxu0
        %v2570 = vpop.f32.mrb[0].mxu0
        %v2571 = vpop.f32.mrb[0].mxu0
        %2572 = vdwg.mxu0
        %2573 = vrot.lane.b32.xlu0 %v785, 112
        %v2574 = vpop.permute.xlu0 %2573
        %2575 = vrot.lane.b32.xlu0 %v785, 80
        %v2576 = vpop.permute.xlu0 %2575
        %v2578 = vsel %vm512, %v2574, 0
        %v2581 = vsel %vm512, %v2576, 0
        %2583 = vmatprep.subr.bf16.mxu0 0
        %2584 = vmatpush1.bf16.xpose.msra.mxu0 %v2581
        %2585 = vmatprep.subr.bf16.mxu0 0
        %2586 = vmatpush1.bf16.xpose.msra.mxu0 0
        %2587 = vmatprep.subr.bf16.mxu0 0
        %2588 = vmatpush1.bf16.xpose.msra.mxu0 0
        %2589 = vmatprep.subr.bf16.mxu0 0
        %2590 = vmatpush1.bf16.xpose.msra.mxu0 0
        %2591 = vmatprep.subr.bf16.mxu0 0
        %2592 = vmatpush1.bf16.xpose.msra.mxu0 0
        %2593 = vmatprep.subr.bf16.mxu0 0
        %2594 = vmatpush1.bf16.xpose.msra.mxu0 0
        %2595 = vmatprep.subr.bf16.mxu0 0
        %2596 = vmatpush1.bf16.xpose.msra.mxu0 0
        %2597 = vmatprep.subr.bf16.mxu0 0
        %2598 = vmatpush1.bf16.xpose.msra.mxu0 0
        %2599 = vmatprep.subr.bf16.mxu0 0
        %2600 = vmatpush1.bf16.xpose.msra.mxu0 0
        %2601 = vmatprep.subr.bf16.mxu0 0
        %2602 = vmatpush1.bf16.xpose.msra.mxu0 0
        %2603 = vmatprep.subr.bf16.mxu0 0
        %2604 = vmatpush1.bf16.xpose.msra.mxu0 0
        %2605 = vmatprep.subr.bf16.mxu0 0
        %2606 = vmatpush1.bf16.xpose.msra.mxu0 0
        %2607 = vmatprep.subr.bf16.mxu0 0
        %2608 = vmatpush1.bf16.xpose.msra.mxu0 0
        %2609 = vmatprep.subr.bf16.mxu0 0
        %2610 = vmatpush1.bf16.xpose.msra.mxu0 0
        %2611 = vmatprep.subr.bf16.mxu0 0
        %2612 = vmatpush1.bf16.xpose.msra.mxu0 0
        %2613 = vmatprep.subr.bf16.mxu0 0
        %2614 = vmatpush1.bf16.xpose.msra.mxu0 0
        %2615 = vmatprep.mubr.bf16.mxu0 0
        %2616 = vmatmul.mubr.bf16.gmra.mrb[0].mxu0 %v2578
        %v2617 = vpop.f32.mrb[0].mxu0
        %v2618 = vadd.f32 0.0, %v2617
        %v2619 = vpop.f32.mrb[0].mxu0
        %v2620 = vpop.f32.mrb[0].mxu0
        %v2621 = vpop.f32.mrb[0].mxu0
        %2622 = vdwg.mxu0
        %2623 = vrot.lane.b32.xlu0 %v840, 112
        %v2624 = vpop.permute.xlu0 %2623
        %2625 = vrot.lane.b32.xlu0 %v840, 80
        %v2626 = vpop.permute.xlu0 %2625
        %v2628 = vsel %vm512, %v2624, 0
        %v2631 = vsel %vm512, %v2626, 0
        %2633 = vmatprep.subr.bf16.mxu0 0
        %2634 = vmatpush1.bf16.xpose.msra.mxu0 %v2631
        %2635 = vmatprep.subr.bf16.mxu0 0
        %2636 = vmatpush1.bf16.xpose.msra.mxu0 0
        %2637 = vmatprep.subr.bf16.mxu0 0
        %2638 = vmatpush1.bf16.xpose.msra.mxu0 0
        %2639 = vmatprep.subr.bf16.mxu0 0
        %2640 = vmatpush1.bf16.xpose.msra.mxu0 0
        %2641 = vmatprep.subr.bf16.mxu0 0
        %2642 = vmatpush1.bf16.xpose.msra.mxu0 0
        %2643 = vmatprep.subr.bf16.mxu0 0
        %2644 = vmatpush1.bf16.xpose.msra.mxu0 0
        %2645 = vmatprep.subr.bf16.mxu0 0
        %2646 = vmatpush1.bf16.xpose.msra.mxu0 0
        %2647 = vmatprep.subr.bf16.mxu0 0
        %2648 = vmatpush1.bf16.xpose.msra.mxu0 0
        %2649 = vmatprep.subr.bf16.mxu0 0
        %2650 = vmatpush1.bf16.xpose.msra.mxu0 0
        %2651 = vmatprep.subr.bf16.mxu0 0
        %2652 = vmatpush1.bf16.xpose.msra.mxu0 0
        %2653 = vmatprep.subr.bf16.mxu0 0
        %2654 = vmatpush1.bf16.xpose.msra.mxu0 0
        %2655 = vmatprep.subr.bf16.mxu0 0
        %2656 = vmatpush1.bf16.xpose.msra.mxu0 0
        %2657 = vmatprep.subr.bf16.mxu0 0
        %2658 = vmatpush1.bf16.xpose.msra.mxu0 0
        %2659 = vmatprep.subr.bf16.mxu0 0
        %2660 = vmatpush1.bf16.xpose.msra.mxu0 0
        %2661 = vmatprep.subr.bf16.mxu0 0
        %2662 = vmatpush1.bf16.xpose.msra.mxu0 0
        %2663 = vmatprep.subr.bf16.mxu0 0
        %2664 = vmatpush1.bf16.xpose.msra.mxu0 0
        %2665 = vmatprep.mubr.bf16.mxu0 0
        %2666 = vmatmul.mubr.bf16.gmra.mrb[0].mxu0 %v2628
        %v2667 = vpop.f32.mrb[0].mxu0
        %v2668 = vadd.f32 0.0, %v2667
        %v2669 = vpop.f32.mrb[0].mxu0
        %v2670 = vpop.f32.mrb[0].mxu0
        %v2671 = vpop.f32.mrb[0].mxu0
        %2672 = vdwg.mxu0
        %2673 = vrot.lane.b32.xlu0 %v895, 112
        %v2674 = vpop.permute.xlu0 %2673
        %2675 = vrot.lane.b32.xlu0 %v895, 80
        %v2676 = vpop.permute.xlu0 %2675
        %v2678 = vsel %vm512, %v2674, 0
        %v2681 = vsel %vm512, %v2676, 0
        %2683 = vmatprep.subr.bf16.mxu0 0
        %2684 = vmatpush1.bf16.xpose.msra.mxu0 %v2681
        %2685 = vmatprep.subr.bf16.mxu0 0
        %2686 = vmatpush1.bf16.xpose.msra.mxu0 0
        %2687 = vmatprep.subr.bf16.mxu0 0
        %2688 = vmatpush1.bf16.xpose.msra.mxu0 0
        %2689 = vmatprep.subr.bf16.mxu0 0
        %2690 = vmatpush1.bf16.xpose.msra.mxu0 0
        %2691 = vmatprep.subr.bf16.mxu0 0
        %2692 = vmatpush1.bf16.xpose.msra.mxu0 0
        %2693 = vmatprep.subr.bf16.mxu0 0
        %2694 = vmatpush1.bf16.xpose.msra.mxu0 0
        %2695 = vmatprep.subr.bf16.mxu0 0
        %2696 = vmatpush1.bf16.xpose.msra.mxu0 0
        %2697 = vmatprep.subr.bf16.mxu0 0
        %2698 = vmatpush1.bf16.xpose.msra.mxu0 0
        %2699 = vmatprep.subr.bf16.mxu0 0
        %2700 = vmatpush1.bf16.xpose.msra.mxu0 0
        %2701 = vmatprep.subr.bf16.mxu0 0
        %2702 = vmatpush1.bf16.xpose.msra.mxu0 0
        %2703 = vmatprep.subr.bf16.mxu0 0
        %2704 = vmatpush1.bf16.xpose.msra.mxu0 0
        %2705 = vmatprep.subr.bf16.mxu0 0
        %2706 = vmatpush1.bf16.xpose.msra.mxu0 0
        %2707 = vmatprep.subr.bf16.mxu0 0
        %2708 = vmatpush1.bf16.xpose.msra.mxu0 0
        %2709 = vmatprep.subr.bf16.mxu0 0
        %2710 = vmatpush1.bf16.xpose.msra.mxu0 0
        %2711 = vmatprep.subr.bf16.mxu0 0
        %2712 = vmatpush1.bf16.xpose.msra.mxu0 0
        %2713 = vmatprep.subr.bf16.mxu0 0
        %2714 = vmatpush1.bf16.xpose.msra.mxu0 0
        %2715 = vmatprep.mubr.bf16.mxu0 0
        %2716 = vmatmul.mubr.bf16.gmra.mrb[0].mxu0 %v2678
        %v2717 = vpop.f32.mrb[0].mxu0
        %v2718 = vadd.f32 0.0, %v2717
        %v2719 = vpop.f32.mrb[0].mxu0
        %v2720 = vpop.f32.mrb[0].mxu0
        %v2721 = vpop.f32.mrb[0].mxu0
        %2722 = vdwg.mxu0
        %v2723 = vsel %vm944, %v2368, -inf
        %2724 = vmax.xlane.f32.xlu0 %v2723
        %v2725 = vpop.xlane.xlu0 %2724
        %v2726 = vsel %vm944, %v2418, -inf
        %2727 = vmax.xlane.f32.xlu0 %v2726
        %v2728 = vpop.xlane.xlu0 %2727
        %v2729 = vsel %vm944, %v2468, -inf
        %2730 = vmax.xlane.f32.xlu0 %v2729
        %v2731 = vpop.xlane.xlu0 %2730
        %v2732 = vsel %vm944, %v2518, -inf
        %2733 = vmax.xlane.f32.xlu0 %v2732
        %v2734 = vpop.xlane.xlu0 %2733
        %v2735 = vsel %vm944, %v2568, -inf
        %2736 = vmax.xlane.f32.xlu0 %v2735
        %v2737 = vpop.xlane.xlu0 %2736
        %v2738 = vsel %vm944, %v2618, -inf
        %2739 = vmax.xlane.f32.xlu0 %v2738
        %v2740 = vpop.xlane.xlu0 %2739
        %v2741 = vsel %vm944, %v2668, -inf
        %2742 = vmax.xlane.f32.xlu0 %v2741
        %v2743 = vpop.xlane.xlu0 %2742
        %v2744 = vsel %vm944, %v2718, -inf
        %2745 = vmax.xlane.f32.xlu0 %v2744
        %v2746 = vpop.xlane.xlu0 %2745
        %v2747 = vsub.f32 %v2368, %v2725
        %v2748 = vsub.f32 %v2418, %v2728
        %v2749 = vsub.f32 %v2468, %v2731
        %v2750 = vsub.f32 %v2518, %v2734
        %v2751 = vsub.f32 %v2568, %v2737
        %v2752 = vsub.f32 %v2618, %v2740
        %v2753 = vsub.f32 %v2668, %v2743
        %v2754 = vsub.f32 %v2718, %v2746
        %v2755 = vmul.f32 %v2747, 1.442695
        %v2756 = vpow.pop %v2755
        %v2757 = vmul.f32 %v2748, 1.442695
        %v2758 = vpow.pop %v2757
        %v2759 = vmul.f32 %v2749, 1.442695
        %v2760 = vpow.pop %v2759
        %v2761 = vmul.f32 %v2750, 1.442695
        %v2762 = vpow.pop %v2761
        %v2763 = vmul.f32 %v2751, 1.442695
        %v2764 = vpow.pop %v2763
        %v2765 = vmul.f32 %v2752, 1.442695
        %v2766 = vpow.pop %v2765
        %v2767 = vmul.f32 %v2753, 1.442695
        %v2768 = vpow.pop %v2767
        %v2769 = vmul.f32 %v2754, 1.442695
        %v2770 = vpow.pop %v2769
        %v2771 = vsel %vm944, %v2756, 0.0
        %2772 = vadd.xlane.f32.xlu0 %v2771
        %v2773 = vpop.xlane.xlu0 %2772
        %v2774 = vsel %vm944, %v2758, 0.0
        %2775 = vadd.xlane.f32.xlu0 %v2774
        %v2776 = vpop.xlane.xlu0 %2775
        %v2777 = vsel %vm944, %v2760, 0.0
        %2778 = vadd.xlane.f32.xlu0 %v2777
        %v2779 = vpop.xlane.xlu0 %2778
        %v2780 = vsel %vm944, %v2762, 0.0
        %2781 = vadd.xlane.f32.xlu0 %v2780
        %v2782 = vpop.xlane.xlu0 %2781
        %v2783 = vsel %vm944, %v2764, 0.0
        %2784 = vadd.xlane.f32.xlu0 %v2783
        %v2785 = vpop.xlane.xlu0 %2784
        %v2786 = vsel %vm944, %v2766, 0.0
        %2787 = vadd.xlane.f32.xlu0 %v2786
        %v2788 = vpop.xlane.xlu0 %2787
        %v2789 = vsel %vm944, %v2768, 0.0
        %2790 = vadd.xlane.f32.xlu0 %v2789
        %v2791 = vpop.xlane.xlu0 %2790
        %v2792 = vsel %vm944, %v2770, 0.0
        %2793 = vadd.xlane.f32.xlu0 %v2792
        %v2794 = vpop.xlane.xlu0 %2793
        %v2795 = vrcp.pop %v2773
        %v2796 = vrcp.pop %v2776
        %v2797 = vrcp.pop %v2779
        %v2798 = vrcp.pop %v2782
        %v2799 = vrcp.pop %v2785
        %v2800 = vrcp.pop %v2788
        %v2801 = vrcp.pop %v2791
        %v2802 = vrcp.pop %v2794
        %v2803 = vmul.f32 %v2756, %v2795
        %v2804 = vmul.f32 %v2758, %v2796
        %v2805 = vmul.f32 %v2760, %v2797
        %v2806 = vmul.f32 %v2762, %v2798
        %v2807 = vmul.f32 %v2764, %v2799
        %v2808 = vmul.f32 %v2766, %v2800
        %v2809 = vmul.f32 %v2768, %v2801
        %v2810 = vmul.f32 %v2770, %v2802
        %v2811 = vpack.c.bf16 %v2803, %v2803
        %v2812 = vpack.c.bf16 %v2804, %v2804
        %v2813 = vpack.c.bf16 %v2805, %v2805
        %v2814 = vpack.c.bf16 %v2806, %v2806
        %v2815 = vpack.c.bf16 %v2807, %v2807
        %v2816 = vpack.c.bf16 %v2808, %v2808
        %v2817 = vpack.c.bf16 %v2809, %v2809
        %v2818 = vpack.c.bf16 %v2810, %v2810
        %2819 = vrot.lane.b32.xlu0 %v509, 48
        %v2820 = vpop.permute.xlu0 %2819
        %v2822 = vsel %vm1043, %v2811, 0
        %v2825 = vsel %vm1047, %v2820, 0
        %2827 = vmatprep.subr.bf16.mxu0 0
        %2828 = vmatpush1.bf16.msra.mxu0 %v2825
        %2829 = vmatprep.subr.bf16.mxu0 0
        %2830 = vmatpush1.bf16.msra.mxu0 0
        %2831 = vmatprep.subr.bf16.mxu0 0
        %2832 = vmatpush1.bf16.msra.mxu0 0
        %2833 = vmatprep.subr.bf16.mxu0 0
        %2834 = vmatpush1.bf16.msra.mxu0 0
        %2835 = vmatprep.subr.bf16.mxu0 0
        %2836 = vmatpush1.bf16.msra.mxu0 0
        %2837 = vmatprep.subr.bf16.mxu0 0
        %2838 = vmatpush1.bf16.msra.mxu0 0
        %2839 = vmatprep.subr.bf16.mxu0 0
        %2840 = vmatpush1.bf16.msra.mxu0 0
        %2841 = vmatprep.subr.bf16.mxu0 0
        %2842 = vmatpush1.bf16.msra.mxu0 0
        %2843 = vmatprep.subr.bf16.mxu0 0
        %2844 = vmatpush1.bf16.msra.mxu0 0
        %2845 = vmatprep.subr.bf16.mxu0 0
        %2846 = vmatpush1.bf16.msra.mxu0 0
        %2847 = vmatprep.subr.bf16.mxu0 0
        %2848 = vmatpush1.bf16.msra.mxu0 0
        %2849 = vmatprep.subr.bf16.mxu0 0
        %2850 = vmatpush1.bf16.msra.mxu0 0
        %2851 = vmatprep.subr.bf16.mxu0 0
        %2852 = vmatpush1.bf16.msra.mxu0 0
        %2853 = vmatprep.subr.bf16.mxu0 0
        %2854 = vmatpush1.bf16.msra.mxu0 0
        %2855 = vmatprep.subr.bf16.mxu0 0
        %2856 = vmatpush1.bf16.msra.mxu0 0
        %2857 = vmatprep.subr.bf16.mxu0 0
        %2858 = vmatpush1.bf16.msra.mxu0 0
        %2859 = vmatprep.mubr.bf16.mxu0 0
        %2860 = vmatmul.mubr.bf16.gmra.mrb[0].mxu0 %v2822
        %v2861 = vpop.f32.mrb[0].mxu0
        %v2862 = vadd.f32 0.0, %v2861
        %v2863 = vpop.f32.mrb[0].mxu0
        %v2864 = vpop.f32.mrb[0].mxu0
        %v2865 = vpop.f32.mrb[0].mxu0
        %2866 = vdwg.mxu0
        %2867 = vrot.lane.b32.xlu0 %v565, 48
        %v2868 = vpop.permute.xlu0 %2867
        %v2870 = vsel %vm1043, %v2812, 0
        %v2873 = vsel %vm1047, %v2868, 0
        %2875 = vmatprep.subr.bf16.mxu0 0
        %2876 = vmatpush1.bf16.msra.mxu0 %v2873
        %2877 = vmatprep.subr.bf16.mxu0 0
        %2878 = vmatpush1.bf16.msra.mxu0 0
        %2879 = vmatprep.subr.bf16.mxu0 0
        %2880 = vmatpush1.bf16.msra.mxu0 0
        %2881 = vmatprep.subr.bf16.mxu0 0
        %2882 = vmatpush1.bf16.msra.mxu0 0
        %2883 = vmatprep.subr.bf16.mxu0 0
        %2884 = vmatpush1.bf16.msra.mxu0 0
        %2885 = vmatprep.subr.bf16.mxu0 0
        %2886 = vmatpush1.bf16.msra.mxu0 0
        %2887 = vmatprep.subr.bf16.mxu0 0
        %2888 = vmatpush1.bf16.msra.mxu0 0
        %2889 = vmatprep.subr.bf16.mxu0 0
        %2890 = vmatpush1.bf16.msra.mxu0 0
        %2891 = vmatprep.subr.bf16.mxu0 0
        %2892 = vmatpush1.bf16.msra.mxu0 0
        %2893 = vmatprep.subr.bf16.mxu0 0
        %2894 = vmatpush1.bf16.msra.mxu0 0
        %2895 = vmatprep.subr.bf16.mxu0 0
        %2896 = vmatpush1.bf16.msra.mxu0 0
        %2897 = vmatprep.subr.bf16.mxu0 0
        %2898 = vmatpush1.bf16.msra.mxu0 0
        %2899 = vmatprep.subr.bf16.mxu0 0
        %2900 = vmatpush1.bf16.msra.mxu0 0
        %2901 = vmatprep.subr.bf16.mxu0 0
        %2902 = vmatpush1.bf16.msra.mxu0 0
        %2903 = vmatprep.subr.bf16.mxu0 0
        %2904 = vmatpush1.bf16.msra.mxu0 0
        %2905 = vmatprep.subr.bf16.mxu0 0
        %2906 = vmatpush1.bf16.msra.mxu0 0
        %2907 = vmatprep.mubr.bf16.mxu0 0
        %2908 = vmatmul.mubr.bf16.gmra.mrb[0].mxu0 %v2870
        %v2909 = vpop.f32.mrb[0].mxu0
        %v2910 = vadd.f32 0.0, %v2909
        %v2911 = vpop.f32.mrb[0].mxu0
        %v2912 = vpop.f32.mrb[0].mxu0
        %v2913 = vpop.f32.mrb[0].mxu0
        %2914 = vdwg.mxu0
        %2915 = vrot.lane.b32.xlu0 %v620, 48
        %v2916 = vpop.permute.xlu0 %2915
        %v2918 = vsel %vm1043, %v2813, 0
        %v2921 = vsel %vm1047, %v2916, 0
        %2923 = vmatprep.subr.bf16.mxu0 0
        %2924 = vmatpush1.bf16.msra.mxu0 %v2921
        %2925 = vmatprep.subr.bf16.mxu0 0
        %2926 = vmatpush1.bf16.msra.mxu0 0
        %2927 = vmatprep.subr.bf16.mxu0 0
        %2928 = vmatpush1.bf16.msra.mxu0 0
        %2929 = vmatprep.subr.bf16.mxu0 0
        %2930 = vmatpush1.bf16.msra.mxu0 0
        %2931 = vmatprep.subr.bf16.mxu0 0
        %2932 = vmatpush1.bf16.msra.mxu0 0
        %2933 = vmatprep.subr.bf16.mxu0 0
        %2934 = vmatpush1.bf16.msra.mxu0 0
        %2935 = vmatprep.subr.bf16.mxu0 0
        %2936 = vmatpush1.bf16.msra.mxu0 0
        %2937 = vmatprep.subr.bf16.mxu0 0
        %2938 = vmatpush1.bf16.msra.mxu0 0
        %2939 = vmatprep.subr.bf16.mxu0 0
        %2940 = vmatpush1.bf16.msra.mxu0 0
        %2941 = vmatprep.subr.bf16.mxu0 0
        %2942 = vmatpush1.bf16.msra.mxu0 0
        %2943 = vmatprep.subr.bf16.mxu0 0
        %2944 = vmatpush1.bf16.msra.mxu0 0
        %2945 = vmatprep.subr.bf16.mxu0 0
        %2946 = vmatpush1.bf16.msra.mxu0 0
        %2947 = vmatprep.subr.bf16.mxu0 0
        %2948 = vmatpush1.bf16.msra.mxu0 0
        %2949 = vmatprep.subr.bf16.mxu0 0
        %2950 = vmatpush1.bf16.msra.mxu0 0
        %2951 = vmatprep.subr.bf16.mxu0 0
        %2952 = vmatpush1.bf16.msra.mxu0 0
        %2953 = vmatprep.subr.bf16.mxu0 0
        %2954 = vmatpush1.bf16.msra.mxu0 0
        %2955 = vmatprep.mubr.bf16.mxu0 0
        %2956 = vmatmul.mubr.bf16.gmra.mrb[0].mxu0 %v2918
        %v2957 = vpop.f32.mrb[0].mxu0
        %v2958 = vadd.f32 0.0, %v2957
        %v2959 = vpop.f32.mrb[0].mxu0
        %v2960 = vpop.f32.mrb[0].mxu0
        %v2961 = vpop.f32.mrb[0].mxu0
        %2962 = vdwg.mxu0
        %2963 = vrot.lane.b32.xlu0 %v675, 48
        %v2964 = vpop.permute.xlu0 %2963
        %v2966 = vsel %vm1043, %v2814, 0
        %v2969 = vsel %vm1047, %v2964, 0
        %2971 = vmatprep.subr.bf16.mxu0 0
        %2972 = vmatpush1.bf16.msra.mxu0 %v2969
        %2973 = vmatprep.subr.bf16.mxu0 0
        %2974 = vmatpush1.bf16.msra.mxu0 0
        %2975 = vmatprep.subr.bf16.mxu0 0
        %2976 = vmatpush1.bf16.msra.mxu0 0
        %2977 = vmatprep.subr.bf16.mxu0 0
        %2978 = vmatpush1.bf16.msra.mxu0 0
        %2979 = vmatprep.subr.bf16.mxu0 0
        %2980 = vmatpush1.bf16.msra.mxu0 0
        %2981 = vmatprep.subr.bf16.mxu0 0
        %2982 = vmatpush1.bf16.msra.mxu0 0
        %2983 = vmatprep.subr.bf16.mxu0 0
        %2984 = vmatpush1.bf16.msra.mxu0 0
        %2985 = vmatprep.subr.bf16.mxu0 0
        %2986 = vmatpush1.bf16.msra.mxu0 0
        %2987 = vmatprep.subr.bf16.mxu0 0
        %2988 = vmatpush1.bf16.msra.mxu0 0
        %2989 = vmatprep.subr.bf16.mxu0 0
        %2990 = vmatpush1.bf16.msra.mxu0 0
        %2991 = vmatprep.subr.bf16.mxu0 0
        %2992 = vmatpush1.bf16.msra.mxu0 0
        %2993 = vmatprep.subr.bf16.mxu0 0
        %2994 = vmatpush1.bf16.msra.mxu0 0
        %2995 = vmatprep.subr.bf16.mxu0 0
        %2996 = vmatpush1.bf16.msra.mxu0 0
        %2997 = vmatprep.subr.bf16.mxu0 0
        %2998 = vmatpush1.bf16.msra.mxu0 0
        %2999 = vmatprep.subr.bf16.mxu0 0
        %3000 = vmatpush1.bf16.msra.mxu0 0
        %3001 = vmatprep.subr.bf16.mxu0 0
        %3002 = vmatpush1.bf16.msra.mxu0 0
        %3003 = vmatprep.mubr.bf16.mxu0 0
        %3004 = vmatmul.mubr.bf16.gmra.mrb[0].mxu0 %v2966
        %v3005 = vpop.f32.mrb[0].mxu0
        %v3006 = vadd.f32 0.0, %v3005
        %v3007 = vpop.f32.mrb[0].mxu0
        %v3008 = vpop.f32.mrb[0].mxu0
        %v3009 = vpop.f32.mrb[0].mxu0
        %3010 = vdwg.mxu0
        %3011 = vrot.lane.b32.xlu0 %v730, 48
        %v3012 = vpop.permute.xlu0 %3011
        %v3014 = vsel %vm1043, %v2815, 0
        %v3017 = vsel %vm1047, %v3012, 0
        %3019 = vmatprep.subr.bf16.mxu0 0
        %3020 = vmatpush1.bf16.msra.mxu0 %v3017
        %3021 = vmatprep.subr.bf16.mxu0 0
        %3022 = vmatpush1.bf16.msra.mxu0 0
        %3023 = vmatprep.subr.bf16.mxu0 0
        %3024 = vmatpush1.bf16.msra.mxu0 0
        %3025 = vmatprep.subr.bf16.mxu0 0
        %3026 = vmatpush1.bf16.msra.mxu0 0
        %3027 = vmatprep.subr.bf16.mxu0 0
        %3028 = vmatpush1.bf16.msra.mxu0 0
        %3029 = vmatprep.subr.bf16.mxu0 0
        %3030 = vmatpush1.bf16.msra.mxu0 0
        %3031 = vmatprep.subr.bf16.mxu0 0
        %3032 = vmatpush1.bf16.msra.mxu0 0
        %3033 = vmatprep.subr.bf16.mxu0 0
        %3034 = vmatpush1.bf16.msra.mxu0 0
        %3035 = vmatprep.subr.bf16.mxu0 0
        %3036 = vmatpush1.bf16.msra.mxu0 0
        %3037 = vmatprep.subr.bf16.mxu0 0
        %3038 = vmatpush1.bf16.msra.mxu0 0
        %3039 = vmatprep.subr.bf16.mxu0 0
        %3040 = vmatpush1.bf16.msra.mxu0 0
        %3041 = vmatprep.subr.bf16.mxu0 0
        %3042 = vmatpush1.bf16.msra.mxu0 0
        %3043 = vmatprep.subr.bf16.mxu0 0
        %3044 = vmatpush1.bf16.msra.mxu0 0
        %3045 = vmatprep.subr.bf16.mxu0 0
        %3046 = vmatpush1.bf16.msra.mxu0 0
        %3047 = vmatprep.subr.bf16.mxu0 0
        %3048 = vmatpush1.bf16.msra.mxu0 0
        %3049 = vmatprep.subr.bf16.mxu0 0
        %3050 = vmatpush1.bf16.msra.mxu0 0
        %3051 = vmatprep.mubr.bf16.mxu0 0
        %3052 = vmatmul.mubr.bf16.gmra.mrb[0].mxu0 %v3014
        %v3053 = vpop.f32.mrb[0].mxu0
        %v3054 = vadd.f32 0.0, %v3053
        %v3055 = vpop.f32.mrb[0].mxu0
        %v3056 = vpop.f32.mrb[0].mxu0
        %v3057 = vpop.f32.mrb[0].mxu0
        %3058 = vdwg.mxu0
        %3059 = vrot.lane.b32.xlu0 %v785, 48
        %v3060 = vpop.permute.xlu0 %3059
        %v3062 = vsel %vm1043, %v2816, 0
        %v3065 = vsel %vm1047, %v3060, 0
        %3067 = vmatprep.subr.bf16.mxu0 0
        %3068 = vmatpush1.bf16.msra.mxu0 %v3065
        %3069 = vmatprep.subr.bf16.mxu0 0
        %3070 = vmatpush1.bf16.msra.mxu0 0
        %3071 = vmatprep.subr.bf16.mxu0 0
        %3072 = vmatpush1.bf16.msra.mxu0 0
        %3073 = vmatprep.subr.bf16.mxu0 0
        %3074 = vmatpush1.bf16.msra.mxu0 0
        %3075 = vmatprep.subr.bf16.mxu0 0
        %3076 = vmatpush1.bf16.msra.mxu0 0
        %3077 = vmatprep.subr.bf16.mxu0 0
        %3078 = vmatpush1.bf16.msra.mxu0 0
        %3079 = vmatprep.subr.bf16.mxu0 0
        %3080 = vmatpush1.bf16.msra.mxu0 0
        %3081 = vmatprep.subr.bf16.mxu0 0
        %3082 = vmatpush1.bf16.msra.mxu0 0
        %3083 = vmatprep.subr.bf16.mxu0 0
        %3084 = vmatpush1.bf16.msra.mxu0 0
        %3085 = vmatprep.subr.bf16.mxu0 0
        %3086 = vmatpush1.bf16.msra.mxu0 0
        %3087 = vmatprep.subr.bf16.mxu0 0
        %3088 = vmatpush1.bf16.msra.mxu0 0
        %3089 = vmatprep.subr.bf16.mxu0 0
        %3090 = vmatpush1.bf16.msra.mxu0 0
        %3091 = vmatprep.subr.bf16.mxu0 0
        %3092 = vmatpush1.bf16.msra.mxu0 0
        %3093 = vmatprep.subr.bf16.mxu0 0
        %3094 = vmatpush1.bf16.msra.mxu0 0
        %3095 = vmatprep.subr.bf16.mxu0 0
        %3096 = vmatpush1.bf16.msra.mxu0 0
        %3097 = vmatprep.subr.bf16.mxu0 0
        %3098 = vmatpush1.bf16.msra.mxu0 0
        %3099 = vmatprep.mubr.bf16.mxu0 0
        %3100 = vmatmul.mubr.bf16.gmra.mrb[0].mxu0 %v3062
        %v3101 = vpop.f32.mrb[0].mxu0
        %v3102 = vadd.f32 0.0, %v3101
        %v3103 = vpop.f32.mrb[0].mxu0
        %v3104 = vpop.f32.mrb[0].mxu0
        %v3105 = vpop.f32.mrb[0].mxu0
        %3106 = vdwg.mxu0
        %3107 = vrot.lane.b32.xlu0 %v840, 48
        %v3108 = vpop.permute.xlu0 %3107
        %v3110 = vsel %vm1043, %v2817, 0
        %v3113 = vsel %vm1047, %v3108, 0
        %3115 = vmatprep.subr.bf16.mxu0 0
        %3116 = vmatpush1.bf16.msra.mxu0 %v3113
        %3117 = vmatprep.subr.bf16.mxu0 0
        %3118 = vmatpush1.bf16.msra.mxu0 0
        %3119 = vmatprep.subr.bf16.mxu0 0
        %3120 = vmatpush1.bf16.msra.mxu0 0
        %3121 = vmatprep.subr.bf16.mxu0 0
        %3122 = vmatpush1.bf16.msra.mxu0 0
        %3123 = vmatprep.subr.bf16.mxu0 0
        %3124 = vmatpush1.bf16.msra.mxu0 0
        %3125 = vmatprep.subr.bf16.mxu0 0
        %3126 = vmatpush1.bf16.msra.mxu0 0
        %3127 = vmatprep.subr.bf16.mxu0 0
        %3128 = vmatpush1.bf16.msra.mxu0 0
        %3129 = vmatprep.subr.bf16.mxu0 0
        %3130 = vmatpush1.bf16.msra.mxu0 0
        %3131 = vmatprep.subr.bf16.mxu0 0
        %3132 = vmatpush1.bf16.msra.mxu0 0
        %3133 = vmatprep.subr.bf16.mxu0 0
        %3134 = vmatpush1.bf16.msra.mxu0 0
        %3135 = vmatprep.subr.bf16.mxu0 0
        %3136 = vmatpush1.bf16.msra.mxu0 0
        %3137 = vmatprep.subr.bf16.mxu0 0
        %3138 = vmatpush1.bf16.msra.mxu0 0
        %3139 = vmatprep.subr.bf16.mxu0 0
        %3140 = vmatpush1.bf16.msra.mxu0 0
        %3141 = vmatprep.subr.bf16.mxu0 0
        %3142 = vmatpush1.bf16.msra.mxu0 0
        %3143 = vmatprep.subr.bf16.mxu0 0
        %3144 = vmatpush1.bf16.msra.mxu0 0
        %3145 = vmatprep.subr.bf16.mxu0 0
        %3146 = vmatpush1.bf16.msra.mxu0 0
        %3147 = vmatprep.mubr.bf16.mxu0 0
        %3148 = vmatmul.mubr.bf16.gmra.mrb[0].mxu0 %v3110
        %v3149 = vpop.f32.mrb[0].mxu0
        %v3150 = vadd.f32 0.0, %v3149
        %v3151 = vpop.f32.mrb[0].mxu0
        %v3152 = vpop.f32.mrb[0].mxu0
        %v3153 = vpop.f32.mrb[0].mxu0
        %3154 = vdwg.mxu0
        %3155 = vrot.lane.b32.xlu0 %v895, 48
        %v3156 = vpop.permute.xlu0 %3155
        %v3158 = vsel %vm1043, %v2818, 0
        %v3161 = vsel %vm1047, %v3156, 0
        %3163 = vmatprep.subr.bf16.mxu0 0
        %3164 = vmatpush1.bf16.msra.mxu0 %v3161
        %3165 = vmatprep.subr.bf16.mxu0 0
        %3166 = vmatpush1.bf16.msra.mxu0 0
        %3167 = vmatprep.subr.bf16.mxu0 0
        %3168 = vmatpush1.bf16.msra.mxu0 0
        %3169 = vmatprep.subr.bf16.mxu0 0
        %3170 = vmatpush1.bf16.msra.mxu0 0
        %3171 = vmatprep.subr.bf16.mxu0 0
        %3172 = vmatpush1.bf16.msra.mxu0 0
        %3173 = vmatprep.subr.bf16.mxu0 0
        %3174 = vmatpush1.bf16.msra.mxu0 0
        %3175 = vmatprep.subr.bf16.mxu0 0
        %3176 = vmatpush1.bf16.msra.mxu0 0
        %3177 = vmatprep.subr.bf16.mxu0 0
        %3178 = vmatpush1.bf16.msra.mxu0 0
        %3179 = vmatprep.subr.bf16.mxu0 0
        %3180 = vmatpush1.bf16.msra.mxu0 0
        %3181 = vmatprep.subr.bf16.mxu0 0
        %3182 = vmatpush1.bf16.msra.mxu0 0
        %3183 = vmatprep.subr.bf16.mxu0 0
        %3184 = vmatpush1.bf16.msra.mxu0 0
        %3185 = vmatprep.subr.bf16.mxu0 0
        %3186 = vmatpush1.bf16.msra.mxu0 0
        %3187 = vmatprep.subr.bf16.mxu0 0
        %3188 = vmatpush1.bf16.msra.mxu0 0
        %3189 = vmatprep.subr.bf16.mxu0 0
        %3190 = vmatpush1.bf16.msra.mxu0 0
        %3191 = vmatprep.subr.bf16.mxu0 0
        %3192 = vmatpush1.bf16.msra.mxu0 0
        %3193 = vmatprep.subr.bf16.mxu0 0
        %3194 = vmatpush1.bf16.msra.mxu0 0
        %3195 = vmatprep.mubr.bf16.mxu0 0
        %3196 = vmatmul.mubr.bf16.gmra.mrb[0].mxu0 %v3158
        %v3197 = vpop.f32.mrb[0].mxu0
        %v3198 = vadd.f32 0.0, %v3197
        %v3199 = vpop.f32.mrb[0].mxu0
        %v3200 = vpop.f32.mrb[0].mxu0
        %v3201 = vpop.f32.mrb[0].mxu0
        %3202 = vdwg.mxu0
        %v3203 = vpack.c.bf16 %v2862, %v2862
        %v3204 = vpack.c.bf16 %v2910, %v2910
        %v3205 = vpack.c.bf16 %v2958, %v2958
        %v3206 = vpack.c.bf16 %v3006, %v3006
        %v3207 = vpack.c.bf16 %v3054, %v3054
        %v3208 = vpack.c.bf16 %v3102, %v3102
        %v3209 = vpack.c.bf16 %v3150, %v3150
        %v3210 = vpack.c.bf16 %v3198, %v3198
        %3211 = vrot.lane.b32.xlu0 %v509, 104
        %v3212 = vpop.permute.xlu0 %3211
        %3213 = vrot.lane.b32.xlu0 %v509, 72
        %v3214 = vpop.permute.xlu0 %3213
        %v3216 = vsel %vm512, %v3212, 0
        %v3219 = vsel %vm512, %v3214, 0
        %3221 = vmatprep.subr.bf16.mxu0 0
        %3222 = vmatpush1.bf16.xpose.msra.mxu0 %v3219
        %3223 = vmatprep.subr.bf16.mxu0 0
        %3224 = vmatpush1.bf16.xpose.msra.mxu0 0
        %3225 = vmatprep.subr.bf16.mxu0 0
        %3226 = vmatpush1.bf16.xpose.msra.mxu0 0
        %3227 = vmatprep.subr.bf16.mxu0 0
        %3228 = vmatpush1.bf16.xpose.msra.mxu0 0
        %3229 = vmatprep.subr.bf16.mxu0 0
        %3230 = vmatpush1.bf16.xpose.msra.mxu0 0
        %3231 = vmatprep.subr.bf16.mxu0 0
        %3232 = vmatpush1.bf16.xpose.msra.mxu0 0
        %3233 = vmatprep.subr.bf16.mxu0 0
        %3234 = vmatpush1.bf16.xpose.msra.mxu0 0
        %3235 = vmatprep.subr.bf16.mxu0 0
        %3236 = vmatpush1.bf16.xpose.msra.mxu0 0
        %3237 = vmatprep.subr.bf16.mxu0 0
        %3238 = vmatpush1.bf16.xpose.msra.mxu0 0
        %3239 = vmatprep.subr.bf16.mxu0 0
        %3240 = vmatpush1.bf16.xpose.msra.mxu0 0
        %3241 = vmatprep.subr.bf16.mxu0 0
        %3242 = vmatpush1.bf16.xpose.msra.mxu0 0
        %3243 = vmatprep.subr.bf16.mxu0 0
        %3244 = vmatpush1.bf16.xpose.msra.mxu0 0
        %3245 = vmatprep.subr.bf16.mxu0 0
        %3246 = vmatpush1.bf16.xpose.msra.mxu0 0
        %3247 = vmatprep.subr.bf16.mxu0 0
        %3248 = vmatpush1.bf16.xpose.msra.mxu0 0
        %3249 = vmatprep.subr.bf16.mxu0 0
        %3250 = vmatpush1.bf16.xpose.msra.mxu0 0
        %3251 = vmatprep.subr.bf16.mxu0 0
        %3252 = vmatpush1.bf16.xpose.msra.mxu0 0
        %3253 = vmatprep.mubr.bf16.mxu0 0
        %3254 = vmatmul.mubr.bf16.gmra.mrb[0].mxu0 %v3216
        %v3255 = vpop.f32.mrb[0].mxu0
        %v3256 = vadd.f32 0.0, %v3255
        %v3257 = vpop.f32.mrb[0].mxu0
        %v3258 = vpop.f32.mrb[0].mxu0
        %v3259 = vpop.f32.mrb[0].mxu0
        %3260 = vdwg.mxu0
        %3261 = vrot.lane.b32.xlu0 %v565, 104
        %v3262 = vpop.permute.xlu0 %3261
        %3263 = vrot.lane.b32.xlu0 %v565, 72
        %v3264 = vpop.permute.xlu0 %3263
        %v3266 = vsel %vm512, %v3262, 0
        %v3269 = vsel %vm512, %v3264, 0
        %3271 = vmatprep.subr.bf16.mxu0 0
        %3272 = vmatpush1.bf16.xpose.msra.mxu0 %v3269
        %3273 = vmatprep.subr.bf16.mxu0 0
        %3274 = vmatpush1.bf16.xpose.msra.mxu0 0
        %3275 = vmatprep.subr.bf16.mxu0 0
        %3276 = vmatpush1.bf16.xpose.msra.mxu0 0
        %3277 = vmatprep.subr.bf16.mxu0 0
        %3278 = vmatpush1.bf16.xpose.msra.mxu0 0
        %3279 = vmatprep.subr.bf16.mxu0 0
        %3280 = vmatpush1.bf16.xpose.msra.mxu0 0
        %3281 = vmatprep.subr.bf16.mxu0 0
        %3282 = vmatpush1.bf16.xpose.msra.mxu0 0
        %3283 = vmatprep.subr.bf16.mxu0 0
        %3284 = vmatpush1.bf16.xpose.msra.mxu0 0
        %3285 = vmatprep.subr.bf16.mxu0 0
        %3286 = vmatpush1.bf16.xpose.msra.mxu0 0
        %3287 = vmatprep.subr.bf16.mxu0 0
        %3288 = vmatpush1.bf16.xpose.msra.mxu0 0
        %3289 = vmatprep.subr.bf16.mxu0 0
        %3290 = vmatpush1.bf16.xpose.msra.mxu0 0
        %3291 = vmatprep.subr.bf16.mxu0 0
        %3292 = vmatpush1.bf16.xpose.msra.mxu0 0
        %3293 = vmatprep.subr.bf16.mxu0 0
        %3294 = vmatpush1.bf16.xpose.msra.mxu0 0
        %3295 = vmatprep.subr.bf16.mxu0 0
        %3296 = vmatpush1.bf16.xpose.msra.mxu0 0
        %3297 = vmatprep.subr.bf16.mxu0 0
        %3298 = vmatpush1.bf16.xpose.msra.mxu0 0
        %3299 = vmatprep.subr.bf16.mxu0 0
        %3300 = vmatpush1.bf16.xpose.msra.mxu0 0
        %3301 = vmatprep.subr.bf16.mxu0 0
        %3302 = vmatpush1.bf16.xpose.msra.mxu0 0
        %3303 = vmatprep.mubr.bf16.mxu0 0
        %3304 = vmatmul.mubr.bf16.gmra.mrb[0].mxu0 %v3266
        %v3305 = vpop.f32.mrb[0].mxu0
        %v3306 = vadd.f32 0.0, %v3305
        %v3307 = vpop.f32.mrb[0].mxu0
        %v3308 = vpop.f32.mrb[0].mxu0
        %v3309 = vpop.f32.mrb[0].mxu0
        %3310 = vdwg.mxu0
        %3311 = vrot.lane.b32.xlu0 %v620, 104
        %v3312 = vpop.permute.xlu0 %3311
        %3313 = vrot.lane.b32.xlu0 %v620, 72
        %v3314 = vpop.permute.xlu0 %3313
        %v3316 = vsel %vm512, %v3312, 0
        %v3319 = vsel %vm512, %v3314, 0
        %3321 = vmatprep.subr.bf16.mxu0 0
        %3322 = vmatpush1.bf16.xpose.msra.mxu0 %v3319
        %3323 = vmatprep.subr.bf16.mxu0 0
        %3324 = vmatpush1.bf16.xpose.msra.mxu0 0
        %3325 = vmatprep.subr.bf16.mxu0 0
        %3326 = vmatpush1.bf16.xpose.msra.mxu0 0
        %3327 = vmatprep.subr.bf16.mxu0 0
        %3328 = vmatpush1.bf16.xpose.msra.mxu0 0
        %3329 = vmatprep.subr.bf16.mxu0 0
        %3330 = vmatpush1.bf16.xpose.msra.mxu0 0
        %3331 = vmatprep.subr.bf16.mxu0 0
        %3332 = vmatpush1.bf16.xpose.msra.mxu0 0
        %3333 = vmatprep.subr.bf16.mxu0 0
        %3334 = vmatpush1.bf16.xpose.msra.mxu0 0
        %3335 = vmatprep.subr.bf16.mxu0 0
        %3336 = vmatpush1.bf16.xpose.msra.mxu0 0
        %3337 = vmatprep.subr.bf16.mxu0 0
        %3338 = vmatpush1.bf16.xpose.msra.mxu0 0
        %3339 = vmatprep.subr.bf16.mxu0 0
        %3340 = vmatpush1.bf16.xpose.msra.mxu0 0
        %3341 = vmatprep.subr.bf16.mxu0 0
        %3342 = vmatpush1.bf16.xpose.msra.mxu0 0
        %3343 = vmatprep.subr.bf16.mxu0 0
        %3344 = vmatpush1.bf16.xpose.msra.mxu0 0
        %3345 = vmatprep.subr.bf16.mxu0 0
        %3346 = vmatpush1.bf16.xpose.msra.mxu0 0
        %3347 = vmatprep.subr.bf16.mxu0 0
        %3348 = vmatpush1.bf16.xpose.msra.mxu0 0
        %3349 = vmatprep.subr.bf16.mxu0 0
        %3350 = vmatpush1.bf16.xpose.msra.mxu0 0
        %3351 = vmatprep.subr.bf16.mxu0 0
        %3352 = vmatpush1.bf16.xpose.msra.mxu0 0
        %3353 = vmatprep.mubr.bf16.mxu0 0
        %3354 = vmatmul.mubr.bf16.gmra.mrb[0].mxu0 %v3316
        %v3355 = vpop.f32.mrb[0].mxu0
        %v3356 = vadd.f32 0.0, %v3355
        %v3357 = vpop.f32.mrb[0].mxu0
        %v3358 = vpop.f32.mrb[0].mxu0
        %v3359 = vpop.f32.mrb[0].mxu0
        %3360 = vdwg.mxu0
        %3361 = vrot.lane.b32.xlu0 %v675, 104
        %v3362 = vpop.permute.xlu0 %3361
        %3363 = vrot.lane.b32.xlu0 %v675, 72
        %v3364 = vpop.permute.xlu0 %3363
        %v3366 = vsel %vm512, %v3362, 0
        %v3369 = vsel %vm512, %v3364, 0
        %3371 = vmatprep.subr.bf16.mxu0 0
        %3372 = vmatpush1.bf16.xpose.msra.mxu0 %v3369
        %3373 = vmatprep.subr.bf16.mxu0 0
        %3374 = vmatpush1.bf16.xpose.msra.mxu0 0
        %3375 = vmatprep.subr.bf16.mxu0 0
        %3376 = vmatpush1.bf16.xpose.msra.mxu0 0
        %3377 = vmatprep.subr.bf16.mxu0 0
        %3378 = vmatpush1.bf16.xpose.msra.mxu0 0
        %3379 = vmatprep.subr.bf16.mxu0 0
        %3380 = vmatpush1.bf16.xpose.msra.mxu0 0
        %3381 = vmatprep.subr.bf16.mxu0 0
        %3382 = vmatpush1.bf16.xpose.msra.mxu0 0
        %3383 = vmatprep.subr.bf16.mxu0 0
        %3384 = vmatpush1.bf16.xpose.msra.mxu0 0
        %3385 = vmatprep.subr.bf16.mxu0 0
        %3386 = vmatpush1.bf16.xpose.msra.mxu0 0
        %3387 = vmatprep.subr.bf16.mxu0 0
        %3388 = vmatpush1.bf16.xpose.msra.mxu0 0
        %3389 = vmatprep.subr.bf16.mxu0 0
        %3390 = vmatpush1.bf16.xpose.msra.mxu0 0
        %3391 = vmatprep.subr.bf16.mxu0 0
        %3392 = vmatpush1.bf16.xpose.msra.mxu0 0
        %3393 = vmatprep.subr.bf16.mxu0 0
        %3394 = vmatpush1.bf16.xpose.msra.mxu0 0
        %3395 = vmatprep.subr.bf16.mxu0 0
        %3396 = vmatpush1.bf16.xpose.msra.mxu0 0
        %3397 = vmatprep.subr.bf16.mxu0 0
        %3398 = vmatpush1.bf16.xpose.msra.mxu0 0
        %3399 = vmatprep.subr.bf16.mxu0 0
        %3400 = vmatpush1.bf16.xpose.msra.mxu0 0
        %3401 = vmatprep.subr.bf16.mxu0 0
        %3402 = vmatpush1.bf16.xpose.msra.mxu0 0
        %3403 = vmatprep.mubr.bf16.mxu0 0
        %3404 = vmatmul.mubr.bf16.gmra.mrb[0].mxu0 %v3366
        %v3405 = vpop.f32.mrb[0].mxu0
        %v3406 = vadd.f32 0.0, %v3405
        %v3407 = vpop.f32.mrb[0].mxu0
        %v3408 = vpop.f32.mrb[0].mxu0
        %v3409 = vpop.f32.mrb[0].mxu0
        %3410 = vdwg.mxu0
        %3411 = vrot.lane.b32.xlu0 %v730, 104
        %v3412 = vpop.permute.xlu0 %3411
        %3413 = vrot.lane.b32.xlu0 %v730, 72
        %v3414 = vpop.permute.xlu0 %3413
        %v3416 = vsel %vm512, %v3412, 0
        %v3419 = vsel %vm512, %v3414, 0
        %3421 = vmatprep.subr.bf16.mxu0 0
        %3422 = vmatpush1.bf16.xpose.msra.mxu0 %v3419
        %3423 = vmatprep.subr.bf16.mxu0 0
        %3424 = vmatpush1.bf16.xpose.msra.mxu0 0
        %3425 = vmatprep.subr.bf16.mxu0 0
        %3426 = vmatpush1.bf16.xpose.msra.mxu0 0
        %3427 = vmatprep.subr.bf16.mxu0 0
        %3428 = vmatpush1.bf16.xpose.msra.mxu0 0
        %3429 = vmatprep.subr.bf16.mxu0 0
        %3430 = vmatpush1.bf16.xpose.msra.mxu0 0
        %3431 = vmatprep.subr.bf16.mxu0 0
        %3432 = vmatpush1.bf16.xpose.msra.mxu0 0
        %3433 = vmatprep.subr.bf16.mxu0 0
        %3434 = vmatpush1.bf16.xpose.msra.mxu0 0
        %3435 = vmatprep.subr.bf16.mxu0 0
        %3436 = vmatpush1.bf16.xpose.msra.mxu0 0
        %3437 = vmatprep.subr.bf16.mxu0 0
        %3438 = vmatpush1.bf16.xpose.msra.mxu0 0
        %3439 = vmatprep.subr.bf16.mxu0 0
        %3440 = vmatpush1.bf16.xpose.msra.mxu0 0
        %3441 = vmatprep.subr.bf16.mxu0 0
        %3442 = vmatpush1.bf16.xpose.msra.mxu0 0
        %3443 = vmatprep.subr.bf16.mxu0 0
        %3444 = vmatpush1.bf16.xpose.msra.mxu0 0
        %3445 = vmatprep.subr.bf16.mxu0 0
        %3446 = vmatpush1.bf16.xpose.msra.mxu0 0
        %3447 = vmatprep.subr.bf16.mxu0 0
        %3448 = vmatpush1.bf16.xpose.msra.mxu0 0
        %3449 = vmatprep.subr.bf16.mxu0 0
        %3450 = vmatpush1.bf16.xpose.msra.mxu0 0
        %3451 = vmatprep.subr.bf16.mxu0 0
        %3452 = vmatpush1.bf16.xpose.msra.mxu0 0
        %3453 = vmatprep.mubr.bf16.mxu0 0
        %3454 = vmatmul.mubr.bf16.gmra.mrb[0].mxu0 %v3416
        %v3455 = vpop.f32.mrb[0].mxu0
        %v3456 = vadd.f32 0.0, %v3455
        %v3457 = vpop.f32.mrb[0].mxu0
        %v3458 = vpop.f32.mrb[0].mxu0
        %v3459 = vpop.f32.mrb[0].mxu0
        %3460 = vdwg.mxu0
        %3461 = vrot.lane.b32.xlu0 %v785, 104
        %v3462 = vpop.permute.xlu0 %3461
        %3463 = vrot.lane.b32.xlu0 %v785, 72
        %v3464 = vpop.permute.xlu0 %3463
        %v3466 = vsel %vm512, %v3462, 0
        %v3469 = vsel %vm512, %v3464, 0
        %3471 = vmatprep.subr.bf16.mxu0 0
        %3472 = vmatpush1.bf16.xpose.msra.mxu0 %v3469
        %3473 = vmatprep.subr.bf16.mxu0 0
        %3474 = vmatpush1.bf16.xpose.msra.mxu0 0
        %3475 = vmatprep.subr.bf16.mxu0 0
        %3476 = vmatpush1.bf16.xpose.msra.mxu0 0
        %3477 = vmatprep.subr.bf16.mxu0 0
        %3478 = vmatpush1.bf16.xpose.msra.mxu0 0
        %3479 = vmatprep.subr.bf16.mxu0 0
        %3480 = vmatpush1.bf16.xpose.msra.mxu0 0
        %3481 = vmatprep.subr.bf16.mxu0 0
        %3482 = vmatpush1.bf16.xpose.msra.mxu0 0
        %3483 = vmatprep.subr.bf16.mxu0 0
        %3484 = vmatpush1.bf16.xpose.msra.mxu0 0
        %3485 = vmatprep.subr.bf16.mxu0 0
        %3486 = vmatpush1.bf16.xpose.msra.mxu0 0
        %3487 = vmatprep.subr.bf16.mxu0 0
        %3488 = vmatpush1.bf16.xpose.msra.mxu0 0
        %3489 = vmatprep.subr.bf16.mxu0 0
        %3490 = vmatpush1.bf16.xpose.msra.mxu0 0
        %3491 = vmatprep.subr.bf16.mxu0 0
        %3492 = vmatpush1.bf16.xpose.msra.mxu0 0
        %3493 = vmatprep.subr.bf16.mxu0 0
        %3494 = vmatpush1.bf16.xpose.msra.mxu0 0
        %3495 = vmatprep.subr.bf16.mxu0 0
        %3496 = vmatpush1.bf16.xpose.msra.mxu0 0
        %3497 = vmatprep.subr.bf16.mxu0 0
        %3498 = vmatpush1.bf16.xpose.msra.mxu0 0
        %3499 = vmatprep.subr.bf16.mxu0 0
        %3500 = vmatpush1.bf16.xpose.msra.mxu0 0
        %3501 = vmatprep.subr.bf16.mxu0 0
        %3502 = vmatpush1.bf16.xpose.msra.mxu0 0
        %3503 = vmatprep.mubr.bf16.mxu0 0
        %3504 = vmatmul.mubr.bf16.gmra.mrb[0].mxu0 %v3466
        %v3505 = vpop.f32.mrb[0].mxu0
        %v3506 = vadd.f32 0.0, %v3505
        %v3507 = vpop.f32.mrb[0].mxu0
        %v3508 = vpop.f32.mrb[0].mxu0
        %v3509 = vpop.f32.mrb[0].mxu0
        %3510 = vdwg.mxu0
        %3511 = vrot.lane.b32.xlu0 %v840, 104
        %v3512 = vpop.permute.xlu0 %3511
        %3513 = vrot.lane.b32.xlu0 %v840, 72
        %v3514 = vpop.permute.xlu0 %3513
        %v3516 = vsel %vm512, %v3512, 0
        %v3519 = vsel %vm512, %v3514, 0
        %3521 = vmatprep.subr.bf16.mxu0 0
        %3522 = vmatpush1.bf16.xpose.msra.mxu0 %v3519
        %3523 = vmatprep.subr.bf16.mxu0 0
        %3524 = vmatpush1.bf16.xpose.msra.mxu0 0
        %3525 = vmatprep.subr.bf16.mxu0 0
        %3526 = vmatpush1.bf16.xpose.msra.mxu0 0
        %3527 = vmatprep.subr.bf16.mxu0 0
        %3528 = vmatpush1.bf16.xpose.msra.mxu0 0
        %3529 = vmatprep.subr.bf16.mxu0 0
        %3530 = vmatpush1.bf16.xpose.msra.mxu0 0
        %3531 = vmatprep.subr.bf16.mxu0 0
        %3532 = vmatpush1.bf16.xpose.msra.mxu0 0
        %3533 = vmatprep.subr.bf16.mxu0 0
        %3534 = vmatpush1.bf16.xpose.msra.mxu0 0
        %3535 = vmatprep.subr.bf16.mxu0 0
        %3536 = vmatpush1.bf16.xpose.msra.mxu0 0
        %3537 = vmatprep.subr.bf16.mxu0 0
        %3538 = vmatpush1.bf16.xpose.msra.mxu0 0
        %3539 = vmatprep.subr.bf16.mxu0 0
        %3540 = vmatpush1.bf16.xpose.msra.mxu0 0
        %3541 = vmatprep.subr.bf16.mxu0 0
        %3542 = vmatpush1.bf16.xpose.msra.mxu0 0
        %3543 = vmatprep.subr.bf16.mxu0 0
        %3544 = vmatpush1.bf16.xpose.msra.mxu0 0
        %3545 = vmatprep.subr.bf16.mxu0 0
        %3546 = vmatpush1.bf16.xpose.msra.mxu0 0
        %3547 = vmatprep.subr.bf16.mxu0 0
        %3548 = vmatpush1.bf16.xpose.msra.mxu0 0
        %3549 = vmatprep.subr.bf16.mxu0 0
        %3550 = vmatpush1.bf16.xpose.msra.mxu0 0
        %3551 = vmatprep.subr.bf16.mxu0 0
        %3552 = vmatpush1.bf16.xpose.msra.mxu0 0
        %3553 = vmatprep.mubr.bf16.mxu0 0
        %3554 = vmatmul.mubr.bf16.gmra.mrb[0].mxu0 %v3516
        %v3555 = vpop.f32.mrb[0].mxu0
        %v3556 = vadd.f32 0.0, %v3555
        %v3557 = vpop.f32.mrb[0].mxu0
        %v3558 = vpop.f32.mrb[0].mxu0
        %v3559 = vpop.f32.mrb[0].mxu0
        %3560 = vdwg.mxu0
        %3561 = vrot.lane.b32.xlu0 %v895, 104
        %v3562 = vpop.permute.xlu0 %3561
        %3563 = vrot.lane.b32.xlu0 %v895, 72
        %v3564 = vpop.permute.xlu0 %3563
        %v3566 = vsel %vm512, %v3562, 0
        %v3569 = vsel %vm512, %v3564, 0
        %3571 = vmatprep.subr.bf16.mxu0 0
        %3572 = vmatpush1.bf16.xpose.msra.mxu0 %v3569
        %3573 = vmatprep.subr.bf16.mxu0 0
        %3574 = vmatpush1.bf16.xpose.msra.mxu0 0
        %3575 = vmatprep.subr.bf16.mxu0 0
        %3576 = vmatpush1.bf16.xpose.msra.mxu0 0
        %3577 = vmatprep.subr.bf16.mxu0 0
        %3578 = vmatpush1.bf16.xpose.msra.mxu0 0
        %3579 = vmatprep.subr.bf16.mxu0 0
        %3580 = vmatpush1.bf16.xpose.msra.mxu0 0
        %3581 = vmatprep.subr.bf16.mxu0 0
        %3582 = vmatpush1.bf16.xpose.msra.mxu0 0
        %3583 = vmatprep.subr.bf16.mxu0 0
        %3584 = vmatpush1.bf16.xpose.msra.mxu0 0
        %3585 = vmatprep.subr.bf16.mxu0 0
        %3586 = vmatpush1.bf16.xpose.msra.mxu0 0
        %3587 = vmatprep.subr.bf16.mxu0 0
        %3588 = vmatpush1.bf16.xpose.msra.mxu0 0
        %3589 = vmatprep.subr.bf16.mxu0 0
        %3590 = vmatpush1.bf16.xpose.msra.mxu0 0
        %3591 = vmatprep.subr.bf16.mxu0 0
        %3592 = vmatpush1.bf16.xpose.msra.mxu0 0
        %3593 = vmatprep.subr.bf16.mxu0 0
        %3594 = vmatpush1.bf16.xpose.msra.mxu0 0
        %3595 = vmatprep.subr.bf16.mxu0 0
        %3596 = vmatpush1.bf16.xpose.msra.mxu0 0
        %3597 = vmatprep.subr.bf16.mxu0 0
        %3598 = vmatpush1.bf16.xpose.msra.mxu0 0
        %3599 = vmatprep.subr.bf16.mxu0 0
        %3600 = vmatpush1.bf16.xpose.msra.mxu0 0
        %3601 = vmatprep.subr.bf16.mxu0 0
        %3602 = vmatpush1.bf16.xpose.msra.mxu0 0
        %3603 = vmatprep.mubr.bf16.mxu0 0
        %3604 = vmatmul.mubr.bf16.gmra.mrb[0].mxu0 %v3566
        %v3605 = vpop.f32.mrb[0].mxu0
        %v3606 = vadd.f32 0.0, %v3605
        %v3607 = vpop.f32.mrb[0].mxu0
        %v3608 = vpop.f32.mrb[0].mxu0
        %v3609 = vpop.f32.mrb[0].mxu0
        %3610 = vdwg.mxu0
        %v3611 = vsel %vm944, %v3256, -inf
        %3612 = vmax.xlane.f32.xlu0 %v3611
        %v3613 = vpop.xlane.xlu0 %3612
        %v3614 = vsel %vm944, %v3306, -inf
        %3615 = vmax.xlane.f32.xlu0 %v3614
        %v3616 = vpop.xlane.xlu0 %3615
        %v3617 = vsel %vm944, %v3356, -inf
        %3618 = vmax.xlane.f32.xlu0 %v3617
        %v3619 = vpop.xlane.xlu0 %3618
        %v3620 = vsel %vm944, %v3406, -inf
        %3621 = vmax.xlane.f32.xlu0 %v3620
        %v3622 = vpop.xlane.xlu0 %3621
        %v3623 = vsel %vm944, %v3456, -inf
        %3624 = vmax.xlane.f32.xlu0 %v3623
        %v3625 = vpop.xlane.xlu0 %3624
        %v3626 = vsel %vm944, %v3506, -inf
        %3627 = vmax.xlane.f32.xlu0 %v3626
        %v3628 = vpop.xlane.xlu0 %3627
        %v3629 = vsel %vm944, %v3556, -inf
        %3630 = vmax.xlane.f32.xlu0 %v3629
        %v3631 = vpop.xlane.xlu0 %3630
        %v3632 = vsel %vm944, %v3606, -inf
        %3633 = vmax.xlane.f32.xlu0 %v3632
        %v3634 = vpop.xlane.xlu0 %3633
        %v3635 = vsub.f32 %v3256, %v3613
        %v3636 = vsub.f32 %v3306, %v3616
        %v3637 = vsub.f32 %v3356, %v3619
        %v3638 = vsub.f32 %v3406, %v3622
        %v3639 = vsub.f32 %v3456, %v3625
        %v3640 = vsub.f32 %v3506, %v3628
        %v3641 = vsub.f32 %v3556, %v3631
        %v3642 = vsub.f32 %v3606, %v3634
        %v3643 = vmul.f32 %v3635, 1.442695
        %v3644 = vpow.pop %v3643
        %v3645 = vmul.f32 %v3636, 1.442695
        %v3646 = vpow.pop %v3645
        %v3647 = vmul.f32 %v3637, 1.442695
        %v3648 = vpow.pop %v3647
        %v3649 = vmul.f32 %v3638, 1.442695
        %v3650 = vpow.pop %v3649
        %v3651 = vmul.f32 %v3639, 1.442695
        %v3652 = vpow.pop %v3651
        %v3653 = vmul.f32 %v3640, 1.442695
        %v3654 = vpow.pop %v3653
        %v3655 = vmul.f32 %v3641, 1.442695
        %v3656 = vpow.pop %v3655
        %v3657 = vmul.f32 %v3642, 1.442695
        %v3658 = vpow.pop %v3657
        %v3659 = vsel %vm944, %v3644, 0.0
        %3660 = vadd.xlane.f32.xlu0 %v3659
        %v3661 = vpop.xlane.xlu0 %3660
        %v3662 = vsel %vm944, %v3646, 0.0
        %3663 = vadd.xlane.f32.xlu0 %v3662
        %v3664 = vpop.xlane.xlu0 %3663
        %v3665 = vsel %vm944, %v3648, 0.0
        %3666 = vadd.xlane.f32.xlu0 %v3665
        %v3667 = vpop.xlane.xlu0 %3666
        %v3668 = vsel %vm944, %v3650, 0.0
        %3669 = vadd.xlane.f32.xlu0 %v3668
        %v3670 = vpop.xlane.xlu0 %3669
        %v3671 = vsel %vm944, %v3652, 0.0
        %3672 = vadd.xlane.f32.xlu0 %v3671
        %v3673 = vpop.xlane.xlu0 %3672
        %v3674 = vsel %vm944, %v3654, 0.0
        %3675 = vadd.xlane.f32.xlu0 %v3674
        %v3676 = vpop.xlane.xlu0 %3675
        %v3677 = vsel %vm944, %v3656, 0.0
        %3678 = vadd.xlane.f32.xlu0 %v3677
        %v3679 = vpop.xlane.xlu0 %3678
        %v3680 = vsel %vm944, %v3658, 0.0
        %3681 = vadd.xlane.f32.xlu0 %v3680
        %v3682 = vpop.xlane.xlu0 %3681
        %v3683 = vrcp.pop %v3661
        %v3684 = vrcp.pop %v3664
        %v3685 = vrcp.pop %v3667
        %v3686 = vrcp.pop %v3670
        %v3687 = vrcp.pop %v3673
        %v3688 = vrcp.pop %v3676
        %v3689 = vrcp.pop %v3679
        %v3690 = vrcp.pop %v3682
        %v3691 = vmul.f32 %v3644, %v3683
        %v3692 = vmul.f32 %v3646, %v3684
        %v3693 = vmul.f32 %v3648, %v3685
        %v3694 = vmul.f32 %v3650, %v3686
        %v3695 = vmul.f32 %v3652, %v3687
        %v3696 = vmul.f32 %v3654, %v3688
        %v3697 = vmul.f32 %v3656, %v3689
        %v3698 = vmul.f32 %v3658, %v3690
        %v3699 = vpack.c.bf16 %v3691, %v3691
        %v3700 = vpack.c.bf16 %v3692, %v3692
        %v3701 = vpack.c.bf16 %v3693, %v3693
        %v3702 = vpack.c.bf16 %v3694, %v3694
        %v3703 = vpack.c.bf16 %v3695, %v3695
        %v3704 = vpack.c.bf16 %v3696, %v3696
        %v3705 = vpack.c.bf16 %v3697, %v3697
        %v3706 = vpack.c.bf16 %v3698, %v3698
        %3707 = vrot.lane.b32.xlu0 %v509, 40
        %v3708 = vpop.permute.xlu0 %3707
        %v3710 = vsel %vm1043, %v3699, 0
        %v3713 = vsel %vm1047, %v3708, 0
        %3715 = vmatprep.subr.bf16.mxu0 0
        %3716 = vmatpush1.bf16.msra.mxu0 %v3713
        %3717 = vmatprep.subr.bf16.mxu0 0
        %3718 = vmatpush1.bf16.msra.mxu0 0
        %3719 = vmatprep.subr.bf16.mxu0 0
        %3720 = vmatpush1.bf16.msra.mxu0 0
        %3721 = vmatprep.subr.bf16.mxu0 0
        %3722 = vmatpush1.bf16.msra.mxu0 0
        %3723 = vmatprep.subr.bf16.mxu0 0
        %3724 = vmatpush1.bf16.msra.mxu0 0
        %3725 = vmatprep.subr.bf16.mxu0 0
        %3726 = vmatpush1.bf16.msra.mxu0 0
        %3727 = vmatprep.subr.bf16.mxu0 0
        %3728 = vmatpush1.bf16.msra.mxu0 0
        %3729 = vmatprep.subr.bf16.mxu0 0
        %3730 = vmatpush1.bf16.msra.mxu0 0
        %3731 = vmatprep.subr.bf16.mxu0 0
        %3732 = vmatpush1.bf16.msra.mxu0 0
        %3733 = vmatprep.subr.bf16.mxu0 0
        %3734 = vmatpush1.bf16.msra.mxu0 0
        %3735 = vmatprep.subr.bf16.mxu0 0
        %3736 = vmatpush1.bf16.msra.mxu0 0
        %3737 = vmatprep.subr.bf16.mxu0 0
        %3738 = vmatpush1.bf16.msra.mxu0 0
        %3739 = vmatprep.subr.bf16.mxu0 0
        %3740 = vmatpush1.bf16.msra.mxu0 0
        %3741 = vmatprep.subr.bf16.mxu0 0
        %3742 = vmatpush1.bf16.msra.mxu0 0
        %3743 = vmatprep.subr.bf16.mxu0 0
        %3744 = vmatpush1.bf16.msra.mxu0 0
        %3745 = vmatprep.subr.bf16.mxu0 0
        %3746 = vmatpush1.bf16.msra.mxu0 0
        %3747 = vmatprep.mubr.bf16.mxu0 0
        %3748 = vmatmul.mubr.bf16.gmra.mrb[0].mxu0 %v3710
        %v3749 = vpop.f32.mrb[0].mxu0
        %v3750 = vadd.f32 0.0, %v3749
        %v3751 = vpop.f32.mrb[0].mxu0
        %v3752 = vpop.f32.mrb[0].mxu0
        %v3753 = vpop.f32.mrb[0].mxu0
        %3754 = vdwg.mxu0
        %3755 = vrot.lane.b32.xlu0 %v565, 40
        %v3756 = vpop.permute.xlu0 %3755
        %v3758 = vsel %vm1043, %v3700, 0
        %v3761 = vsel %vm1047, %v3756, 0
        %3763 = vmatprep.subr.bf16.mxu0 0
        %3764 = vmatpush1.bf16.msra.mxu0 %v3761
        %3765 = vmatprep.subr.bf16.mxu0 0
        %3766 = vmatpush1.bf16.msra.mxu0 0
        %3767 = vmatprep.subr.bf16.mxu0 0
        %3768 = vmatpush1.bf16.msra.mxu0 0
        %3769 = vmatprep.subr.bf16.mxu0 0
        %3770 = vmatpush1.bf16.msra.mxu0 0
        %3771 = vmatprep.subr.bf16.mxu0 0
        %3772 = vmatpush1.bf16.msra.mxu0 0
        %3773 = vmatprep.subr.bf16.mxu0 0
        %3774 = vmatpush1.bf16.msra.mxu0 0
        %3775 = vmatprep.subr.bf16.mxu0 0
        %3776 = vmatpush1.bf16.msra.mxu0 0
        %3777 = vmatprep.subr.bf16.mxu0 0
        %3778 = vmatpush1.bf16.msra.mxu0 0
        %3779 = vmatprep.subr.bf16.mxu0 0
        %3780 = vmatpush1.bf16.msra.mxu0 0
        %3781 = vmatprep.subr.bf16.mxu0 0
        %3782 = vmatpush1.bf16.msra.mxu0 0
        %3783 = vmatprep.subr.bf16.mxu0 0
        %3784 = vmatpush1.bf16.msra.mxu0 0
        %3785 = vmatprep.subr.bf16.mxu0 0
        %3786 = vmatpush1.bf16.msra.mxu0 0
        %3787 = vmatprep.subr.bf16.mxu0 0
        %3788 = vmatpush1.bf16.msra.mxu0 0
        %3789 = vmatprep.subr.bf16.mxu0 0
        %3790 = vmatpush1.bf16.msra.mxu0 0
        %3791 = vmatprep.subr.bf16.mxu0 0
        %3792 = vmatpush1.bf16.msra.mxu0 0
        %3793 = vmatprep.subr.bf16.mxu0 0
        %3794 = vmatpush1.bf16.msra.mxu0 0
        %3795 = vmatprep.mubr.bf16.mxu0 0
        %3796 = vmatmul.mubr.bf16.gmra.mrb[0].mxu0 %v3758
        %v3797 = vpop.f32.mrb[0].mxu0
        %v3798 = vadd.f32 0.0, %v3797
        %v3799 = vpop.f32.mrb[0].mxu0
        %v3800 = vpop.f32.mrb[0].mxu0
        %v3801 = vpop.f32.mrb[0].mxu0
        %3802 = vdwg.mxu0
        %3803 = vrot.lane.b32.xlu0 %v620, 40
        %v3804 = vpop.permute.xlu0 %3803
        %v3806 = vsel %vm1043, %v3701, 0
        %v3809 = vsel %vm1047, %v3804, 0
        %3811 = vmatprep.subr.bf16.mxu0 0
        %3812 = vmatpush1.bf16.msra.mxu0 %v3809
        %3813 = vmatprep.subr.bf16.mxu0 0
        %3814 = vmatpush1.bf16.msra.mxu0 0
        %3815 = vmatprep.subr.bf16.mxu0 0
        %3816 = vmatpush1.bf16.msra.mxu0 0
        %3817 = vmatprep.subr.bf16.mxu0 0
        %3818 = vmatpush1.bf16.msra.mxu0 0
        %3819 = vmatprep.subr.bf16.mxu0 0
        %3820 = vmatpush1.bf16.msra.mxu0 0
        %3821 = vmatprep.subr.bf16.mxu0 0
        %3822 = vmatpush1.bf16.msra.mxu0 0
        %3823 = vmatprep.subr.bf16.mxu0 0
        %3824 = vmatpush1.bf16.msra.mxu0 0
        %3825 = vmatprep.subr.bf16.mxu0 0
        %3826 = vmatpush1.bf16.msra.mxu0 0
        %3827 = vmatprep.subr.bf16.mxu0 0
        %3828 = vmatpush1.bf16.msra.mxu0 0
        %3829 = vmatprep.subr.bf16.mxu0 0
        %3830 = vmatpush1.bf16.msra.mxu0 0
        %3831 = vmatprep.subr.bf16.mxu0 0
        %3832 = vmatpush1.bf16.msra.mxu0 0
        %3833 = vmatprep.subr.bf16.mxu0 0
        %3834 = vmatpush1.bf16.msra.mxu0 0
        %3835 = vmatprep.subr.bf16.mxu0 0
        %3836 = vmatpush1.bf16.msra.mxu0 0
        %3837 = vmatprep.subr.bf16.mxu0 0
        %3838 = vmatpush1.bf16.msra.mxu0 0
        %3839 = vmatprep.subr.bf16.mxu0 0
        %3840 = vmatpush1.bf16.msra.mxu0 0
        %3841 = vmatprep.subr.bf16.mxu0 0
        %3842 = vmatpush1.bf16.msra.mxu0 0
        %3843 = vmatprep.mubr.bf16.mxu0 0
        %3844 = vmatmul.mubr.bf16.gmra.mrb[0].mxu0 %v3806
        %v3845 = vpop.f32.mrb[0].mxu0
        %v3846 = vadd.f32 0.0, %v3845
        %v3847 = vpop.f32.mrb[0].mxu0
        %v3848 = vpop.f32.mrb[0].mxu0
        %v3849 = vpop.f32.mrb[0].mxu0
        %3850 = vdwg.mxu0
        %3851 = vrot.lane.b32.xlu0 %v675, 40
        %v3852 = vpop.permute.xlu0 %3851
        %v3854 = vsel %vm1043, %v3702, 0
        %v3857 = vsel %vm1047, %v3852, 0
        %3859 = vmatprep.subr.bf16.mxu0 0
        %3860 = vmatpush1.bf16.msra.mxu0 %v3857
        %3861 = vmatprep.subr.bf16.mxu0 0
        %3862 = vmatpush1.bf16.msra.mxu0 0
        %3863 = vmatprep.subr.bf16.mxu0 0
        %3864 = vmatpush1.bf16.msra.mxu0 0
        %3865 = vmatprep.subr.bf16.mxu0 0
        %3866 = vmatpush1.bf16.msra.mxu0 0
        %3867 = vmatprep.subr.bf16.mxu0 0
        %3868 = vmatpush1.bf16.msra.mxu0 0
        %3869 = vmatprep.subr.bf16.mxu0 0
        %3870 = vmatpush1.bf16.msra.mxu0 0
        %3871 = vmatprep.subr.bf16.mxu0 0
        %3872 = vmatpush1.bf16.msra.mxu0 0
        %3873 = vmatprep.subr.bf16.mxu0 0
        %3874 = vmatpush1.bf16.msra.mxu0 0
        %3875 = vmatprep.subr.bf16.mxu0 0
        %3876 = vmatpush1.bf16.msra.mxu0 0
        %3877 = vmatprep.subr.bf16.mxu0 0
        %3878 = vmatpush1.bf16.msra.mxu0 0
        %3879 = vmatprep.subr.bf16.mxu0 0
        %3880 = vmatpush1.bf16.msra.mxu0 0
        %3881 = vmatprep.subr.bf16.mxu0 0
        %3882 = vmatpush1.bf16.msra.mxu0 0
        %3883 = vmatprep.subr.bf16.mxu0 0
        %3884 = vmatpush1.bf16.msra.mxu0 0
        %3885 = vmatprep.subr.bf16.mxu0 0
        %3886 = vmatpush1.bf16.msra.mxu0 0
        %3887 = vmatprep.subr.bf16.mxu0 0
        %3888 = vmatpush1.bf16.msra.mxu0 0
        %3889 = vmatprep.subr.bf16.mxu0 0
        %3890 = vmatpush1.bf16.msra.mxu0 0
        %3891 = vmatprep.mubr.bf16.mxu0 0
        %3892 = vmatmul.mubr.bf16.gmra.mrb[0].mxu0 %v3854
        %v3893 = vpop.f32.mrb[0].mxu0
        %v3894 = vadd.f32 0.0, %v3893
        %v3895 = vpop.f32.mrb[0].mxu0
        %v3896 = vpop.f32.mrb[0].mxu0
        %v3897 = vpop.f32.mrb[0].mxu0
        %3898 = vdwg.mxu0
        %3899 = vrot.lane.b32.xlu0 %v730, 40
        %v3900 = vpop.permute.xlu0 %3899
        %v3902 = vsel %vm1043, %v3703, 0
        %v3905 = vsel %vm1047, %v3900, 0
        %3907 = vmatprep.subr.bf16.mxu0 0
        %3908 = vmatpush1.bf16.msra.mxu0 %v3905
        %3909 = vmatprep.subr.bf16.mxu0 0
        %3910 = vmatpush1.bf16.msra.mxu0 0
        %3911 = vmatprep.subr.bf16.mxu0 0
        %3912 = vmatpush1.bf16.msra.mxu0 0
        %3913 = vmatprep.subr.bf16.mxu0 0
        %3914 = vmatpush1.bf16.msra.mxu0 0
        %3915 = vmatprep.subr.bf16.mxu0 0
        %3916 = vmatpush1.bf16.msra.mxu0 0
        %3917 = vmatprep.subr.bf16.mxu0 0
        %3918 = vmatpush1.bf16.msra.mxu0 0
        %3919 = vmatprep.subr.bf16.mxu0 0
        %3920 = vmatpush1.bf16.msra.mxu0 0
        %3921 = vmatprep.subr.bf16.mxu0 0
        %3922 = vmatpush1.bf16.msra.mxu0 0
        %3923 = vmatprep.subr.bf16.mxu0 0
        %3924 = vmatpush1.bf16.msra.mxu0 0
        %3925 = vmatprep.subr.bf16.mxu0 0
        %3926 = vmatpush1.bf16.msra.mxu0 0
        %3927 = vmatprep.subr.bf16.mxu0 0
        %3928 = vmatpush1.bf16.msra.mxu0 0
        %3929 = vmatprep.subr.bf16.mxu0 0
        %3930 = vmatpush1.bf16.msra.mxu0 0
        %3931 = vmatprep.subr.bf16.mxu0 0
        %3932 = vmatpush1.bf16.msra.mxu0 0
        %3933 = vmatprep.subr.bf16.mxu0 0
        %3934 = vmatpush1.bf16.msra.mxu0 0
        %3935 = vmatprep.subr.bf16.mxu0 0
        %3936 = vmatpush1.bf16.msra.mxu0 0
        %3937 = vmatprep.subr.bf16.mxu0 0
        %3938 = vmatpush1.bf16.msra.mxu0 0
        %3939 = vmatprep.mubr.bf16.mxu0 0
        %3940 = vmatmul.mubr.bf16.gmra.mrb[0].mxu0 %v3902
        %v3941 = vpop.f32.mrb[0].mxu0
        %v3942 = vadd.f32 0.0, %v3941
        %v3943 = vpop.f32.mrb[0].mxu0
        %v3944 = vpop.f32.mrb[0].mxu0
        %v3945 = vpop.f32.mrb[0].mxu0
        %3946 = vdwg.mxu0
        %3947 = vrot.lane.b32.xlu0 %v785, 40
        %v3948 = vpop.permute.xlu0 %3947
        %v3950 = vsel %vm1043, %v3704, 0
        %v3953 = vsel %vm1047, %v3948, 0
        %3955 = vmatprep.subr.bf16.mxu0 0
        %3956 = vmatpush1.bf16.msra.mxu0 %v3953
        %3957 = vmatprep.subr.bf16.mxu0 0
        %3958 = vmatpush1.bf16.msra.mxu0 0
        %3959 = vmatprep.subr.bf16.mxu0 0
        %3960 = vmatpush1.bf16.msra.mxu0 0
        %3961 = vmatprep.subr.bf16.mxu0 0
        %3962 = vmatpush1.bf16.msra.mxu0 0
        %3963 = vmatprep.subr.bf16.mxu0 0
        %3964 = vmatpush1.bf16.msra.mxu0 0
        %3965 = vmatprep.subr.bf16.mxu0 0
        %3966 = vmatpush1.bf16.msra.mxu0 0
        %3967 = vmatprep.subr.bf16.mxu0 0
        %3968 = vmatpush1.bf16.msra.mxu0 0
        %3969 = vmatprep.subr.bf16.mxu0 0
        %3970 = vmatpush1.bf16.msra.mxu0 0
        %3971 = vmatprep.subr.bf16.mxu0 0
        %3972 = vmatpush1.bf16.msra.mxu0 0
        %3973 = vmatprep.subr.bf16.mxu0 0
        %3974 = vmatpush1.bf16.msra.mxu0 0
        %3975 = vmatprep.subr.bf16.mxu0 0
        %3976 = vmatpush1.bf16.msra.mxu0 0
        %3977 = vmatprep.subr.bf16.mxu0 0
        %3978 = vmatpush1.bf16.msra.mxu0 0
        %3979 = vmatprep.subr.bf16.mxu0 0
        %3980 = vmatpush1.bf16.msra.mxu0 0
        %3981 = vmatprep.subr.bf16.mxu0 0
        %3982 = vmatpush1.bf16.msra.mxu0 0
        %3983 = vmatprep.subr.bf16.mxu0 0
        %3984 = vmatpush1.bf16.msra.mxu0 0
        %3985 = vmatprep.subr.bf16.mxu0 0
        %3986 = vmatpush1.bf16.msra.mxu0 0
        %3987 = vmatprep.mubr.bf16.mxu0 0
        %3988 = vmatmul.mubr.bf16.gmra.mrb[0].mxu0 %v3950
        %v3989 = vpop.f32.mrb[0].mxu0
        %v3990 = vadd.f32 0.0, %v3989
        %v3991 = vpop.f32.mrb[0].mxu0
        %v3992 = vpop.f32.mrb[0].mxu0
        %v3993 = vpop.f32.mrb[0].mxu0
        %3994 = vdwg.mxu0
        %3995 = vrot.lane.b32.xlu0 %v840, 40
        %v3996 = vpop.permute.xlu0 %3995
        %v3998 = vsel %vm1043, %v3705, 0
        %v4001 = vsel %vm1047, %v3996, 0
        %4003 = vmatprep.subr.bf16.mxu0 0
        %4004 = vmatpush1.bf16.msra.mxu0 %v4001
        %4005 = vmatprep.subr.bf16.mxu0 0
        %4006 = vmatpush1.bf16.msra.mxu0 0
        %4007 = vmatprep.subr.bf16.mxu0 0
        %4008 = vmatpush1.bf16.msra.mxu0 0
        %4009 = vmatprep.subr.bf16.mxu0 0
        %4010 = vmatpush1.bf16.msra.mxu0 0
        %4011 = vmatprep.subr.bf16.mxu0 0
        %4012 = vmatpush1.bf16.msra.mxu0 0
        %4013 = vmatprep.subr.bf16.mxu0 0
        %4014 = vmatpush1.bf16.msra.mxu0 0
        %4015 = vmatprep.subr.bf16.mxu0 0
        %4016 = vmatpush1.bf16.msra.mxu0 0
        %4017 = vmatprep.subr.bf16.mxu0 0
        %4018 = vmatpush1.bf16.msra.mxu0 0
        %4019 = vmatprep.subr.bf16.mxu0 0
        %4020 = vmatpush1.bf16.msra.mxu0 0
        %4021 = vmatprep.subr.bf16.mxu0 0
        %4022 = vmatpush1.bf16.msra.mxu0 0
        %4023 = vmatprep.subr.bf16.mxu0 0
        %4024 = vmatpush1.bf16.msra.mxu0 0
        %4025 = vmatprep.subr.bf16.mxu0 0
        %4026 = vmatpush1.bf16.msra.mxu0 0
        %4027 = vmatprep.subr.bf16.mxu0 0
        %4028 = vmatpush1.bf16.msra.mxu0 0
        %4029 = vmatprep.subr.bf16.mxu0 0
        %4030 = vmatpush1.bf16.msra.mxu0 0
        %4031 = vmatprep.subr.bf16.mxu0 0
        %4032 = vmatpush1.bf16.msra.mxu0 0
        %4033 = vmatprep.subr.bf16.mxu0 0
        %4034 = vmatpush1.bf16.msra.mxu0 0
        %4035 = vmatprep.mubr.bf16.mxu0 0
        %4036 = vmatmul.mubr.bf16.gmra.mrb[0].mxu0 %v3998
        %v4037 = vpop.f32.mrb[0].mxu0
        %v4038 = vadd.f32 0.0, %v4037
        %v4039 = vpop.f32.mrb[0].mxu0
        %v4040 = vpop.f32.mrb[0].mxu0
        %v4041 = vpop.f32.mrb[0].mxu0
        %4042 = vdwg.mxu0
        %4043 = vrot.lane.b32.xlu0 %v895, 40
        %v4044 = vpop.permute.xlu0 %4043
        %v4046 = vsel %vm1043, %v3706, 0
        %v4049 = vsel %vm1047, %v4044, 0
        %4051 = vmatprep.subr.bf16.mxu0 0
        %4052 = vmatpush1.bf16.msra.mxu0 %v4049
        %4053 = vmatprep.subr.bf16.mxu0 0
        %4054 = vmatpush1.bf16.msra.mxu0 0
        %4055 = vmatprep.subr.bf16.mxu0 0
        %4056 = vmatpush1.bf16.msra.mxu0 0
        %4057 = vmatprep.subr.bf16.mxu0 0
        %4058 = vmatpush1.bf16.msra.mxu0 0
        %4059 = vmatprep.subr.bf16.mxu0 0
        %4060 = vmatpush1.bf16.msra.mxu0 0
        %4061 = vmatprep.subr.bf16.mxu0 0
        %4062 = vmatpush1.bf16.msra.mxu0 0
        %4063 = vmatprep.subr.bf16.mxu0 0
        %4064 = vmatpush1.bf16.msra.mxu0 0
        %4065 = vmatprep.subr.bf16.mxu0 0
        %4066 = vmatpush1.bf16.msra.mxu0 0
        %4067 = vmatprep.subr.bf16.mxu0 0
        %4068 = vmatpush1.bf16.msra.mxu0 0
        %4069 = vmatprep.subr.bf16.mxu0 0
        %4070 = vmatpush1.bf16.msra.mxu0 0
        %4071 = vmatprep.subr.bf16.mxu0 0
        %4072 = vmatpush1.bf16.msra.mxu0 0
        %4073 = vmatprep.subr.bf16.mxu0 0
        %4074 = vmatpush1.bf16.msra.mxu0 0
        %4075 = vmatprep.subr.bf16.mxu0 0
        %4076 = vmatpush1.bf16.msra.mxu0 0
        %4077 = vmatprep.subr.bf16.mxu0 0
        %4078 = vmatpush1.bf16.msra.mxu0 0
        %4079 = vmatprep.subr.bf16.mxu0 0
        %4080 = vmatpush1.bf16.msra.mxu0 0
        %4081 = vmatprep.subr.bf16.mxu0 0
        %4082 = vmatpush1.bf16.msra.mxu0 0
        %4083 = vmatprep.mubr.bf16.mxu0 0
        %4084 = vmatmul.mubr.bf16.gmra.mrb[0].mxu0 %v4046
        %v4085 = vpop.f32.mrb[0].mxu0
        %v4086 = vadd.f32 0.0, %v4085
        %v4087 = vpop.f32.mrb[0].mxu0
        %v4088 = vpop.f32.mrb[0].mxu0
        %v4089 = vpop.f32.mrb[0].mxu0
        %4090 = vdwg.mxu0
        %v4091 = vpack.c.bf16 %v3750, %v3750
        %v4092 = vpack.c.bf16 %v3798, %v3798
        %v4093 = vpack.c.bf16 %v3846, %v3846
        %v4094 = vpack.c.bf16 %v3894, %v3894
        %v4095 = vpack.c.bf16 %v3942, %v3942
        %v4096 = vpack.c.bf16 %v3990, %v3990
        %v4097 = vpack.c.bf16 %v4038, %v4038
        %v4098 = vpack.c.bf16 %v4086, %v4086
        %4107 = vrot.lane.b32.xlu0 %v2315, 8
        %v4108 = vpop.permute.xlu0 %4107
        %4109 = vrot.lane.b32.xlu0 %v2316, 8
        %v4110 = vpop.permute.xlu0 %4109
        %4111 = vrot.lane.b32.xlu0 %v2317, 8
        %v4112 = vpop.permute.xlu0 %4111
        %4113 = vrot.lane.b32.xlu0 %v2318, 8
        %v4114 = vpop.permute.xlu0 %4113
        %4115 = vrot.lane.b32.xlu0 %v2319, 8
        %v4116 = vpop.permute.xlu0 %4115
        %4117 = vrot.lane.b32.xlu0 %v2320, 8
        %v4118 = vpop.permute.xlu0 %4117
        %4119 = vrot.lane.b32.xlu0 %v2321, 8
        %v4120 = vpop.permute.xlu0 %4119
        %4121 = vrot.lane.b32.xlu0 %v2322, 8
        %v4122 = vpop.permute.xlu0 %4121
        %4131 = vrot.lane.b32.xlu0 %v3203, 16
        %v4132 = vpop.permute.xlu0 %4131
        %4133 = vrot.lane.b32.xlu0 %v3204, 16
        %v4134 = vpop.permute.xlu0 %4133
        %4135 = vrot.lane.b32.xlu0 %v3205, 16
        %v4136 = vpop.permute.xlu0 %4135
        %4137 = vrot.lane.b32.xlu0 %v3206, 16
        %v4138 = vpop.permute.xlu0 %4137
        %4139 = vrot.lane.b32.xlu0 %v3207, 16
        %v4140 = vpop.permute.xlu0 %4139
        %4141 = vrot.lane.b32.xlu0 %v3208, 16
        %v4142 = vpop.permute.xlu0 %4141
        %4143 = vrot.lane.b32.xlu0 %v3209, 16
        %v4144 = vpop.permute.xlu0 %4143
        %4145 = vrot.lane.b32.xlu0 %v3210, 16
        %v4146 = vpop.permute.xlu0 %4145
        %4155 = vrot.lane.b32.xlu0 %v4091, 24
        %v4156 = vpop.permute.xlu0 %4155
        %4157 = vrot.lane.b32.xlu0 %v4092, 24
        %v4158 = vpop.permute.xlu0 %4157
        %4159 = vrot.lane.b32.xlu0 %v4093, 24
        %v4160 = vpop.permute.xlu0 %4159
        %4161 = vrot.lane.b32.xlu0 %v4094, 24
        %v4162 = vpop.permute.xlu0 %4161
        %4163 = vrot.lane.b32.xlu0 %v4095, 24
        %v4164 = vpop.permute.xlu0 %4163
        %4165 = vrot.lane.b32.xlu0 %v4096, 24
        %v4166 = vpop.permute.xlu0 %4165
        %4167 = vrot.lane.b32.xlu0 %v4097, 24
        %v4168 = vpop.permute.xlu0 %4167
        %4169 = vrot.lane.b32.xlu0 %v4098, 24
        %v4170 = vpop.permute.xlu0 %4169
        %v4173 = vsel %vm512, %v1427, %v4108
        %v4176 = vsel %vm512, %v1428, %v4110
        %v4179 = vsel %vm512, %v1429, %v4112
        %v4182 = vsel %vm512, %v1430, %v4114
        %v4185 = vsel %vm512, %v1431, %v4116
        %v4188 = vsel %vm512, %v1432, %v4118
        %v4191 = vsel %vm512, %v1433, %v4120
        %v4194 = vsel %vm512, %v1434, %v4122
        %vm4195 = vcmask 130048
        %v4197 = vsel %vm4195, %v4173, %v4132
        %v4199 = vsel %vm4195, %v4176, %v4134
        %v4201 = vsel %vm4195, %v4179, %v4136
        %v4203 = vsel %vm4195, %v4182, %v4138
        %v4205 = vsel %vm4195, %v4185, %v4140
        %v4207 = vsel %vm4195, %v4188, %v4142
        %v4209 = vsel %vm4195, %v4191, %v4144
        %v4211 = vsel %vm4195, %v4194, %v4146
        %vm4212 = vcmask 195584
        %v4214 = vsel %vm4212, %v4197, %v4156
        %v4216 = vsel %vm4212, %v4199, %v4158
        %v4218 = vsel %vm4212, %v4201, %v4160
        %v4220 = vsel %vm4212, %v4203, %v4162
        %v4222 = vsel %vm4212, %v4205, %v4164
        %v4224 = vsel %vm4212, %v4207, %v4166
        %v4226 = vsel %vm4212, %v4209, %v4168
        %v4228 = vsel %vm4212, %v4211, %v4170
        %v4229 = vld [vmem:[#allocation7] sm:$0xf]
        %v4230 = vld [vmem:[#allocation7 + $0x4] sm:$0xf]
        %v4231 = vld [vmem:[#allocation7 + $0x8] sm:$0xf]
        %v4232 = vld [vmem:[#allocation7 + $0xc] sm:$0xf]
        %v4233 = vld [vmem:[%s3] sm:$0x1]
        %v4235 = vlaneseq
        %v4236 = vshrl.u32 %v4235, 7
        %v4237 = vsub.s32 0, %v4236
        %v4238 = vrot.slane %v4233, %v4237
        %v4248 = vcombine.low %v4214, %v4216
        %v4249 = vcombine.low %v4218, %v4220
        %v4251 = vunpack.c.l.s4 1983009808
        %v4252 = vunpack.c.0.s8 %v4251
        %v4253 = vlaneseq
        %v4254 = vshrl.u32 %v4253, 7
        %v4255 = vsub.s32 %v4252, %v4254
        %v4256 = vrot.slane %v4248, %v4255
        %v4258 = vunpack.c.l.s4 1983009808
        %v4259 = vunpack.c.0.s8 %v4258
        %v4260 = vlaneseq
        %v4261 = vshrl.u32 %v4260, 7
        %v4262 = vsub.s32 %v4259, %v4261
        %v4263 = vrot.slane %v4249, %v4262
        %v4264 = vcombine.low %v4256, %v4263
        %v4265 = vcombine.low %v4222, %v4224
        %v4266 = vcombine.low %v4226, %v4228
        %v4268 = vunpack.c.l.s4 1983009808
        %v4269 = vunpack.c.0.s8 %v4268
        %v4270 = vlaneseq
        %v4271 = vshrl.u32 %v4270, 7
        %v4272 = vsub.s32 %v4269, %v4271
        %v4273 = vrot.slane %v4265, %v4272
        %v4275 = vunpack.c.l.s4 1983009808
        %v4276 = vunpack.c.0.s8 %v4275
        %v4277 = vlaneseq
        %v4278 = vshrl.u32 %v4277, 7
        %v4279 = vsub.s32 %v4276, %v4278
        %v4280 = vrot.slane %v4266, %v4279
        %v4281 = vcombine.low %v4273, %v4280
        %v4286 = vunpack.c.l.b16 %v4229
        %v4287 = vunpack.c.l.b16 %v4230
        %v4288 = vunpack.c.l.b16 %v4231
        %v4289 = vunpack.c.l.b16 %v4232
        %v4290 = vpack.c.b16 %v4287, %v4286
        %v4291 = vpack.c.b16 %v4289, %v4288
        %v4295 = vsel %vm409, %v4264, 0
        %v4298 = vsel %vm409, %v4281, 0
        %4300 = vmatprep.subr.bf16.mxu0 0
        %4301 = vmatpush1.bf16.msra.mxu0 %v4290
        %4302 = vmatprep.subr.bf16.mxu0 0
        %4303 = vmatpush1.bf16.msra.mxu0 %v4291
        %4304 = vmatprep.subr.bf16.mxu0 0
        %4305 = vmatpush1.bf16.msra.mxu0 0
        %4306 = vmatprep.subr.bf16.mxu0 0
        %4307 = vmatpush1.bf16.msra.mxu0 0
        %4308 = vmatprep.subr.bf16.mxu0 0
        %4309 = vmatpush1.bf16.msra.mxu0 0
        %4310 = vmatprep.subr.bf16.mxu0 0
        %4311 = vmatpush1.bf16.msra.mxu0 0
        %4312 = vmatprep.subr.bf16.mxu0 0
        %4313 = vmatpush1.bf16.msra.mxu0 0
        %4314 = vmatprep.subr.bf16.mxu0 0
        %4315 = vmatpush1.bf16.msra.mxu0 0
        %4316 = vmatprep.subr.bf16.mxu0 0
        %4317 = vmatpush1.bf16.msra.mxu0 0
        %4318 = vmatprep.subr.bf16.mxu0 0
        %4319 = vmatpush1.bf16.msra.mxu0 0
        %4320 = vmatprep.subr.bf16.mxu0 0
        %4321 = vmatpush1.bf16.msra.mxu0 0
        %4322 = vmatprep.subr.bf16.mxu0 0
        %4323 = vmatpush1.bf16.msra.mxu0 0
        %4324 = vmatprep.subr.bf16.mxu0 0
        %4325 = vmatpush1.bf16.msra.mxu0 0
        %4326 = vmatprep.subr.bf16.mxu0 0
        %4327 = vmatpush1.bf16.msra.mxu0 0
        %4328 = vmatprep.subr.bf16.mxu0 0
        %4329 = vmatpush1.bf16.msra.mxu0 0
        %4330 = vmatprep.subr.bf16.mxu0 0
        %4331 = vmatpush1.bf16.msra.mxu0 0
        %4332 = vmatprep.mubr.bf16.mxu0 0
        %4333 = vmatmul.mubr.bf16.gmra.mrb[0].mxu0 %v4295
        %v4334 = vpop.f32.mrb[0].mxu0
        %v4335 = vadd.f32 %v4238, %v4334
        %v4336 = vpop.f32.mrb[0].mxu0
        %v4337 = vpop.f32.mrb[0].mxu0
        %v4338 = vadd.f32 %v4238, %v4337
        %v4339 = vpop.f32.mrb[0].mxu0
        %4340 = vmatprep.mubr.bf16.mxu0 0
        %4341 = vmatmul.mubr.bf16.gmra.mrb[0].mxu0 %v4298
        %v4342 = vpop.f32.mrb[0].mxu0
        %v4343 = vadd.f32 %v4238, %v4342
        %v4344 = vpop.f32.mrb[0].mxu0
        %v4345 = vpop.f32.mrb[0].mxu0
        %v4346 = vadd.f32 %v4238, %v4345
        %v4347 = vpop.f32.mrb[0].mxu0
        %4348 = vdwg.mxu0
        %v4353 = vcombine.high %v4335, %v4335
        %v4354 = vcombine.high %v4338, %v4338
        %v4355 = vcombine.high %v4343, %v4343
        %v4356 = vcombine.high %v4346, %v4346
        %v4361 = vcombine.low %v4335, %v4338
        %v4363 = vunpack.c.l.s4 1983009808
        %v4364 = vunpack.c.0.s8 %v4363
        %v4365 = vlaneseq
        %v4366 = vshrl.u32 %v4365, 7
        %v4367 = vsub.s32 %v4364, %v4366
        %v4368 = vrot.slane %v4361, %v4367
        %v4369 = vcombine.low %v4353, %v4354
        %v4371 = vunpack.c.l.s4 1983009808
        %v4372 = vunpack.c.0.s8 %v4371
        %v4373 = vlaneseq
        %v4374 = vshrl.u32 %v4373, 7
        %v4375 = vsub.s32 %v4372, %v4374
        %v4376 = vrot.slane %v4369, %v4375
        %v4377 = vcombine.low %v4368, %v4376
        %v4378 = vcombine.high %v4368, %v4376
        %v4380 = vunpack.c.l.s4 1934713408
        %v4381 = vunpack.c.0.s8 %v4380
        %v4382 = vlaneseq
        %v4383 = vshrl.u32 %v4382, 7
        %v4384 = vsub.s32 %v4381, %v4383
        %v4385 = vrot.slane %v4377, %v4384
        %v4387 = vunpack.c.l.s4 1934713408
        %v4388 = vunpack.c.0.s8 %v4387
        %v4389 = vlaneseq
        %v4390 = vshrl.u32 %v4389, 7
        %v4391 = vsub.s32 %v4388, %v4390
        %v4392 = vrot.slane %v4378, %v4391
        %v4393 = vcombine.high %v4385, 0.0
        %v4394 = vcombine.high %v4392, 0.0
        %v4395 = vcombine.low %v4343, %v4346
        %v4397 = vunpack.c.l.s4 1983009808
        %v4398 = vunpack.c.0.s8 %v4397
        %v4399 = vlaneseq
        %v4400 = vshrl.u32 %v4399, 7
        %v4401 = vsub.s32 %v4398, %v4400
        %v4402 = vrot.slane %v4395, %v4401
        %v4403 = vcombine.low %v4355, %v4356
        %v4405 = vunpack.c.l.s4 1983009808
        %v4406 = vunpack.c.0.s8 %v4405
        %v4407 = vlaneseq
        %v4408 = vshrl.u32 %v4407, 7
        %v4409 = vsub.s32 %v4406, %v4408
        %v4410 = vrot.slane %v4403, %v4409
        %v4411 = vcombine.low %v4402, %v4410
        %v4412 = vcombine.high %v4402, %v4410
        %v4414 = vunpack.c.l.s4 1934713408
        %v4415 = vunpack.c.0.s8 %v4414
        %v4416 = vlaneseq
        %v4417 = vshrl.u32 %v4416, 7
        %v4418 = vsub.s32 %v4415, %v4417
        %v4419 = vrot.slane %v4411, %v4418
        %v4421 = vunpack.c.l.s4 1934713408
        %v4422 = vunpack.c.0.s8 %v4421
        %v4423 = vlaneseq
        %v4424 = vshrl.u32 %v4423, 7
        %v4425 = vsub.s32 %v4422, %v4424
        %v4426 = vrot.slane %v4412, %v4425
        %v4427 = vcombine.high %v4419, 0.0
        %v4428 = vcombine.high %v4426, 0.0
        %v4437 = vcombine.low %v4385, %v4419
        %v4438 = vcombine.low %v4393, %v4427
        %v4439 = vcombine.low %v4392, %v4426
        %v4440 = vcombine.low %v4394, %v4428
        %4445 = vst.msk [vmem:[%s261] sm:$0xff] %vm409, %v4437
        %4446 = vst.msk [vmem:[%s261 + $0x8] sm:$0xff] %vm409, %v4438
        %4447 = vst.msk [vmem:[%s261 + $0x10] sm:$0xff] %vm409, %v4439
        %4448 = vst.msk [vmem:[%s261 + $0x18] sm:$0xff] %vm409, %v4440
        %s4449 = sand.u32 %s135, 1
        %s4450 = scalar_lea.sflag [#allocation4], %s4449
        %s4451 = sand.u32 %s135, 1
        %s4452 = smul.addr %s4451, 32
        %s4453 = scalar_lea.vmem [#allocation8], %s4452
        // Predicated region
        $region49: #{alternating_attention.1} parent=35 // pred_check
          %p4454 = pneg %p145
        $region50: #{alternating_attention.1} parent=35 // pred_check_branch
          %4456 = sbr.rel (%p4454) target = $region52
        $region51: #{alternating_attention.1} parent=35 // pred_region
          %s4458 = ssub.s32 512, 512
          %4459 = vsyncadd %s4450, %s4458
          %s4460 = smul.addr %s26, 4
          %s4461 = sadd.s32 %s27, %s4460
          %s4462 = smul.addr %s4461, 128
          %s4463 = scalar_lea.hbm %s4, %s4462
          %s4464 = sshll.u32 %s4453, 4
          %s4465 = int_to_ptr.vmem [resolvable:$true] %s4464
          %4470 = dma.vmem_to_hbm [thread:$0]  %s4465, 512, %s4463, %s4450, 128, 128, 8
        $region52: #{alternating_attention.1} parent=35 // pred_fallthru
          _
      $region36: #{alternating_attention.1} parent=5 // pred_fallthru
        _
      %p4471 = scmp.le.s32.totalorder 2, %s17
      // Predicated region
      $region53: #{alternating_attention.1} parent=5 // pred_check
        %p4472 = pneg %p4471
      $region54: #{alternating_attention.1} parent=5 // pred_check_branch
        %4474 = sbr.rel (%p4472) target = $region56
      $region55: #{alternating_attention.1} parent=5 // pred_region
        %s4475 = ssub.s32 %s17, 2
        // Predicated region
        $region57: #{alternating_attention.1} parent=55 // pred_check
          %p4476 = pneg %p151
        $region58: #{alternating_attention.1} parent=55 // pred_check_branch
          %4478 = sbr.rel (%p4476) target = $region60
        $region59: #{alternating_attention.1} parent=55 // pred_region
          %s4479 = sand.u32 %s136, 1
          %s4480 = scalar_lea.sflag [#allocation4], %s4479
          %s4481 = sand.u32 %s136, 1
          %s4482 = smul.addr %s4481, 32
          %s4483 = scalar_lea.vmem [#allocation8], %s4482
          %4484 = dma.done %s4480, 512
        $region60: #{alternating_attention.1} parent=55 // pred_fallthru
          _
      $region56: #{alternating_attention.1} parent=5 // pred_fallthru
        _
    $region6: #{alternating_attention.1} parent=1 // loop_footer
      %s21 = sadd.s32 1, %s17
    $region7: #{alternating_attention.1} parent=1 // loop_footer_branch
      %16 = sbr.rel target = $region3
    $region8: #{alternating_attention.1} parent=1 // loop_exit
      _
    %4485 = vsyncpa [#allocation3], 1
    %s4486 = scalar_lea.sflag [#allocation3], 1
    %4487 = vsyncpa %s4486, 1
    %4488 = vsyncpa [#allocation6], 1
    %4489 = vsyncpa [#allocation4], 1
    %s4490 = scalar_lea.sflag [#allocation4], 1
    %4491 = vsyncpa %s4490, 1

</llo_original>
